<compile_context>
chip_gen: v7x
topology: tpu7x:2x2x1
jax: 0.10.0
libtpu: 0.0.40
codegen_flags: <defaults>
</compile_context>

<pallas_src>
import functools

import jax
import jax.numpy as jnp
from jax import lax
from jax.experimental import pallas as pl
from jax.experimental.pallas import tpu as pltpu


# ------------------------- chip-dependent sizing ----------------------------


def _vmem_limit_bytes():
    cap = 64 * 1024 * 1024
    try:
        info = pltpu.get_tpu_info()
        cap = int(getattr(info, "vmem_capacity_bytes", cap))
    except Exception:
        pass
    # Leave headroom for compiler-internal scratch; this re-derives per chip
    # (v5e/v6e: 128 MiB -> ~96 MiB usable; v7x: 64 MiB/TC -> ~48 MiB).
    return min((cap * 3) // 4, 100 * 1024 * 1024)


def _pick_chunk(T, B, H, itemsize, vmem_limit_bytes, cap=512):
    """Largest divisor of T whose streamed tiles fit in (half of) the budget."""
    # Per time step, double-buffered, both directions: gi (B,3H) + out (B,H).
    per_t = 2 * 2 * (B * 3 * H + B * H) * itemsize
    budget = vmem_limit_bytes // 2            # rest: weights, head, scratch
    max_tc = max(1, min(T, cap, budget // max(per_t, 1)))
    for tc in range(max_tc, 0, -1):
        if T % tc == 0:
            return tc
    return 1


# ------------------------- Pallas kernel -----------------------------------


def _gru_bidir_kernel(*refs, tc, unroll, with_head):
    """Both directions of one GRU layer; grid=(num_time_chunks,)."""
    if with_head:
        (gif_ref, gib_ref, whhf_ref, whhb_ref, bhnf_ref, bhnb_ref,
         w1f_ref, w1b_ref, b1_ref, w2_ref, b2_ref,
         of_ref, ob_ref, comp_ref, hf_scr, hb_scr) = refs
    else:
        (gif_ref, gib_ref, whhf_ref, whhb_ref, bhnf_ref, bhnb_ref,
         of_ref, ob_ref, hf_scr, hb_scr) = refs

    c = pl.program_id(0)
    H = whhf_ref.shape[0]
    B = hf_scr.shape[0]

    @pl.when(c == 0)
    def _():
        hf_scr[...] = jnp.zeros_like(hf_scr)
        hb_scr[...] = jnp.zeros_like(hb_scr)

    # Hoist weight / bias loads (and the b_hn broadcast) out of the time loop:
    # JAX does not CSE broadcasts inside loops.
    whh_f = whhf_ref[...]                                  # (H, 3H) = [r|z|n]
    whh_b = whhb_ref[...]
    bhn_f = jnp.broadcast_to(bhnf_ref[...], (B, H)).astype(jnp.float32)
    bhn_b = jnp.broadcast_to(bhnb_ref[...], (B, H)).astype(jnp.float32)

    def gru_step(gi, h, whh, bhn):
        # One fused (B,H)@(H,3H) MXU matmul per direction per step; f32 acc.
        gh = jnp.dot(h.astype(whh.dtype), whh,
                     preferred_element_type=jnp.float32)   # (B, 3H)
        gi_f32 = gi.astype(jnp.float32)
        rz = jax.nn.sigmoid(gi_f32[:, :2 * H] + gh[:, :2 * H])  # one 2H EUP op
        r = rz[:, :H]
        z = rz[:, H:]
        n = jnp.tanh(gi_f32[:, 2 * H:] + r * (gh[:, 2 * H:] + bhn))
        return (1.0 - z) * n + z * h

    def step(s, carry):
        h_f, h_b = carry
        sb = tc - 1 - s          # backward direction walks this chunk in reverse

        h_f = gru_step(gif_ref[s], h_f, whh_f, bhn_f)
        of_ref[s] = h_f.astype(of_ref.dtype)

        h_b = gru_step(gib_ref[sb], h_b, whh_b, bhn_b)
        ob_ref[sb] = h_b.astype(ob_ref.dtype)
        return h_f, h_b

    h_f, h_b = lax.fori_loop(0, tc, step, (hf_scr[...], hb_scr[...]),
                             unroll=unroll)
    hf_scr[...] = h_f
    hb_scr[...] = h_b

    if with_head:
        # Fused compress MLP on the final hidden states (already in VMEM/f32).
        @pl.when(c == pl.num_programs(0) - 1)
        def _():
            hid = jnp.maximum(
                jnp.dot(h_f, w1f_ref[...], preferred_element_type=jnp.float32)
                + jnp.dot(h_b, w1b_ref[...], preferred_element_type=jnp.float32)
                + b1_ref[...], 0.0)
            comp_ref[...] = (
                jnp.dot(hid, w2_ref[...], preferred_element_type=jnp.float32)
                + b2_ref[...]).astype(comp_ref.dtype)


def gru_bidir_layer(gi_f, gi_b, whh_f, whh_b, bhn_f, bhn_b, head=None,
                    vmem_limit_bytes=None):
    """gi_*: (T, B, 3H) precomputed input gates (all biases folded except b_hn).

    whh_*: (H, 3H) packed hidden weights.
    Returns (out_f (T,B,H), out_b (T,B,H)[, compressed (B,H)])."""
    T, B, H3 = gi_f.shape
    H = H3 // 3
    if vmem_limit_bytes is None:
        vmem_limit_bytes = _vmem_limit_bytes()
    tc = _pick_chunk(T, B, H, gi_f.dtype.itemsize, vmem_limit_bytes)
    nchunks = T // tc
    unroll = min(tc, 8)       # partial unroll: LLO visibility, bounded IMEM
    with_head = head is not None
    out_dtype = gi_f.dtype

    in_specs = [
        pl.BlockSpec((tc, B, 3 * H), lambda c: (c, 0, 0)),
        pl.BlockSpec((tc, B, 3 * H), lambda c, n=nchunks: (n - 1 - c, 0, 0)),
        pl.BlockSpec((H, 3 * H), lambda c: (0, 0)),
        pl.BlockSpec((H, 3 * H), lambda c: (0, 0)),
        pl.BlockSpec((1, H), lambda c: (0, 0)),
        pl.BlockSpec((1, H), lambda c: (0, 0)),
    ]
    out_specs = [
        pl.BlockSpec((tc, B, H), lambda c: (c, 0, 0)),
        pl.BlockSpec((tc, B, H), lambda c, n=nchunks: (n - 1 - c, 0, 0)),
    ]
    out_shapes = [jax.ShapeDtypeStruct((T, B, H), out_dtype),
                  jax.ShapeDtypeStruct((T, B, H), out_dtype)]
    args = [gi_f, gi_b, whh_f, whh_b, bhn_f, bhn_b]

    if with_head:
        w1f, w1b, b1, w2, b2 = head
        in_specs += [pl.BlockSpec((H, H), lambda c: (0, 0)),
                     pl.BlockSpec((H, H), lambda c: (0, 0)),
                     pl.BlockSpec((1, H), lambda c: (0, 0)),
                     pl.BlockSpec((H, H), lambda c: (0, 0)),
                     pl.BlockSpec((1, H), lambda c: (0, 0))]
        out_specs += [pl.BlockSpec((B, H), lambda c: (0, 0))]
        out_shapes += [jax.ShapeDtypeStruct((B, H), jnp.float32)]
        args += [w1f, w1b, b1, w2, b2]

    kernel = functools.partial(_gru_bidir_kernel, tc=tc, unroll=unroll,
                               with_head=with_head)
    return pl.pallas_call(
        kernel,
        out_shape=tuple(out_shapes),
        grid_spec=pltpu.PrefetchScalarGridSpec(
            num_scalar_prefetch=0,
            grid=(nchunks,),
            in_specs=in_specs,
            out_specs=out_specs,
            scratch_shapes=[pltpu.VMEM((B, H), jnp.float32),
                            pltpu.VMEM((B, H), jnp.float32)],
        ),
        compiler_params=pltpu.CompilerParams(
            dimension_semantics=("arbitrary",),
            vmem_limit_bytes=vmem_limit_bytes),
    )(*args)


# ------------------------- model wrapper -----------------------------------


def init_params(key, input_dim, hidden_dim, num_layers=2):
    params = {}
    H = hidden_dim
    keys = jax.random.split(key, num_layers * 2 * 4 + 4)
    k = 1.0 / jnp.sqrt(jnp.float32(H))
    idx = 0
    for layer in range(num_layers):
        in_dim = input_dim if layer == 0 else 2 * H
        for d in range(2):
            params[f"wih_l{layer}_d{d}"] = jax.random.uniform(
                keys[idx], (in_dim, 3 * H), jnp.float32, -k, k); idx += 1
            # Packed (H, 3H) = [r|z|n] along the lane axis.
            params[f"whh_l{layer}_d{d}"] = jax.random.uniform(
                keys[idx], (H, 3 * H), jnp.float32, -k, k); idx += 1
            params[f"bih_l{layer}_d{d}"] = jax.random.uniform(
                keys[idx], (3 * H,), jnp.float32, -k, k); idx += 1
            params[f"bhh_l{layer}_d{d}"] = jax.random.uniform(
                keys[idx], (3 * H,), jnp.float32, -k, k); idx += 1
    kc = 1.0 / jnp.sqrt(jnp.float32(2 * H))
    params["w1"] = jax.random.uniform(keys[idx], (2 * H, H), jnp.float32, -kc, kc)
    params["b1"] = jax.random.uniform(keys[idx + 1], (H,), jnp.float32, -kc, kc)
    kc2 = 1.0 / jnp.sqrt(jnp.float32(H))
    params["w2"] = jax.random.uniform(keys[idx + 2], (H, H), jnp.float32, -kc2, kc2)
    params["b2"] = jax.random.uniform(keys[idx + 3], (H,), jnp.float32, -kc2, kc2)
    return params


def gru_compressor_forward(params, x, num_layers=2,
                           compute_dtype=jnp.bfloat16):
    """x: (B, T, D) batch_first, like the PyTorch module.  Returns (B, H) f32.

    compute_dtype controls the streamed gi / layer-output / W_hh precision;
    the carried state, gate math and MXU accumulation always stay f32.
    NOTE: best MXU/vreg utilization needs B a multiple of 8 (16 for bf16) and
    H a multiple of 128; smaller shapes are correct but under-utilized.
    """
    B, T, D = x.shape
    H = params["whh_l0_d0"].shape[0]
    vmem_limit = _vmem_limit_bytes()
    x_tbd = jnp.transpose(x, (1, 0, 2))  # (T, B, D) time-major

    def fold_bias(bih, bhh):
        # b_ih + [b_hr, b_hz, 0] -- b_hn must stay inside the r-gated term.
        return bih + jnp.concatenate([bhh[:2 * H], jnp.zeros((H,), bhh.dtype)])

    def project_x(inp, wih, bias):  # (T,B,Din) -> (T,B,3H), natural layout
        T_, B_, Din = inp.shape
        g = jnp.dot(inp.reshape(T_ * B_, Din), wih,
                    preferred_element_type=jnp.float32) + bias
        return g.reshape(T_, B_, 3 * H).astype(compute_dtype)

    def project_pair(out_f, out_b, wih, bias):  # avoids the (T,B,2H) concat
        T_, B_, H_ = out_f.shape
        wih_c = wih.astype(compute_dtype)
        g = (jnp.dot(out_f.reshape(T_ * B_, H_), wih_c[:H_],
                     preferred_element_type=jnp.float32)
             + jnp.dot(out_b.reshape(T_ * B_, H_), wih_c[H_:],
                       preferred_element_type=jnp.float32)
             + bias)
        return g.reshape(T_, B_, 3 * H).astype(compute_dtype)

    out_f = out_b = compressed = None
    for layer in range(num_layers):
        w_f = params[f"wih_l{layer}_d0"]
        w_b = params[f"wih_l{layer}_d1"]
        bias_f = fold_bias(params[f"bih_l{layer}_d0"], params[f"bhh_l{layer}_d0"])
        bias_b = fold_bias(params[f"bih_l{layer}_d1"], params[f"bhh_l{layer}_d1"])
        if layer == 0:
            gi_f = project_x(x_tbd, w_f, bias_f)
            gi_b = project_x(x_tbd, w_b, bias_b)
        else:
            # TODO(synk): inter-layer nn.Dropout omitted (identity in eval mode)
            gi_f = project_pair(out_f, out_b, w_f, bias_f)
            gi_b = project_pair(out_f, out_b, w_b, bias_b)
        whh_f = params[f"whh_l{layer}_d0"].astype(compute_dtype)
        whh_b = params[f"whh_l{layer}_d1"].astype(compute_dtype)
        bhn_f = params[f"bhh_l{layer}_d0"][2 * H:].reshape(1, H)
        bhn_b = params[f"bhh_l{layer}_d1"][2 * H:].reshape(1, H)

        head = None
        if layer == num_layers - 1:
            head = (params["w1"][:H], params["w1"][H:],
                    params["b1"].reshape(1, H),
                    params["w2"], params["b2"].reshape(1, H))

        outs = gru_bidir_layer(gi_f, gi_b, whh_f, whh_b, bhn_f, bhn_b,
                               head=head, vmem_limit_bytes=vmem_limit)
        if head is None:
            out_f, out_b = outs
        else:
            out_f, out_b, compressed = outs
    return compressed


# ------------------------- pure-JAX reference -------------------------------


def _ref_gru_direction(x_tbd, wih, whh, bih, bhh, reverse=False):
    H = whh.shape[0]
    seq = x_tbd[::-1] if reverse else x_tbd

    def step(h, x_t):
        gi = x_t @ wih + bih                 # (B, 3H), cols [r|z|n]
        gh = h @ whh                         # (B, 3H), cols [r|z|n]
        r = jax.nn.sigmoid(gi[:, :H] + gh[:, :H] + bhh[:H])
        z = jax.nn.sigmoid(gi[:, H:2 * H] + gh[:, H:2 * H] + bhh[H:2 * H])
        n = jnp.tanh(gi[:, 2 * H:] + r * (gh[:, 2 * H:] + bhh[2 * H:]))
        h_new = (1.0 - z) * n + z * h
        return h_new, h_new

    h0 = jnp.zeros((x_tbd.shape[1], H), jnp.float32)
    h_last, allh = jax.lax.scan(step, h0, seq)
    if reverse:
        allh = allh[::-1]
    return allh, h_last


def _ref_forward(params, x, num_layers=2):
    layer_in = jnp.transpose(x, (1, 0, 2))
    hn_f = hn_b = None
    for layer in range(num_layers):
        out_f, hn_f = _ref_gru_direction(
            layer_in, params[f"wih_l{layer}_d0"], params[f"whh_l{layer}_d0"],
            params[f"bih_l{layer}_d0"], params[f"bhh_l{layer}_d0"], reverse=False)
        out_b, hn_b = _ref_gru_direction(
            layer_in, params[f"wih_l{layer}_d1"], params[f"whh_l{layer}_d1"],
            params[f"bih_l{layer}_d1"], params[f"bhh_l{layer}_d1"], reverse=True)
        layer_in = jnp.concatenate([out_f, out_b], axis=-1)
    combined = jnp.concatenate([hn_f, hn_b], axis=1)
    h = jnp.maximum(combined @ params["w1"] + params["b1"], 0.0)
    return h @ params["w2"] + params["b2"]


# ------------------------- main ---------------------------------------------


if __name__ == "__main__":
    B, T, D, H = 2, 8, 16, 32
    key = jax.random.PRNGKey(0)
    k_x, k_p = jax.random.split(key)
    x = jax.random.normal(k_x, (B, T, D), jnp.float32)
    params = init_params(k_p, input_dim=D, hidden_dim=H, num_layers=2)

    ref = jax.block_until_ready(_ref_forward(params, x))

    # f32 path: tight correctness check against the pure-JAX reference.
    fwd_f32 = jax.jit(functools.partial(gru_compressor_forward,
                                        compute_dtype=jnp.float32))
    out_f32 = jax.block_until_ready(fwd_f32(params, x))
    assert out_f32.shape == (B, H), out_f32.shape
    assert jnp.allclose(out_f32, ref, atol=2e-4, rtol=2e-4), (
        float(jnp.max(jnp.abs(out_f32 - ref))))

    # bf16 streaming path (default, perf configuration): looser bound.
    fwd_bf16 = jax.jit(functools.partial(gru_compressor_forward,
                                         compute_dtype=jnp.bfloat16))
    out_bf16 = jax.block_until_ready(fwd_bf16(params, x))
    assert out_bf16.shape == (B, H), out_bf16.shape
    bf16_err = float(jnp.max(jnp.abs(out_bf16.astype(jnp.float32) - ref)))
    assert bf16_err < 0.1, bf16_err

    print("KERNEL_OK")
</pallas_src>

<mosaic_0001>
module attributes {stable_mosaic.version = 11 : i64} {
  func.func @_gru_bidir_kernel(%arg0: i32, %arg1: memref<8x2x96xf32, #tpu.memory_space<vmem>>, %arg2: memref<8x2x96xf32, #tpu.memory_space<vmem>>, %arg3: memref<32x96xf32, #tpu.memory_space<vmem>>, %arg4: memref<32x96xf32, #tpu.memory_space<vmem>>, %arg5: memref<1x32xf32, #tpu.memory_space<vmem>>, %arg6: memref<1x32xf32, #tpu.memory_space<vmem>>, %arg7: memref<8x2x32xf32, #tpu.memory_space<vmem>>, %arg8: memref<8x2x32xf32, #tpu.memory_space<vmem>>, %arg9: memref<2x32xf32, #tpu.memory_space<vmem>>, %arg10: memref<2x32xf32, #tpu.memory_space<vmem>>) attributes {dimension_semantics = [#tpu.dimension_semantics<arbitrary>], iteration_bounds = array<i64: 1>, scalar_prefetch = 0 : i64, scratch_operands = 2 : i64, tpu.core_type = #tpu.core_type<tc>, window_params = [{transform_indices = @transform_0, window_bounds = array<i64: 8, 2, 96>}, {transform_indices = @transform_1, window_bounds = array<i64: 8, 2, 96>}, {pipeline_mode = #tpu.pipeline_mode<synchronous>, transform_indices = @transform_2, window_bounds = array<i64: 32, 96>}, {pipeline_mode = #tpu.pipeline_mode<synchronous>, transform_indices = @transform_3, window_bounds = array<i64: 32, 96>}, {pipeline_mode = #tpu.pipeline_mode<synchronous>, transform_indices = @transform_4, window_bounds = array<i64: 1, 32>}, {pipeline_mode = #tpu.pipeline_mode<synchronous>, transform_indices = @transform_5, window_bounds = array<i64: 1, 32>}, {transform_indices = @transform_6, window_bounds = array<i64: 8, 2, 32>}, {transform_indices = @transform_7, window_bounds = array<i64: 8, 2, 32>}]} {
    %c0_i32 = arith.constant 0 : i32
    %0 = arith.cmpi eq, %arg0, %c0_i32 : i32
    %1 = arith.extui %0 : i1 to i32
    %c0_i32_0 = arith.constant 0 : i32
    %2 = arith.cmpi ne, %1, %c0_i32_0 : i32
    scf.if %2 {
      %cst_136 = arith.constant 0.000000e+00 : f32
      %487 = vector.broadcast %cst_136 : f32 to vector<2x32xf32>
      %c0_137 = arith.constant 0 : index
      %c0_138 = arith.constant 0 : index
      %488 = vector.load %arg9[%c0_137, %c0_138] : memref<2x32xf32, #tpu.memory_space<vmem>>, vector<2x32xf32>
      tpu.vector_store %arg9[%c0_137, %c0_138], %487 {strides = array<i32>} : memref<2x32xf32, #tpu.memory_space<vmem>>, vector<2x32xf32>,
      %cst_139 = arith.constant 0.000000e+00 : f32
      %489 = vector.broadcast %cst_139 : f32 to vector<2x32xf32>
      %c0_140 = arith.constant 0 : index
      %c0_141 = arith.constant 0 : index
      %490 = vector.load %arg10[%c0_140, %c0_141] : memref<2x32xf32, #tpu.memory_space<vmem>>, vector<2x32xf32>
      tpu.vector_store %arg10[%c0_140, %c0_141], %489 {strides = array<i32>} : memref<2x32xf32, #tpu.memory_space<vmem>>, vector<2x32xf32>,
    } else {
    }
    %c0 = arith.constant 0 : index
    %c0_1 = arith.constant 0 : index
    %3 = vector.load %arg3[%c0, %c0_1] : memref<32x96xf32, #tpu.memory_space<vmem>>, vector<32x96xf32>
    %c0_2 = arith.constant 0 : index
    %c0_3 = arith.constant 0 : index
    %4 = vector.load %arg4[%c0_2, %c0_3] : memref<32x96xf32, #tpu.memory_space<vmem>>, vector<32x96xf32>
    %c0_4 = arith.constant 0 : index
    %c0_5 = arith.constant 0 : index
    %5 = vector.load %arg5[%c0_4, %c0_5] : memref<1x32xf32, #tpu.memory_space<vmem>>, vector<1x32xf32>
    %6 = vector.shape_cast %5 : vector<1x32xf32> to vector<1x32xf32>
    %7 = vector.broadcast %6 : vector<1x32xf32> to vector<2x32xf32>
    %c0_6 = arith.constant 0 : index
    %c0_7 = arith.constant 0 : index
    %8 = vector.load %arg6[%c0_6, %c0_7] : memref<1x32xf32, #tpu.memory_space<vmem>>, vector<1x32xf32>
    %9 = vector.shape_cast %8 : vector<1x32xf32> to vector<1x32xf32>
    %10 = vector.broadcast %9 : vector<1x32xf32> to vector<2x32xf32>
    %c0_8 = arith.constant 0 : index
    %c0_9 = arith.constant 0 : index
    %11 = vector.load %arg9[%c0_8, %c0_9] : memref<2x32xf32, #tpu.memory_space<vmem>>, vector<2x32xf32>
    %c0_10 = arith.constant 0 : index
    %c0_11 = arith.constant 0 : index
    %12 = vector.load %arg10[%c0_10, %c0_11] : memref<2x32xf32, #tpu.memory_space<vmem>>, vector<2x32xf32>
    %c0_i32_12 = arith.constant 0 : i32
    %c7_i32 = arith.constant 7 : i32
    %13 = arith.subi %c7_i32, %c0_i32_12 : i32
    %14 = arith.index_cast %c0_i32_12 : i32 to index
    %c0_13 = arith.constant 0 : index
    %c0_14 = arith.constant 0 : index
    %15 = vector.load %arg1[%14, %c0_13, %c0_14] : memref<8x2x96xf32, #tpu.memory_space<vmem>>, vector<1x2x96xf32>
    %16 = vector.shape_cast %15 : vector<1x2x96xf32> to vector<2x96xf32>
    %cst = arith.constant dense<0.000000e+00> : vector<2x96xf32>
    %17 = tpu.matmul %11, %3, %cst {dimension_numbers = #tpu.dot_dimension_numbers<[1], [0], [0], [1], [0, 0, 1, 1], [], []>} : vector<2x32xf32>, vector<32x96xf32>, vector<2x96xf32> -> vector<2x96xf32>
    %18 = vector.extract_strided_slice %16 {offsets = [0, 0], sizes = [2, 64], strides = [1, 1]} : vector<2x96xf32> to vector<2x64xf32>
    %19 = vector.extract_strided_slice %17 {offsets = [0, 0], sizes = [2, 64], strides = [1, 1]} : vector<2x96xf32> to vector<2x64xf32>
    %20 = arith.addf %18, %19 : vector<2x64xf32>
    %21 = arith.negf %20 : vector<2x64xf32>
    %22 = math.exp %21 : vector<2x64xf32>
    %cst_15 = arith.constant 1.000000e+00 : f32
    %23 = vector.broadcast %cst_15 : f32 to vector<2x64xf32>
    %24 = arith.addf %23, %22 : vector<2x64xf32>
    %25 = arith.divf %23, %24 : vector<2x64xf32>
    %26 = vector.extract_strided_slice %25 {offsets = [0, 0], sizes = [2, 32], strides = [1, 1]} : vector<2x64xf32> to vector<2x32xf32>
    %27 = vector.extract_strided_slice %25 {offsets = [0, 32], sizes = [2, 32], strides = [1, 1]} : vector<2x64xf32> to vector<2x32xf32>
    %28 = vector.extract_strided_slice %16 {offsets = [0, 64], sizes = [2, 32], strides = [1, 1]} : vector<2x96xf32> to vector<2x32xf32>
    %29 = vector.extract_strided_slice %17 {offsets = [0, 64], sizes = [2, 32], strides = [1, 1]} : vector<2x96xf32> to vector<2x32xf32>
    %30 = arith.addf %29, %7 : vector<2x32xf32>
    %31 = arith.mulf %26, %30 : vector<2x32xf32>
    %32 = arith.addf %28, %31 : vector<2x32xf32>
    %33 = math.tanh %32 : vector<2x32xf32>
    %cst_16 = arith.constant 1.000000e+00 : f32
    %34 = vector.broadcast %cst_16 : f32 to vector<2x32xf32>
    %35 = arith.subf %34, %27 : vector<2x32xf32>
    %36 = arith.mulf %35, %33 : vector<2x32xf32>
    %37 = arith.mulf %27, %11 : vector<2x32xf32>
    %38 = arith.addf %36, %37 : vector<2x32xf32>
    %39 = arith.index_cast %c0_i32_12 : i32 to index
    %c0_17 = arith.constant 0 : index
    %c0_18 = arith.constant 0 : index
    %40 = vector.load %arg7[%39, %c0_17, %c0_18] : memref<8x2x32xf32, #tpu.memory_space<vmem>>, vector<1x2x32xf32>
    %41 = vector.shape_cast %40 : vector<1x2x32xf32> to vector<2x32xf32>
    %42 = vector.shape_cast %38 : vector<2x32xf32> to vector<1x2x32xf32>
    tpu.vector_store %arg7[%39, %c0_17, %c0_18], %42 {strides = array<i32>} : memref<8x2x32xf32, #tpu.memory_space<vmem>>, vector<1x2x32xf32>,
    %43 = arith.index_cast %13 : i32 to index
    %c0_19 = arith.constant 0 : index
    %c0_20 = arith.constant 0 : index
    %44 = vector.load %arg2[%43, %c0_19, %c0_20] : memref<8x2x96xf32, #tpu.memory_space<vmem>>, vector<1x2x96xf32>
    %45 = vector.shape_cast %44 : vector<1x2x96xf32> to vector<2x96xf32>
    %cst_21 = arith.constant dense<0.000000e+00> : vector<2x96xf32>
    %46 = tpu.matmul %12, %4, %cst_21 {dimension_numbers = #tpu.dot_dimension_numbers<[1], [0], [0], [1], [0, 0, 1, 1], [], []>} : vector<2x32xf32>, vector<32x96xf32>, vector<2x96xf32> -> vector<2x96xf32>
    %47 = vector.extract_strided_slice %45 {offsets = [0, 0], sizes = [2, 64], strides = [1, 1]} : vector<2x96xf32> to vector<2x64xf32>
    %48 = vector.extract_strided_slice %46 {offsets = [0, 0], sizes = [2, 64], strides = [1, 1]} : vector<2x96xf32> to vector<2x64xf32>
    %49 = arith.addf %47, %48 : vector<2x64xf32>
    %50 = arith.negf %49 : vector<2x64xf32>
    %51 = math.exp %50 : vector<2x64xf32>
    %cst_22 = arith.constant 1.000000e+00 : f32
    %52 = vector.broadcast %cst_22 : f32 to vector<2x64xf32>
    %53 = arith.addf %52, %51 : vector<2x64xf32>
    %54 = arith.divf %52, %53 : vector<2x64xf32>
    %55 = vector.extract_strided_slice %54 {offsets = [0, 0], sizes = [2, 32], strides = [1, 1]} : vector<2x64xf32> to vector<2x32xf32>
    %56 = vector.extract_strided_slice %54 {offsets = [0, 32], sizes = [2, 32], strides = [1, 1]} : vector<2x64xf32> to vector<2x32xf32>
    %57 = vector.extract_strided_slice %45 {offsets = [0, 64], sizes = [2, 32], strides = [1, 1]} : vector<2x96xf32> to vector<2x32xf32>
    %58 = vector.extract_strided_slice %46 {offsets = [0, 64], sizes = [2, 32], strides = [1, 1]} : vector<2x96xf32> to vector<2x32xf32>
    %59 = arith.addf %58, %10 : vector<2x32xf32>
    %60 = arith.mulf %55, %59 : vector<2x32xf32>
    %61 = arith.addf %57, %60 : vector<2x32xf32>
    %62 = math.tanh %61 : vector<2x32xf32>
    %cst_23 = arith.constant 1.000000e+00 : f32
    %63 = vector.broadcast %cst_23 : f32 to vector<2x32xf32>
    %64 = arith.subf %63, %56 : vector<2x32xf32>
    %65 = arith.mulf %64, %62 : vector<2x32xf32>
    %66 = arith.mulf %56, %12 : vector<2x32xf32>
    %67 = arith.addf %65, %66 : vector<2x32xf32>
    %68 = arith.index_cast %13 : i32 to index
    %c0_24 = arith.constant 0 : index
    %c0_25 = arith.constant 0 : index
    %69 = vector.load %arg8[%68, %c0_24, %c0_25] : memref<8x2x32xf32, #tpu.memory_space<vmem>>, vector<1x2x32xf32>
    %70 = vector.shape_cast %69 : vector<1x2x32xf32> to vector<2x32xf32>
    %71 = vector.shape_cast %67 : vector<2x32xf32> to vector<1x2x32xf32>
    tpu.vector_store %arg8[%68, %c0_24, %c0_25], %71 {strides = array<i32>} : memref<8x2x32xf32, #tpu.memory_space<vmem>>, vector<1x2x32xf32>,
    %c1_i32 = arith.constant 1 : i32
    %c7_i32_26 = arith.constant 7 : i32
    %72 = arith.subi %c7_i32_26, %c1_i32 : i32
    %73 = arith.index_cast %c1_i32 : i32 to index
    %c0_27 = arith.constant 0 : index
    %c0_28 = arith.constant 0 : index
    %74 = vector.load %arg1[%73, %c0_27, %c0_28] : memref<8x2x96xf32, #tpu.memory_space<vmem>>, vector<1x2x96xf32>
    %75 = vector.shape_cast %74 : vector<1x2x96xf32> to vector<2x96xf32>
    %cst_29 = arith.constant dense<0.000000e+00> : vector<2x96xf32>
    %76 = tpu.matmul %38, %3, %cst_29 {dimension_numbers = #tpu.dot_dimension_numbers<[1], [0], [0], [1], [0, 0, 1, 1], [], []>} : vector<2x32xf32>, vector<32x96xf32>, vector<2x96xf32> -> vector<2x96xf32>
    %77 = vector.extract_strided_slice %75 {offsets = [0, 0], sizes = [2, 64], strides = [1, 1]} : vector<2x96xf32> to vector<2x64xf32>
    %78 = vector.extract_strided_slice %76 {offsets = [0, 0], sizes = [2, 64], strides = [1, 1]} : vector<2x96xf32> to vector<2x64xf32>
    %79 = arith.addf %77, %78 : vector<2x64xf32>
    %80 = arith.negf %79 : vector<2x64xf32>
    %81 = math.exp %80 : vector<2x64xf32>
    %cst_30 = arith.constant 1.000000e+00 : f32
    %82 = vector.broadcast %cst_30 : f32 to vector<2x64xf32>
    %83 = arith.addf %82, %81 : vector<2x64xf32>
    %84 = arith.divf %82, %83 : vector<2x64xf32>
    %85 = vector.extract_strided_slice %84 {offsets = [0, 0], sizes = [2, 32], strides = [1, 1]} : vector<2x64xf32> to vector<2x32xf32>
    %86 = vector.extract_strided_slice %84 {offsets = [0, 32], sizes = [2, 32], strides = [1, 1]} : vector<2x64xf32> to vector<2x32xf32>
    %87 = vector.extract_strided_slice %75 {offsets = [0, 64], sizes = [2, 32], strides = [1, 1]} : vector<2x96xf32> to vector<2x32xf32>
    %88 = vector.extract_strided_slice %76 {offsets = [0, 64], sizes = [2, 32], strides = [1, 1]} : vector<2x96xf32> to vector<2x32xf32>
    %89 = arith.addf %88, %7 : vector<2x32xf32>
    %90 = arith.mulf %85, %89 : vector<2x32xf32>
    %91 = arith.addf %87, %90 : vector<2x32xf32>
    %92 = math.tanh %91 : vector<2x32xf32>
    %cst_31 = arith.constant 1.000000e+00 : f32
    %93 = vector.broadcast %cst_31 : f32 to vector<2x32xf32>
    %94 = arith.subf %93, %86 : vector<2x32xf32>
    %95 = arith.mulf %94, %92 : vector<2x32xf32>
    %96 = arith.mulf %86, %38 : vector<2x32xf32>
    %97 = arith.addf %95, %96 : vector<2x32xf32>
    %98 = arith.index_cast %c1_i32 : i32 to index
    %c0_32 = arith.constant 0 : index
    %c0_33 = arith.constant 0 : index
    %99 = vector.load %arg7[%98, %c0_32, %c0_33] : memref<8x2x32xf32, #tpu.memory_space<vmem>>, vector<1x2x32xf32>
    %100 = vector.shape_cast %99 : vector<1x2x32xf32> to vector<2x32xf32>
    %101 = vector.shape_cast %97 : vector<2x32xf32> to vector<1x2x32xf32>
    tpu.vector_store %arg7[%98, %c0_32, %c0_33], %101 {strides = array<i32>} : memref<8x2x32xf32, #tpu.memory_space<vmem>>, vector<1x2x32xf32>,
    %102 = arith.index_cast %72 : i32 to index
    %c0_34 = arith.constant 0 : index
    %c0_35 = arith.constant 0 : index
    %103 = vector.load %arg2[%102, %c0_34, %c0_35] : memref<8x2x96xf32, #tpu.memory_space<vmem>>, vector<1x2x96xf32>
    %104 = vector.shape_cast %103 : vector<1x2x96xf32> to vector<2x96xf32>
    %cst_36 = arith.constant dense<0.000000e+00> : vector<2x96xf32>
    %105 = tpu.matmul %67, %4, %cst_36 {dimension_numbers = #tpu.dot_dimension_numbers<[1], [0], [0], [1], [0, 0, 1, 1], [], []>} : vector<2x32xf32>, vector<32x96xf32>, vector<2x96xf32> -> vector<2x96xf32>
    %106 = vector.extract_strided_slice %104 {offsets = [0, 0], sizes = [2, 64], strides = [1, 1]} : vector<2x96xf32> to vector<2x64xf32>
    %107 = vector.extract_strided_slice %105 {offsets = [0, 0], sizes = [2, 64], strides = [1, 1]} : vector<2x96xf32> to vector<2x64xf32>
    %108 = arith.addf %106, %107 : vector<2x64xf32>
    %109 = arith.negf %108 : vector<2x64xf32>
    %110 = math.exp %109 : vector<2x64xf32>
    %cst_37 = arith.constant 1.000000e+00 : f32
    %111 = vector.broadcast %cst_37 : f32 to vector<2x64xf32>
    %112 = arith.addf %111, %110 : vector<2x64xf32>
    %113 = arith.divf %111, %112 : vector<2x64xf32>
    %114 = vector.extract_strided_slice %113 {offsets = [0, 0], sizes = [2, 32], strides = [1, 1]} : vector<2x64xf32> to vector<2x32xf32>
    %115 = vector.extract_strided_slice %113 {offsets = [0, 32], sizes = [2, 32], strides = [1, 1]} : vector<2x64xf32> to vector<2x32xf32>
    %116 = vector.extract_strided_slice %104 {offsets = [0, 64], sizes = [2, 32], strides = [1, 1]} : vector<2x96xf32> to vector<2x32xf32>
    %117 = vector.extract_strided_slice %105 {offsets = [0, 64], sizes = [2, 32], strides = [1, 1]} : vector<2x96xf32> to vector<2x32xf32>
    %118 = arith.addf %117, %10 : vector<2x32xf32>
    %119 = arith.mulf %114, %118 : vector<2x32xf32>
    %120 = arith.addf %116, %119 : vector<2x32xf32>
    %121 = math.tanh %120 : vector<2x32xf32>
    %cst_38 = arith.constant 1.000000e+00 : f32
    %122 = vector.broadcast %cst_38 : f32 to vector<2x32xf32>
    %123 = arith.subf %122, %115 : vector<2x32xf32>
    %124 = arith.mulf %123, %121 : vector<2x32xf32>
    %125 = arith.mulf %115, %67 : vector<2x32xf32>
    %126 = arith.addf %124, %125 : vector<2x32xf32>
    %127 = arith.index_cast %72 : i32 to index
    %c0_39 = arith.constant 0 : index
    %c0_40 = arith.constant 0 : index
    %128 = vector.load %arg8[%127, %c0_39, %c0_40] : memref<8x2x32xf32, #tpu.memory_space<vmem>>, vector<1x2x32xf32>
    %129 = vector.shape_cast %128 : vector<1x2x32xf32> to vector<2x32xf32>
    %130 = vector.shape_cast %126 : vector<2x32xf32> to vector<1x2x32xf32>
    tpu.vector_store %arg8[%127, %c0_39, %c0_40], %130 {strides = array<i32>} : memref<8x2x32xf32, #tpu.memory_space<vmem>>, vector<1x2x32xf32>,
    %c2_i32 = arith.constant 2 : i32
    %c7_i32_41 = arith.constant 7 : i32
    %131 = arith.subi %c7_i32_41, %c2_i32 : i32
    %132 = arith.index_cast %c2_i32 : i32 to index
    %c0_42 = arith.constant 0 : index
    %c0_43 = arith.constant 0 : index
    %133 = vector.load %arg1[%132, %c0_42, %c0_43] : memref<8x2x96xf32, #tpu.memory_space<vmem>>, vector<1x2x96xf32>
    %134 = vector.shape_cast %133 : vector<1x2x96xf32> to vector<2x96xf32>
    %cst_44 = arith.constant dense<0.000000e+00> : vector<2x96xf32>
    %135 = tpu.matmul %97, %3, %cst_44 {dimension_numbers = #tpu.dot_dimension_numbers<[1], [0], [0], [1], [0, 0, 1, 1], [], []>} : vector<2x32xf32>, vector<32x96xf32>, vector<2x96xf32> -> vector<2x96xf32>
    %136 = vector.extract_strided_slice %134 {offsets = [0, 0], sizes = [2, 64], strides = [1, 1]} : vector<2x96xf32> to vector<2x64xf32>
    %137 = vector.extract_strided_slice %135 {offsets = [0, 0], sizes = [2, 64], strides = [1, 1]} : vector<2x96xf32> to vector<2x64xf32>
    %138 = arith.addf %136, %137 : vector<2x64xf32>
    %139 = arith.negf %138 : vector<2x64xf32>
    %140 = math.exp %139 : vector<2x64xf32>
    %cst_45 = arith.constant 1.000000e+00 : f32
    %141 = vector.broadcast %cst_45 : f32 to vector<2x64xf32>
    %142 = arith.addf %141, %140 : vector<2x64xf32>
    %143 = arith.divf %141, %142 : vector<2x64xf32>
    %144 = vector.extract_strided_slice %143 {offsets = [0, 0], sizes = [2, 32], strides = [1, 1]} : vector<2x64xf32> to vector<2x32xf32>
    %145 = vector.extract_strided_slice %143 {offsets = [0, 32], sizes = [2, 32], strides = [1, 1]} : vector<2x64xf32> to vector<2x32xf32>
    %146 = vector.extract_strided_slice %134 {offsets = [0, 64], sizes = [2, 32], strides = [1, 1]} : vector<2x96xf32> to vector<2x32xf32>
    %147 = vector.extract_strided_slice %135 {offsets = [0, 64], sizes = [2, 32], strides = [1, 1]} : vector<2x96xf32> to vector<2x32xf32>
    %148 = arith.addf %147, %7 : vector<2x32xf32>
    %149 = arith.mulf %144, %148 : vector<2x32xf32>
    %150 = arith.addf %146, %149 : vector<2x32xf32>
    %151 = math.tanh %150 : vector<2x32xf32>
    %cst_46 = arith.constant 1.000000e+00 : f32
    %152 = vector.broadcast %cst_46 : f32 to vector<2x32xf32>
    %153 = arith.subf %152, %145 : vector<2x32xf32>
    %154 = arith.mulf %153, %151 : vector<2x32xf32>
    %155 = arith.mulf %145, %97 : vector<2x32xf32>
    %156 = arith.addf %154, %155 : vector<2x32xf32>
    %157 = arith.index_cast %c2_i32 : i32 to index
    %c0_47 = arith.constant 0 : index
    %c0_48 = arith.constant 0 : index
    %158 = vector.load %arg7[%157, %c0_47, %c0_48] : memref<8x2x32xf32, #tpu.memory_space<vmem>>, vector<1x2x32xf32>
    %159 = vector.shape_cast %158 : vector<1x2x32xf32> to vector<2x32xf32>
    %160 = vector.shape_cast %156 : vector<2x32xf32> to vector<1x2x32xf32>
    tpu.vector_store %arg7[%157, %c0_47, %c0_48], %160 {strides = array<i32>} : memref<8x2x32xf32, #tpu.memory_space<vmem>>, vector<1x2x32xf32>,
    %161 = arith.index_cast %131 : i32 to index
    %c0_49 = arith.constant 0 : index
    %c0_50 = arith.constant 0 : index
    %162 = vector.load %arg2[%161, %c0_49, %c0_50] : memref<8x2x96xf32, #tpu.memory_space<vmem>>, vector<1x2x96xf32>
    %163 = vector.shape_cast %162 : vector<1x2x96xf32> to vector<2x96xf32>
    %cst_51 = arith.constant dense<0.000000e+00> : vector<2x96xf32>
    %164 = tpu.matmul %126, %4, %cst_51 {dimension_numbers = #tpu.dot_dimension_numbers<[1], [0], [0], [1], [0, 0, 1, 1], [], []>} : vector<2x32xf32>, vector<32x96xf32>, vector<2x96xf32> -> vector<2x96xf32>
    %165 = vector.extract_strided_slice %163 {offsets = [0, 0], sizes = [2, 64], strides = [1, 1]} : vector<2x96xf32> to vector<2x64xf32>
    %166 = vector.extract_strided_slice %164 {offsets = [0, 0], sizes = [2, 64], strides = [1, 1]} : vector<2x96xf32> to vector<2x64xf32>
    %167 = arith.addf %165, %166 : vector<2x64xf32>
    %168 = arith.negf %167 : vector<2x64xf32>
    %169 = math.exp %168 : vector<2x64xf32>
    %cst_52 = arith.constant 1.000000e+00 : f32
    %170 = vector.broadcast %cst_52 : f32 to vector<2x64xf32>
    %171 = arith.addf %170, %169 : vector<2x64xf32>
    %172 = arith.divf %170, %171 : vector<2x64xf32>
    %173 = vector.extract_strided_slice %172 {offsets = [0, 0], sizes = [2, 32], strides = [1, 1]} : vector<2x64xf32> to vector<2x32xf32>
    %174 = vector.extract_strided_slice %172 {offsets = [0, 32], sizes = [2, 32], strides = [1, 1]} : vector<2x64xf32> to vector<2x32xf32>
    %175 = vector.extract_strided_slice %163 {offsets = [0, 64], sizes = [2, 32], strides = [1, 1]} : vector<2x96xf32> to vector<2x32xf32>
    %176 = vector.extract_strided_slice %164 {offsets = [0, 64], sizes = [2, 32], strides = [1, 1]} : vector<2x96xf32> to vector<2x32xf32>
    %177 = arith.addf %176, %10 : vector<2x32xf32>
    %178 = arith.mulf %173, %177 : vector<2x32xf32>
    %179 = arith.addf %175, %178 : vector<2x32xf32>
    %180 = math.tanh %179 : vector<2x32xf32>
    %cst_53 = arith.constant 1.000000e+00 : f32
    %181 = vector.broadcast %cst_53 : f32 to vector<2x32xf32>
    %182 = arith.subf %181, %174 : vector<2x32xf32>
    %183 = arith.mulf %182, %180 : vector<2x32xf32>
    %184 = arith.mulf %174, %126 : vector<2x32xf32>
    %185 = arith.addf %183, %184 : vector<2x32xf32>
    %186 = arith.index_cast %131 : i32 to index
    %c0_54 = arith.constant 0 : index
    %c0_55 = arith.constant 0 : index
    %187 = vector.load %arg8[%186, %c0_54, %c0_55] : memref<8x2x32xf32, #tpu.memory_space<vmem>>, vector<1x2x32xf32>
    %188 = vector.shape_cast %187 : vector<1x2x32xf32> to vector<2x32xf32>
    %189 = vector.shape_cast %185 : vector<2x32xf32> to vector<1x2x32xf32>
    tpu.vector_store %arg8[%186, %c0_54, %c0_55], %189 {strides = array<i32>} : memref<8x2x32xf32, #tpu.memory_space<vmem>>, vector<1x2x32xf32>,
    %c3_i32 = arith.constant 3 : i32
    %c7_i32_56 = arith.constant 7 : i32
    %190 = arith.subi %c7_i32_56, %c3_i32 : i32
    %191 = arith.index_cast %c3_i32 : i32 to index
    %c0_57 = arith.constant 0 : index
    %c0_58 = arith.constant 0 : index
    %192 = vector.load %arg1[%191, %c0_57, %c0_58] : memref<8x2x96xf32, #tpu.memory_space<vmem>>, vector<1x2x96xf32>
    %193 = vector.shape_cast %192 : vector<1x2x96xf32> to vector<2x96xf32>
    %cst_59 = arith.constant dense<0.000000e+00> : vector<2x96xf32>
    %194 = tpu.matmul %156, %3, %cst_59 {dimension_numbers = #tpu.dot_dimension_numbers<[1], [0], [0], [1], [0, 0, 1, 1], [], []>} : vector<2x32xf32>, vector<32x96xf32>, vector<2x96xf32> -> vector<2x96xf32>
    %195 = vector.extract_strided_slice %193 {offsets = [0, 0], sizes = [2, 64], strides = [1, 1]} : vector<2x96xf32> to vector<2x64xf32>
    %196 = vector.extract_strided_slice %194 {offsets = [0, 0], sizes = [2, 64], strides = [1, 1]} : vector<2x96xf32> to vector<2x64xf32>
    %197 = arith.addf %195, %196 : vector<2x64xf32>
    %198 = arith.negf %197 : vector<2x64xf32>
    %199 = math.exp %198 : vector<2x64xf32>
    %cst_60 = arith.constant 1.000000e+00 : f32
    %200 = vector.broadcast %cst_60 : f32 to vector<2x64xf32>
    %201 = arith.addf %200, %199 : vector<2x64xf32>
    %202 = arith.divf %200, %201 : vector<2x64xf32>
    %203 = vector.extract_strided_slice %202 {offsets = [0, 0], sizes = [2, 32], strides = [1, 1]} : vector<2x64xf32> to vector<2x32xf32>
    %204 = vector.extract_strided_slice %202 {offsets = [0, 32], sizes = [2, 32], strides = [1, 1]} : vector<2x64xf32> to vector<2x32xf32>
    %205 = vector.extract_strided_slice %193 {offsets = [0, 64], sizes = [2, 32], strides = [1, 1]} : vector<2x96xf32> to vector<2x32xf32>
    %206 = vector.extract_strided_slice %194 {offsets = [0, 64], sizes = [2, 32], strides = [1, 1]} : vector<2x96xf32> to vector<2x32xf32>
    %207 = arith.addf %206, %7 : vector<2x32xf32>
    %208 = arith.mulf %203, %207 : vector<2x32xf32>
    %209 = arith.addf %205, %208 : vector<2x32xf32>
    %210 = math.tanh %209 : vector<2x32xf32>
    %cst_61 = arith.constant 1.000000e+00 : f32
    %211 = vector.broadcast %cst_61 : f32 to vector<2x32xf32>
    %212 = arith.subf %211, %204 : vector<2x32xf32>
    %213 = arith.mulf %212, %210 : vector<2x32xf32>
    %214 = arith.mulf %204, %156 : vector<2x32xf32>
    %215 = arith.addf %213, %214 : vector<2x32xf32>
    %216 = arith.index_cast %c3_i32 : i32 to index
    %c0_62 = arith.constant 0 : index
    %c0_63 = arith.constant 0 : index
    %217 = vector.load %arg7[%216, %c0_62, %c0_63] : memref<8x2x32xf32, #tpu.memory_space<vmem>>, vector<1x2x32xf32>
    %218 = vector.shape_cast %217 : vector<1x2x32xf32> to vector<2x32xf32>
    %219 = vector.shape_cast %215 : vector<2x32xf32> to vector<1x2x32xf32>
    tpu.vector_store %arg7[%216, %c0_62, %c0_63], %219 {strides = array<i32>} : memref<8x2x32xf32, #tpu.memory_space<vmem>>, vector<1x2x32xf32>,
    %220 = arith.index_cast %190 : i32 to index
    %c0_64 = arith.constant 0 : index
    %c0_65 = arith.constant 0 : index
    %221 = vector.load %arg2[%220, %c0_64, %c0_65] : memref<8x2x96xf32, #tpu.memory_space<vmem>>, vector<1x2x96xf32>
    %222 = vector.shape_cast %221 : vector<1x2x96xf32> to vector<2x96xf32>
    %cst_66 = arith.constant dense<0.000000e+00> : vector<2x96xf32>
    %223 = tpu.matmul %185, %4, %cst_66 {dimension_numbers = #tpu.dot_dimension_numbers<[1], [0], [0], [1], [0, 0, 1, 1], [], []>} : vector<2x32xf32>, vector<32x96xf32>, vector<2x96xf32> -> vector<2x96xf32>
    %224 = vector.extract_strided_slice %222 {offsets = [0, 0], sizes = [2, 64], strides = [1, 1]} : vector<2x96xf32> to vector<2x64xf32>
    %225 = vector.extract_strided_slice %223 {offsets = [0, 0], sizes = [2, 64], strides = [1, 1]} : vector<2x96xf32> to vector<2x64xf32>
    %226 = arith.addf %224, %225 : vector<2x64xf32>
    %227 = arith.negf %226 : vector<2x64xf32>
    %228 = math.exp %227 : vector<2x64xf32>
    %cst_67 = arith.constant 1.000000e+00 : f32
    %229 = vector.broadcast %cst_67 : f32 to vector<2x64xf32>
    %230 = arith.addf %229, %228 : vector<2x64xf32>
    %231 = arith.divf %229, %230 : vector<2x64xf32>
    %232 = vector.extract_strided_slice %231 {offsets = [0, 0], sizes = [2, 32], strides = [1, 1]} : vector<2x64xf32> to vector<2x32xf32>
    %233 = vector.extract_strided_slice %231 {offsets = [0, 32], sizes = [2, 32], strides = [1, 1]} : vector<2x64xf32> to vector<2x32xf32>
    %234 = vector.extract_strided_slice %222 {offsets = [0, 64], sizes = [2, 32], strides = [1, 1]} : vector<2x96xf32> to vector<2x32xf32>
    %235 = vector.extract_strided_slice %223 {offsets = [0, 64], sizes = [2, 32], strides = [1, 1]} : vector<2x96xf32> to vector<2x32xf32>
    %236 = arith.addf %235, %10 : vector<2x32xf32>
    %237 = arith.mulf %232, %236 : vector<2x32xf32>
    %238 = arith.addf %234, %237 : vector<2x32xf32>
    %239 = math.tanh %238 : vector<2x32xf32>
    %cst_68 = arith.constant 1.000000e+00 : f32
    %240 = vector.broadcast %cst_68 : f32 to vector<2x32xf32>
    %241 = arith.subf %240, %233 : vector<2x32xf32>
    %242 = arith.mulf %241, %239 : vector<2x32xf32>
    %243 = arith.mulf %233, %185 : vector<2x32xf32>
    %244 = arith.addf %242, %243 : vector<2x32xf32>
    %245 = arith.index_cast %190 : i32 to index
    %c0_69 = arith.constant 0 : index
    %c0_70 = arith.constant 0 : index
    %246 = vector.load %arg8[%245, %c0_69, %c0_70] : memref<8x2x32xf32, #tpu.memory_space<vmem>>, vector<1x2x32xf32>
    %247 = vector.shape_cast %246 : vector<1x2x32xf32> to vector<2x32xf32>
    %248 = vector.shape_cast %244 : vector<2x32xf32> to vector<1x2x32xf32>
    tpu.vector_store %arg8[%245, %c0_69, %c0_70], %248 {strides = array<i32>} : memref<8x2x32xf32, #tpu.memory_space<vmem>>, vector<1x2x32xf32>,
    %c4_i32 = arith.constant 4 : i32
    %c7_i32_71 = arith.constant 7 : i32
    %249 = arith.subi %c7_i32_71, %c4_i32 : i32
    %250 = arith.index_cast %c4_i32 : i32 to index
    %c0_72 = arith.constant 0 : index
    %c0_73 = arith.constant 0 : index
    %251 = vector.load %arg1[%250, %c0_72, %c0_73] : memref<8x2x96xf32, #tpu.memory_space<vmem>>, vector<1x2x96xf32>
    %252 = vector.shape_cast %251 : vector<1x2x96xf32> to vector<2x96xf32>
    %cst_74 = arith.constant dense<0.000000e+00> : vector<2x96xf32>
    %253 = tpu.matmul %215, %3, %cst_74 {dimension_numbers = #tpu.dot_dimension_numbers<[1], [0], [0], [1], [0, 0, 1, 1], [], []>} : vector<2x32xf32>, vector<32x96xf32>, vector<2x96xf32> -> vector<2x96xf32>
    %254 = vector.extract_strided_slice %252 {offsets = [0, 0], sizes = [2, 64], strides = [1, 1]} : vector<2x96xf32> to vector<2x64xf32>
    %255 = vector.extract_strided_slice %253 {offsets = [0, 0], sizes = [2, 64], strides = [1, 1]} : vector<2x96xf32> to vector<2x64xf32>
    %256 = arith.addf %254, %255 : vector<2x64xf32>
    %257 = arith.negf %256 : vector<2x64xf32>
    %258 = math.exp %257 : vector<2x64xf32>
    %cst_75 = arith.constant 1.000000e+00 : f32
    %259 = vector.broadcast %cst_75 : f32 to vector<2x64xf32>
    %260 = arith.addf %259, %258 : vector<2x64xf32>
    %261 = arith.divf %259, %260 : vector<2x64xf32>
    %262 = vector.extract_strided_slice %261 {offsets = [0, 0], sizes = [2, 32], strides = [1, 1]} : vector<2x64xf32> to vector<2x32xf32>
    %263 = vector.extract_strided_slice %261 {offsets = [0, 32], sizes = [2, 32], strides = [1, 1]} : vector<2x64xf32> to vector<2x32xf32>
    %264 = vector.extract_strided_slice %252 {offsets = [0, 64], sizes = [2, 32], strides = [1, 1]} : vector<2x96xf32> to vector<2x32xf32>
    %265 = vector.extract_strided_slice %253 {offsets = [0, 64], sizes = [2, 32], strides = [1, 1]} : vector<2x96xf32> to vector<2x32xf32>
    %266 = arith.addf %265, %7 : vector<2x32xf32>
    %267 = arith.mulf %262, %266 : vector<2x32xf32>
    %268 = arith.addf %264, %267 : vector<2x32xf32>
    %269 = math.tanh %268 : vector<2x32xf32>
    %cst_76 = arith.constant 1.000000e+00 : f32
    %270 = vector.broadcast %cst_76 : f32 to vector<2x32xf32>
    %271 = arith.subf %270, %263 : vector<2x32xf32>
    %272 = arith.mulf %271, %269 : vector<2x32xf32>
    %273 = arith.mulf %263, %215 : vector<2x32xf32>
    %274 = arith.addf %272, %273 : vector<2x32xf32>
    %275 = arith.index_cast %c4_i32 : i32 to index
    %c0_77 = arith.constant 0 : index
    %c0_78 = arith.constant 0 : index
    %276 = vector.load %arg7[%275, %c0_77, %c0_78] : memref<8x2x32xf32, #tpu.memory_space<vmem>>, vector<1x2x32xf32>
    %277 = vector.shape_cast %276 : vector<1x2x32xf32> to vector<2x32xf32>
    %278 = vector.shape_cast %274 : vector<2x32xf32> to vector<1x2x32xf32>
    tpu.vector_store %arg7[%275, %c0_77, %c0_78], %278 {strides = array<i32>} : memref<8x2x32xf32, #tpu.memory_space<vmem>>, vector<1x2x32xf32>,
    %279 = arith.index_cast %249 : i32 to index
    %c0_79 = arith.constant 0 : index
    %c0_80 = arith.constant 0 : index
    %280 = vector.load %arg2[%279, %c0_79, %c0_80] : memref<8x2x96xf32, #tpu.memory_space<vmem>>, vector<1x2x96xf32>
    %281 = vector.shape_cast %280 : vector<1x2x96xf32> to vector<2x96xf32>
    %cst_81 = arith.constant dense<0.000000e+00> : vector<2x96xf32>
    %282 = tpu.matmul %244, %4, %cst_81 {dimension_numbers = #tpu.dot_dimension_numbers<[1], [0], [0], [1], [0, 0, 1, 1], [], []>} : vector<2x32xf32>, vector<32x96xf32>, vector<2x96xf32> -> vector<2x96xf32>
    %283 = vector.extract_strided_slice %281 {offsets = [0, 0], sizes = [2, 64], strides = [1, 1]} : vector<2x96xf32> to vector<2x64xf32>
    %284 = vector.extract_strided_slice %282 {offsets = [0, 0], sizes = [2, 64], strides = [1, 1]} : vector<2x96xf32> to vector<2x64xf32>
    %285 = arith.addf %283, %284 : vector<2x64xf32>
    %286 = arith.negf %285 : vector<2x64xf32>
    %287 = math.exp %286 : vector<2x64xf32>
    %cst_82 = arith.constant 1.000000e+00 : f32
    %288 = vector.broadcast %cst_82 : f32 to vector<2x64xf32>
    %289 = arith.addf %288, %287 : vector<2x64xf32>
    %290 = arith.divf %288, %289 : vector<2x64xf32>
    %291 = vector.extract_strided_slice %290 {offsets = [0, 0], sizes = [2, 32], strides = [1, 1]} : vector<2x64xf32> to vector<2x32xf32>
    %292 = vector.extract_strided_slice %290 {offsets = [0, 32], sizes = [2, 32], strides = [1, 1]} : vector<2x64xf32> to vector<2x32xf32>
    %293 = vector.extract_strided_slice %281 {offsets = [0, 64], sizes = [2, 32], strides = [1, 1]} : vector<2x96xf32> to vector<2x32xf32>
    %294 = vector.extract_strided_slice %282 {offsets = [0, 64], sizes = [2, 32], strides = [1, 1]} : vector<2x96xf32> to vector<2x32xf32>
    %295 = arith.addf %294, %10 : vector<2x32xf32>
    %296 = arith.mulf %291, %295 : vector<2x32xf32>
    %297 = arith.addf %293, %296 : vector<2x32xf32>
    %298 = math.tanh %297 : vector<2x32xf32>
    %cst_83 = arith.constant 1.000000e+00 : f32
    %299 = vector.broadcast %cst_83 : f32 to vector<2x32xf32>
    %300 = arith.subf %299, %292 : vector<2x32xf32>
    %301 = arith.mulf %300, %298 : vector<2x32xf32>
    %302 = arith.mulf %292, %244 : vector<2x32xf32>
    %303 = arith.addf %301, %302 : vector<2x32xf32>
    %304 = arith.index_cast %249 : i32 to index
    %c0_84 = arith.constant 0 : index
    %c0_85 = arith.constant 0 : index
    %305 = vector.load %arg8[%304, %c0_84, %c0_85] : memref<8x2x32xf32, #tpu.memory_space<vmem>>, vector<1x2x32xf32>
    %306 = vector.shape_cast %305 : vector<1x2x32xf32> to vector<2x32xf32>
    %307 = vector.shape_cast %303 : vector<2x32xf32> to vector<1x2x32xf32>
    tpu.vector_store %arg8[%304, %c0_84, %c0_85], %307 {strides = array<i32>} : memref<8x2x32xf32, #tpu.memory_space<vmem>>, vector<1x2x32xf32>,
    %c5_i32 = arith.constant 5 : i32
    %c7_i32_86 = arith.constant 7 : i32
    %308 = arith.subi %c7_i32_86, %c5_i32 : i32
    %309 = arith.index_cast %c5_i32 : i32 to index
    %c0_87 = arith.constant 0 : index
    %c0_88 = arith.constant 0 : index
    %310 = vector.load %arg1[%309, %c0_87, %c0_88] : memref<8x2x96xf32, #tpu.memory_space<vmem>>, vector<1x2x96xf32>
    %311 = vector.shape_cast %310 : vector<1x2x96xf32> to vector<2x96xf32>
    %cst_89 = arith.constant dense<0.000000e+00> : vector<2x96xf32>
    %312 = tpu.matmul %274, %3, %cst_89 {dimension_numbers = #tpu.dot_dimension_numbers<[1], [0], [0], [1], [0, 0, 1, 1], [], []>} : vector<2x32xf32>, vector<32x96xf32>, vector<2x96xf32> -> vector<2x96xf32>
    %313 = vector.extract_strided_slice %311 {offsets = [0, 0], sizes = [2, 64], strides = [1, 1]} : vector<2x96xf32> to vector<2x64xf32>
    %314 = vector.extract_strided_slice %312 {offsets = [0, 0], sizes = [2, 64], strides = [1, 1]} : vector<2x96xf32> to vector<2x64xf32>
    %315 = arith.addf %313, %314 : vector<2x64xf32>
    %316 = arith.negf %315 : vector<2x64xf32>
    %317 = math.exp %316 : vector<2x64xf32>
    %cst_90 = arith.constant 1.000000e+00 : f32
    %318 = vector.broadcast %cst_90 : f32 to vector<2x64xf32>
    %319 = arith.addf %318, %317 : vector<2x64xf32>
    %320 = arith.divf %318, %319 : vector<2x64xf32>
    %321 = vector.extract_strided_slice %320 {offsets = [0, 0], sizes = [2, 32], strides = [1, 1]} : vector<2x64xf32> to vector<2x32xf32>
    %322 = vector.extract_strided_slice %320 {offsets = [0, 32], sizes = [2, 32], strides = [1, 1]} : vector<2x64xf32> to vector<2x32xf32>
    %323 = vector.extract_strided_slice %311 {offsets = [0, 64], sizes = [2, 32], strides = [1, 1]} : vector<2x96xf32> to vector<2x32xf32>
    %324 = vector.extract_strided_slice %312 {offsets = [0, 64], sizes = [2, 32], strides = [1, 1]} : vector<2x96xf32> to vector<2x32xf32>
    %325 = arith.addf %324, %7 : vector<2x32xf32>
    %326 = arith.mulf %321, %325 : vector<2x32xf32>
    %327 = arith.addf %323, %326 : vector<2x32xf32>
    %328 = math.tanh %327 : vector<2x32xf32>
    %cst_91 = arith.constant 1.000000e+00 : f32
    %329 = vector.broadcast %cst_91 : f32 to vector<2x32xf32>
    %330 = arith.subf %329, %322 : vector<2x32xf32>
    %331 = arith.mulf %330, %328 : vector<2x32xf32>
    %332 = arith.mulf %322, %274 : vector<2x32xf32>
    %333 = arith.addf %331, %332 : vector<2x32xf32>
    %334 = arith.index_cast %c5_i32 : i32 to index
    %c0_92 = arith.constant 0 : index
    %c0_93 = arith.constant 0 : index
    %335 = vector.load %arg7[%334, %c0_92, %c0_93] : memref<8x2x32xf32, #tpu.memory_space<vmem>>, vector<1x2x32xf32>
    %336 = vector.shape_cast %335 : vector<1x2x32xf32> to vector<2x32xf32>
    %337 = vector.shape_cast %333 : vector<2x32xf32> to vector<1x2x32xf32>
    tpu.vector_store %arg7[%334, %c0_92, %c0_93], %337 {strides = array<i32>} : memref<8x2x32xf32, #tpu.memory_space<vmem>>, vector<1x2x32xf32>,
    %338 = arith.index_cast %308 : i32 to index
    %c0_94 = arith.constant 0 : index
    %c0_95 = arith.constant 0 : index
    %339 = vector.load %arg2[%338, %c0_94, %c0_95] : memref<8x2x96xf32, #tpu.memory_space<vmem>>, vector<1x2x96xf32>
    %340 = vector.shape_cast %339 : vector<1x2x96xf32> to vector<2x96xf32>
    %cst_96 = arith.constant dense<0.000000e+00> : vector<2x96xf32>
    %341 = tpu.matmul %303, %4, %cst_96 {dimension_numbers = #tpu.dot_dimension_numbers<[1], [0], [0], [1], [0, 0, 1, 1], [], []>} : vector<2x32xf32>, vector<32x96xf32>, vector<2x96xf32> -> vector<2x96xf32>
    %342 = vector.extract_strided_slice %340 {offsets = [0, 0], sizes = [2, 64], strides = [1, 1]} : vector<2x96xf32> to vector<2x64xf32>
    %343 = vector.extract_strided_slice %341 {offsets = [0, 0], sizes = [2, 64], strides = [1, 1]} : vector<2x96xf32> to vector<2x64xf32>
    %344 = arith.addf %342, %343 : vector<2x64xf32>
    %345 = arith.negf %344 : vector<2x64xf32>
    %346 = math.exp %345 : vector<2x64xf32>
    %cst_97 = arith.constant 1.000000e+00 : f32
    %347 = vector.broadcast %cst_97 : f32 to vector<2x64xf32>
    %348 = arith.addf %347, %346 : vector<2x64xf32>
    %349 = arith.divf %347, %348 : vector<2x64xf32>
    %350 = vector.extract_strided_slice %349 {offsets = [0, 0], sizes = [2, 32], strides = [1, 1]} : vector<2x64xf32> to vector<2x32xf32>
    %351 = vector.extract_strided_slice %349 {offsets = [0, 32], sizes = [2, 32], strides = [1, 1]} : vector<2x64xf32> to vector<2x32xf32>
    %352 = vector.extract_strided_slice %340 {offsets = [0, 64], sizes = [2, 32], strides = [1, 1]} : vector<2x96xf32> to vector<2x32xf32>
    %353 = vector.extract_strided_slice %341 {offsets = [0, 64], sizes = [2, 32], strides = [1, 1]} : vector<2x96xf32> to vector<2x32xf32>
    %354 = arith.addf %353, %10 : vector<2x32xf32>
    %355 = arith.mulf %350, %354 : vector<2x32xf32>
    %356 = arith.addf %352, %355 : vector<2x32xf32>
    %357 = math.tanh %356 : vector<2x32xf32>
    %cst_98 = arith.constant 1.000000e+00 : f32
    %358 = vector.broadcast %cst_98 : f32 to vector<2x32xf32>
    %359 = arith.subf %358, %351 : vector<2x32xf32>
    %360 = arith.mulf %359, %357 : vector<2x32xf32>
    %361 = arith.mulf %351, %303 : vector<2x32xf32>
    %362 = arith.addf %360, %361 : vector<2x32xf32>
    %363 = arith.index_cast %308 : i32 to index
    %c0_99 = arith.constant 0 : index
    %c0_100 = arith.constant 0 : index
    %364 = vector.load %arg8[%363, %c0_99, %c0_100] : memref<8x2x32xf32, #tpu.memory_space<vmem>>, vector<1x2x32xf32>
    %365 = vector.shape_cast %364 : vector<1x2x32xf32> to vector<2x32xf32>
    %366 = vector.shape_cast %362 : vector<2x32xf32> to vector<1x2x32xf32>
    tpu.vector_store %arg8[%363, %c0_99, %c0_100], %366 {strides = array<i32>} : memref<8x2x32xf32, #tpu.memory_space<vmem>>, vector<1x2x32xf32>,
    %c6_i32 = arith.constant 6 : i32
    %c7_i32_101 = arith.constant 7 : i32
    %367 = arith.subi %c7_i32_101, %c6_i32 : i32
    %368 = arith.index_cast %c6_i32 : i32 to index
    %c0_102 = arith.constant 0 : index
    %c0_103 = arith.constant 0 : index
    %369 = vector.load %arg1[%368, %c0_102, %c0_103] : memref<8x2x96xf32, #tpu.memory_space<vmem>>, vector<1x2x96xf32>
    %370 = vector.shape_cast %369 : vector<1x2x96xf32> to vector<2x96xf32>
    %cst_104 = arith.constant dense<0.000000e+00> : vector<2x96xf32>
    %371 = tpu.matmul %333, %3, %cst_104 {dimension_numbers = #tpu.dot_dimension_numbers<[1], [0], [0], [1], [0, 0, 1, 1], [], []>} : vector<2x32xf32>, vector<32x96xf32>, vector<2x96xf32> -> vector<2x96xf32>
    %372 = vector.extract_strided_slice %370 {offsets = [0, 0], sizes = [2, 64], strides = [1, 1]} : vector<2x96xf32> to vector<2x64xf32>
    %373 = vector.extract_strided_slice %371 {offsets = [0, 0], sizes = [2, 64], strides = [1, 1]} : vector<2x96xf32> to vector<2x64xf32>
    %374 = arith.addf %372, %373 : vector<2x64xf32>
    %375 = arith.negf %374 : vector<2x64xf32>
    %376 = math.exp %375 : vector<2x64xf32>
    %cst_105 = arith.constant 1.000000e+00 : f32
    %377 = vector.broadcast %cst_105 : f32 to vector<2x64xf32>
    %378 = arith.addf %377, %376 : vector<2x64xf32>
    %379 = arith.divf %377, %378 : vector<2x64xf32>
    %380 = vector.extract_strided_slice %379 {offsets = [0, 0], sizes = [2, 32], strides = [1, 1]} : vector<2x64xf32> to vector<2x32xf32>
    %381 = vector.extract_strided_slice %379 {offsets = [0, 32], sizes = [2, 32], strides = [1, 1]} : vector<2x64xf32> to vector<2x32xf32>
    %382 = vector.extract_strided_slice %370 {offsets = [0, 64], sizes = [2, 32], strides = [1, 1]} : vector<2x96xf32> to vector<2x32xf32>
    %383 = vector.extract_strided_slice %371 {offsets = [0, 64], sizes = [2, 32], strides = [1, 1]} : vector<2x96xf32> to vector<2x32xf32>
    %384 = arith.addf %383, %7 : vector<2x32xf32>
    %385 = arith.mulf %380, %384 : vector<2x32xf32>
    %386 = arith.addf %382, %385 : vector<2x32xf32>
    %387 = math.tanh %386 : vector<2x32xf32>
    %cst_106 = arith.constant 1.000000e+00 : f32
    %388 = vector.broadcast %cst_106 : f32 to vector<2x32xf32>
    %389 = arith.subf %388, %381 : vector<2x32xf32>
    %390 = arith.mulf %389, %387 : vector<2x32xf32>
    %391 = arith.mulf %381, %333 : vector<2x32xf32>
    %392 = arith.addf %390, %391 : vector<2x32xf32>
    %393 = arith.index_cast %c6_i32 : i32 to index
    %c0_107 = arith.constant 0 : index
    %c0_108 = arith.constant 0 : index
    %394 = vector.load %arg7[%393, %c0_107, %c0_108] : memref<8x2x32xf32, #tpu.memory_space<vmem>>, vector<1x2x32xf32>
    %395 = vector.shape_cast %394 : vector<1x2x32xf32> to vector<2x32xf32>
    %396 = vector.shape_cast %392 : vector<2x32xf32> to vector<1x2x32xf32>
    tpu.vector_store %arg7[%393, %c0_107, %c0_108], %396 {strides = array<i32>} : memref<8x2x32xf32, #tpu.memory_space<vmem>>, vector<1x2x32xf32>,
    %397 = arith.index_cast %367 : i32 to index
    %c0_109 = arith.constant 0 : index
    %c0_110 = arith.constant 0 : index
    %398 = vector.load %arg2[%397, %c0_109, %c0_110] : memref<8x2x96xf32, #tpu.memory_space<vmem>>, vector<1x2x96xf32>
    %399 = vector.shape_cast %398 : vector<1x2x96xf32> to vector<2x96xf32>
    %cst_111 = arith.constant dense<0.000000e+00> : vector<2x96xf32>
    %400 = tpu.matmul %362, %4, %cst_111 {dimension_numbers = #tpu.dot_dimension_numbers<[1], [0], [0], [1], [0, 0, 1, 1], [], []>} : vector<2x32xf32>, vector<32x96xf32>, vector<2x96xf32> -> vector<2x96xf32>
    %401 = vector.extract_strided_slice %399 {offsets = [0, 0], sizes = [2, 64], strides = [1, 1]} : vector<2x96xf32> to vector<2x64xf32>
    %402 = vector.extract_strided_slice %400 {offsets = [0, 0], sizes = [2, 64], strides = [1, 1]} : vector<2x96xf32> to vector<2x64xf32>
    %403 = arith.addf %401, %402 : vector<2x64xf32>
    %404 = arith.negf %403 : vector<2x64xf32>
    %405 = math.exp %404 : vector<2x64xf32>
    %cst_112 = arith.constant 1.000000e+00 : f32
    %406 = vector.broadcast %cst_112 : f32 to vector<2x64xf32>
    %407 = arith.addf %406, %405 : vector<2x64xf32>
    %408 = arith.divf %406, %407 : vector<2x64xf32>
    %409 = vector.extract_strided_slice %408 {offsets = [0, 0], sizes = [2, 32], strides = [1, 1]} : vector<2x64xf32> to vector<2x32xf32>
    %410 = vector.extract_strided_slice %408 {offsets = [0, 32], sizes = [2, 32], strides = [1, 1]} : vector<2x64xf32> to vector<2x32xf32>
    %411 = vector.extract_strided_slice %399 {offsets = [0, 64], sizes = [2, 32], strides = [1, 1]} : vector<2x96xf32> to vector<2x32xf32>
    %412 = vector.extract_strided_slice %400 {offsets = [0, 64], sizes = [2, 32], strides = [1, 1]} : vector<2x96xf32> to vector<2x32xf32>
    %413 = arith.addf %412, %10 : vector<2x32xf32>
    %414 = arith.mulf %409, %413 : vector<2x32xf32>
    %415 = arith.addf %411, %414 : vector<2x32xf32>
    %416 = math.tanh %415 : vector<2x32xf32>
    %cst_113 = arith.constant 1.000000e+00 : f32
    %417 = vector.broadcast %cst_113 : f32 to vector<2x32xf32>
    %418 = arith.subf %417, %410 : vector<2x32xf32>
    %419 = arith.mulf %418, %416 : vector<2x32xf32>
    %420 = arith.mulf %410, %362 : vector<2x32xf32>
    %421 = arith.addf %419, %420 : vector<2x32xf32>
    %422 = arith.index_cast %367 : i32 to index
    %c0_114 = arith.constant 0 : index
    %c0_115 = arith.constant 0 : index
    %423 = vector.load %arg8[%422, %c0_114, %c0_115] : memref<8x2x32xf32, #tpu.memory_space<vmem>>, vector<1x2x32xf32>
    %424 = vector.shape_cast %423 : vector<1x2x32xf32> to vector<2x32xf32>
    %425 = vector.shape_cast %421 : vector<2x32xf32> to vector<1x2x32xf32>
    tpu.vector_store %arg8[%422, %c0_114, %c0_115], %425 {strides = array<i32>} : memref<8x2x32xf32, #tpu.memory_space<vmem>>, vector<1x2x32xf32>,
    %c7_i32_116 = arith.constant 7 : i32
    %c7_i32_117 = arith.constant 7 : i32
    %426 = arith.subi %c7_i32_117, %c7_i32_116 : i32
    %427 = arith.index_cast %c7_i32_116 : i32 to index
    %c0_118 = arith.constant 0 : index
    %c0_119 = arith.constant 0 : index
    %428 = vector.load %arg1[%427, %c0_118, %c0_119] : memref<8x2x96xf32, #tpu.memory_space<vmem>>, vector<1x2x96xf32>
    %429 = vector.shape_cast %428 : vector<1x2x96xf32> to vector<2x96xf32>
    %cst_120 = arith.constant dense<0.000000e+00> : vector<2x96xf32>
    %430 = tpu.matmul %392, %3, %cst_120 {dimension_numbers = #tpu.dot_dimension_numbers<[1], [0], [0], [1], [0, 0, 1, 1], [], []>} : vector<2x32xf32>, vector<32x96xf32>, vector<2x96xf32> -> vector<2x96xf32>
    %431 = vector.extract_strided_slice %429 {offsets = [0, 0], sizes = [2, 64], strides = [1, 1]} : vector<2x96xf32> to vector<2x64xf32>
    %432 = vector.extract_strided_slice %430 {offsets = [0, 0], sizes = [2, 64], strides = [1, 1]} : vector<2x96xf32> to vector<2x64xf32>
    %433 = arith.addf %431, %432 : vector<2x64xf32>
    %434 = arith.negf %433 : vector<2x64xf32>
    %435 = math.exp %434 : vector<2x64xf32>
    %cst_121 = arith.constant 1.000000e+00 : f32
    %436 = vector.broadcast %cst_121 : f32 to vector<2x64xf32>
    %437 = arith.addf %436, %435 : vector<2x64xf32>
    %438 = arith.divf %436, %437 : vector<2x64xf32>
    %439 = vector.extract_strided_slice %438 {offsets = [0, 0], sizes = [2, 32], strides = [1, 1]} : vector<2x64xf32> to vector<2x32xf32>
    %440 = vector.extract_strided_slice %438 {offsets = [0, 32], sizes = [2, 32], strides = [1, 1]} : vector<2x64xf32> to vector<2x32xf32>
    %441 = vector.extract_strided_slice %429 {offsets = [0, 64], sizes = [2, 32], strides = [1, 1]} : vector<2x96xf32> to vector<2x32xf32>
    %442 = vector.extract_strided_slice %430 {offsets = [0, 64], sizes = [2, 32], strides = [1, 1]} : vector<2x96xf32> to vector<2x32xf32>
    %443 = arith.addf %442, %7 : vector<2x32xf32>
    %444 = arith.mulf %439, %443 : vector<2x32xf32>
    %445 = arith.addf %441, %444 : vector<2x32xf32>
    %446 = math.tanh %445 : vector<2x32xf32>
    %cst_122 = arith.constant 1.000000e+00 : f32
    %447 = vector.broadcast %cst_122 : f32 to vector<2x32xf32>
    %448 = arith.subf %447, %440 : vector<2x32xf32>
    %449 = arith.mulf %448, %446 : vector<2x32xf32>
    %450 = arith.mulf %440, %392 : vector<2x32xf32>
    %451 = arith.addf %449, %450 : vector<2x32xf32>
    %452 = arith.index_cast %c7_i32_116 : i32 to index
    %c0_123 = arith.constant 0 : index
    %c0_124 = arith.constant 0 : index
    %453 = vector.load %arg7[%452, %c0_123, %c0_124] : memref<8x2x32xf32, #tpu.memory_space<vmem>>, vector<1x2x32xf32>
    %454 = vector.shape_cast %453 : vector<1x2x32xf32> to vector<2x32xf32>
    %455 = vector.shape_cast %451 : vector<2x32xf32> to vector<1x2x32xf32>
    tpu.vector_store %arg7[%452, %c0_123, %c0_124], %455 {strides = array<i32>} : memref<8x2x32xf32, #tpu.memory_space<vmem>>, vector<1x2x32xf32>,
    %456 = arith.index_cast %426 : i32 to index
    %c0_125 = arith.constant 0 : index
    %c0_126 = arith.constant 0 : index
    %457 = vector.load %arg2[%456, %c0_125, %c0_126] : memref<8x2x96xf32, #tpu.memory_space<vmem>>, vector<1x2x96xf32>
    %458 = vector.shape_cast %457 : vector<1x2x96xf32> to vector<2x96xf32>
    %cst_127 = arith.constant dense<0.000000e+00> : vector<2x96xf32>
    %459 = tpu.matmul %421, %4, %cst_127 {dimension_numbers = #tpu.dot_dimension_numbers<[1], [0], [0], [1], [0, 0, 1, 1], [], []>} : vector<2x32xf32>, vector<32x96xf32>, vector<2x96xf32> -> vector<2x96xf32>
    %460 = vector.extract_strided_slice %458 {offsets = [0, 0], sizes = [2, 64], strides = [1, 1]} : vector<2x96xf32> to vector<2x64xf32>
    %461 = vector.extract_strided_slice %459 {offsets = [0, 0], sizes = [2, 64], strides = [1, 1]} : vector<2x96xf32> to vector<2x64xf32>
    %462 = arith.addf %460, %461 : vector<2x64xf32>
    %463 = arith.negf %462 : vector<2x64xf32>
    %464 = math.exp %463 : vector<2x64xf32>
    %cst_128 = arith.constant 1.000000e+00 : f32
    %465 = vector.broadcast %cst_128 : f32 to vector<2x64xf32>
    %466 = arith.addf %465, %464 : vector<2x64xf32>
    %467 = arith.divf %465, %466 : vector<2x64xf32>
    %468 = vector.extract_strided_slice %467 {offsets = [0, 0], sizes = [2, 32], strides = [1, 1]} : vector<2x64xf32> to vector<2x32xf32>
    %469 = vector.extract_strided_slice %467 {offsets = [0, 32], sizes = [2, 32], strides = [1, 1]} : vector<2x64xf32> to vector<2x32xf32>
    %470 = vector.extract_strided_slice %458 {offsets = [0, 64], sizes = [2, 32], strides = [1, 1]} : vector<2x96xf32> to vector<2x32xf32>
    %471 = vector.extract_strided_slice %459 {offsets = [0, 64], sizes = [2, 32], strides = [1, 1]} : vector<2x96xf32> to vector<2x32xf32>
    %472 = arith.addf %471, %10 : vector<2x32xf32>
    %473 = arith.mulf %468, %472 : vector<2x32xf32>
    %474 = arith.addf %470, %473 : vector<2x32xf32>
    %475 = math.tanh %474 : vector<2x32xf32>
    %cst_129 = arith.constant 1.000000e+00 : f32
    %476 = vector.broadcast %cst_129 : f32 to vector<2x32xf32>
    %477 = arith.subf %476, %469 : vector<2x32xf32>
    %478 = arith.mulf %477, %475 : vector<2x32xf32>
    %479 = arith.mulf %469, %421 : vector<2x32xf32>
    %480 = arith.addf %478, %479 : vector<2x32xf32>
    %481 = arith.index_cast %426 : i32 to index
    %c0_130 = arith.constant 0 : index
    %c0_131 = arith.constant 0 : index
    %482 = vector.load %arg8[%481, %c0_130, %c0_131] : memref<8x2x32xf32, #tpu.memory_space<vmem>>, vector<1x2x32xf32>
    %483 = vector.shape_cast %482 : vector<1x2x32xf32> to vector<2x32xf32>
    %484 = vector.shape_cast %480 : vector<2x32xf32> to vector<1x2x32xf32>
    tpu.vector_store %arg8[%481, %c0_130, %c0_131], %484 {strides = array<i32>} : memref<8x2x32xf32, #tpu.memory_space<vmem>>, vector<1x2x32xf32>,
    %c8_i32 = arith.constant 8 : i32
    %c0_132 = arith.constant 0 : index
    %c0_133 = arith.constant 0 : index
    %485 = vector.load %arg9[%c0_132, %c0_133] : memref<2x32xf32, #tpu.memory_space<vmem>>, vector<2x32xf32>
    tpu.vector_store %arg9[%c0_132, %c0_133], %451 {strides = array<i32>} : memref<2x32xf32, #tpu.memory_space<vmem>>, vector<2x32xf32>,
    %c0_134 = arith.constant 0 : index
    %c0_135 = arith.constant 0 : index
    %486 = vector.load %arg10[%c0_134, %c0_135] : memref<2x32xf32, #tpu.memory_space<vmem>>, vector<2x32xf32>
    tpu.vector_store %arg10[%c0_134, %c0_135], %480 {strides = array<i32>} : memref<2x32xf32, #tpu.memory_space<vmem>>, vector<2x32xf32>,
    return
  }
  func.func @transform_0(%arg0: i32) -> (i32, i32, i32) {
    %c0_i32 = arith.constant 0 : i32
    %c0_i32_0 = arith.constant 0 : i32
    %c0_i32_1 = arith.constant 0 : i32
    return %arg0, %c0_i32, %c0_i32_0 : i32, i32, i32
  }
  func.func @transform_1(%arg0: i32) -> (i32, i32, i32) {
    %c0_i32 = arith.constant 0 : i32
    %0 = arith.subi %c0_i32, %arg0 : i32
    %c0_i32_0 = arith.constant 0 : i32
    %c0_i32_1 = arith.constant 0 : i32
    %c0_i32_2 = arith.constant 0 : i32
    return %0, %c0_i32_0, %c0_i32_1 : i32, i32, i32
  }
  func.func @transform_2(%arg0: i32) -> (i32, i32) {
    %c0_i32 = arith.constant 0 : i32
    %c0_i32_0 = arith.constant 0 : i32
    %c0_i32_1 = arith.constant 0 : i32
    return %c0_i32, %c0_i32_0 : i32, i32
  }
  func.func @transform_3(%arg0: i32) -> (i32, i32) {
    %c0_i32 = arith.constant 0 : i32
    %c0_i32_0 = arith.constant 0 : i32
    %c0_i32_1 = arith.constant 0 : i32
    return %c0_i32, %c0_i32_0 : i32, i32
  }
  func.func @transform_4(%arg0: i32) -> (i32, i32) {
    %c0_i32 = arith.constant 0 : i32
    %c0_i32_0 = arith.constant 0 : i32
    %c0_i32_1 = arith.constant 0 : i32
    return %c0_i32, %c0_i32_0 : i32, i32
  }
  func.func @transform_5(%arg0: i32) -> (i32, i32) {
    %c0_i32 = arith.constant 0 : i32
    %c0_i32_0 = arith.constant 0 : i32
    %c0_i32_1 = arith.constant 0 : i32
    return %c0_i32, %c0_i32_0 : i32, i32
  }
  func.func @transform_6(%arg0: i32) -> (i32, i32, i32) {
    %c0_i32 = arith.constant 0 : i32
    %c0_i32_0 = arith.constant 0 : i32
    %c0_i32_1 = arith.constant 0 : i32
    return %arg0, %c0_i32, %c0_i32_0 : i32, i32, i32
  }
  func.func @transform_7(%arg0: i32) -> (i32, i32, i32) {
    %c0_i32 = arith.constant 0 : i32
    %0 = arith.subi %c0_i32, %arg0 : i32
    %c0_i32_0 = arith.constant 0 : i32
    %c0_i32_1 = arith.constant 0 : i32
    %c0_i32_2 = arith.constant 0 : i32
    return %0, %c0_i32_0, %c0_i32_1 : i32, i32, i32
  }
}

module attributes {stable_mosaic.version = 11 : i64} {
  func.func @_gru_bidir_kernel(%arg0: i32, %arg1: memref<8x2x96xf32, #tpu.memory_space<vmem>>, %arg2: memref<8x2x96xf32, #tpu.memory_space<vmem>>, %arg3: memref<32x96xf32, #tpu.memory_space<vmem>>, %arg4: memref<32x96xf32, #tpu.memory_space<vmem>>, %arg5: memref<1x32xf32, #tpu.memory_space<vmem>>, %arg6: memref<1x32xf32, #tpu.memory_space<vmem>>, %arg7: memref<32x32xf32, #tpu.memory_space<vmem>>, %arg8: memref<32x32xf32, #tpu.memory_space<vmem>>, %arg9: memref<1x32xf32, #tpu.memory_space<vmem>>, %arg10: memref<32x32xf32, #tpu.memory_space<vmem>>, %arg11: memref<1x32xf32, #tpu.memory_space<vmem>>, %arg12: memref<8x2x32xf32, #tpu.memory_space<vmem>>, %arg13: memref<8x2x32xf32, #tpu.memory_space<vmem>>, %arg14: memref<2x32xf32, #tpu.memory_space<vmem>>, %arg15: memref<2x32xf32, #tpu.memory_space<vmem>>, %arg16: memref<2x32xf32, #tpu.memory_space<vmem>>) attributes {dimension_semantics = [#tpu.dimension_semantics<arbitrary>], iteration_bounds = array<i64: 1>, scalar_prefetch = 0 : i64, scratch_operands = 2 : i64, tpu.core_type = #tpu.core_type<tc>, window_params = [{transform_indices = @transform_0, window_bounds = array<i64: 8, 2, 96>}, {transform_indices = @transform_1, window_bounds = array<i64: 8, 2, 96>}, {pipeline_mode = #tpu.pipeline_mode<synchronous>, transform_indices = @transform_2, window_bounds = array<i64: 32, 96>}, {pipeline_mode = #tpu.pipeline_mode<synchronous>, transform_indices = @transform_3, window_bounds = array<i64: 32, 96>}, {pipeline_mode = #tpu.pipeline_mode<synchronous>, transform_indices = @transform_4, window_bounds = array<i64: 1, 32>}, {pipeline_mode = #tpu.pipeline_mode<synchronous>, transform_indices = @transform_5, window_bounds = array<i64: 1, 32>}, {pipeline_mode = #tpu.pipeline_mode<synchronous>, transform_indices = @transform_6, window_bounds = array<i64: 32, 32>}, {pipeline_mode = #tpu.pipeline_mode<synchronous>, transform_indices = @transform_7, window_bounds = array<i64: 32, 32>}, {pipeline_mode = #tpu.pipeline_mode<synchronous>, transform_indices = @transform_8, window_bounds = array<i64: 1, 32>}, {pipeline_mode = #tpu.pipeline_mode<synchronous>, transform_indices = @transform_9, window_bounds = array<i64: 32, 32>}, {pipeline_mode = #tpu.pipeline_mode<synchronous>, transform_indices = @transform_10, window_bounds = array<i64: 1, 32>}, {transform_indices = @transform_11, window_bounds = array<i64: 8, 2, 32>}, {transform_indices = @transform_12, window_bounds = array<i64: 8, 2, 32>}, {pipeline_mode = #tpu.pipeline_mode<synchronous>, transform_indices = @transform_13, window_bounds = array<i64: 2, 32>}]} {
    %c0_i32 = arith.constant 0 : i32
    %0 = arith.cmpi eq, %arg0, %c0_i32 : i32
    %1 = arith.extui %0 : i1 to i32
    %c0_i32_0 = arith.constant 0 : i32
    %2 = arith.cmpi ne, %1, %c0_i32_0 : i32
    scf.if %2 {
      %cst_138 = arith.constant 0.000000e+00 : f32
      %490 = vector.broadcast %cst_138 : f32 to vector<2x32xf32>
      %c0_139 = arith.constant 0 : index
      %c0_140 = arith.constant 0 : index
      %491 = vector.load %arg15[%c0_139, %c0_140] : memref<2x32xf32, #tpu.memory_space<vmem>>, vector<2x32xf32>
      tpu.vector_store %arg15[%c0_139, %c0_140], %490 {strides = array<i32>} : memref<2x32xf32, #tpu.memory_space<vmem>>, vector<2x32xf32>,
      %cst_141 = arith.constant 0.000000e+00 : f32
      %492 = vector.broadcast %cst_141 : f32 to vector<2x32xf32>
      %c0_142 = arith.constant 0 : index
      %c0_143 = arith.constant 0 : index
      %493 = vector.load %arg16[%c0_142, %c0_143] : memref<2x32xf32, #tpu.memory_space<vmem>>, vector<2x32xf32>
      tpu.vector_store %arg16[%c0_142, %c0_143], %492 {strides = array<i32>} : memref<2x32xf32, #tpu.memory_space<vmem>>, vector<2x32xf32>,
    } else {
    }
    %c0 = arith.constant 0 : index
    %c0_1 = arith.constant 0 : index
    %3 = vector.load %arg3[%c0, %c0_1] : memref<32x96xf32, #tpu.memory_space<vmem>>, vector<32x96xf32>
    %c0_2 = arith.constant 0 : index
    %c0_3 = arith.constant 0 : index
    %4 = vector.load %arg4[%c0_2, %c0_3] : memref<32x96xf32, #tpu.memory_space<vmem>>, vector<32x96xf32>
    %c0_4 = arith.constant 0 : index
    %c0_5 = arith.constant 0 : index
    %5 = vector.load %arg5[%c0_4, %c0_5] : memref<1x32xf32, #tpu.memory_space<vmem>>, vector<1x32xf32>
    %6 = vector.shape_cast %5 : vector<1x32xf32> to vector<1x32xf32>
    %7 = vector.broadcast %6 : vector<1x32xf32> to vector<2x32xf32>
    %c0_6 = arith.constant 0 : index
    %c0_7 = arith.constant 0 : index
    %8 = vector.load %arg6[%c0_6, %c0_7] : memref<1x32xf32, #tpu.memory_space<vmem>>, vector<1x32xf32>
    %9 = vector.shape_cast %8 : vector<1x32xf32> to vector<1x32xf32>
    %10 = vector.broadcast %9 : vector<1x32xf32> to vector<2x32xf32>
    %c0_8 = arith.constant 0 : index
    %c0_9 = arith.constant 0 : index
    %11 = vector.load %arg15[%c0_8, %c0_9] : memref<2x32xf32, #tpu.memory_space<vmem>>, vector<2x32xf32>
    %c0_10 = arith.constant 0 : index
    %c0_11 = arith.constant 0 : index
    %12 = vector.load %arg16[%c0_10, %c0_11] : memref<2x32xf32, #tpu.memory_space<vmem>>, vector<2x32xf32>
    %c0_i32_12 = arith.constant 0 : i32
    %c7_i32 = arith.constant 7 : i32
    %13 = arith.subi %c7_i32, %c0_i32_12 : i32
    %14 = arith.index_cast %c0_i32_12 : i32 to index
    %c0_13 = arith.constant 0 : index
    %c0_14 = arith.constant 0 : index
    %15 = vector.load %arg1[%14, %c0_13, %c0_14] : memref<8x2x96xf32, #tpu.memory_space<vmem>>, vector<1x2x96xf32>
    %16 = vector.shape_cast %15 : vector<1x2x96xf32> to vector<2x96xf32>
    %cst = arith.constant dense<0.000000e+00> : vector<2x96xf32>
    %17 = tpu.matmul %11, %3, %cst {dimension_numbers = #tpu.dot_dimension_numbers<[1], [0], [0], [1], [0, 0, 1, 1], [], []>} : vector<2x32xf32>, vector<32x96xf32>, vector<2x96xf32> -> vector<2x96xf32>
    %18 = vector.extract_strided_slice %16 {offsets = [0, 0], sizes = [2, 64], strides = [1, 1]} : vector<2x96xf32> to vector<2x64xf32>
    %19 = vector.extract_strided_slice %17 {offsets = [0, 0], sizes = [2, 64], strides = [1, 1]} : vector<2x96xf32> to vector<2x64xf32>
    %20 = arith.addf %18, %19 : vector<2x64xf32>
    %21 = arith.negf %20 : vector<2x64xf32>
    %22 = math.exp %21 : vector<2x64xf32>
    %cst_15 = arith.constant 1.000000e+00 : f32
    %23 = vector.broadcast %cst_15 : f32 to vector<2x64xf32>
    %24 = arith.addf %23, %22 : vector<2x64xf32>
    %25 = arith.divf %23, %24 : vector<2x64xf32>
    %26 = vector.extract_strided_slice %25 {offsets = [0, 0], sizes = [2, 32], strides = [1, 1]} : vector<2x64xf32> to vector<2x32xf32>
    %27 = vector.extract_strided_slice %25 {offsets = [0, 32], sizes = [2, 32], strides = [1, 1]} : vector<2x64xf32> to vector<2x32xf32>
    %28 = vector.extract_strided_slice %16 {offsets = [0, 64], sizes = [2, 32], strides = [1, 1]} : vector<2x96xf32> to vector<2x32xf32>
    %29 = vector.extract_strided_slice %17 {offsets = [0, 64], sizes = [2, 32], strides = [1, 1]} : vector<2x96xf32> to vector<2x32xf32>
    %30 = arith.addf %29, %7 : vector<2x32xf32>
    %31 = arith.mulf %26, %30 : vector<2x32xf32>
    %32 = arith.addf %28, %31 : vector<2x32xf32>
    %33 = math.tanh %32 : vector<2x32xf32>
    %cst_16 = arith.constant 1.000000e+00 : f32
    %34 = vector.broadcast %cst_16 : f32 to vector<2x32xf32>
    %35 = arith.subf %34, %27 : vector<2x32xf32>
    %36 = arith.mulf %35, %33 : vector<2x32xf32>
    %37 = arith.mulf %27, %11 : vector<2x32xf32>
    %38 = arith.addf %36, %37 : vector<2x32xf32>
    %39 = arith.index_cast %c0_i32_12 : i32 to index
    %c0_17 = arith.constant 0 : index
    %c0_18 = arith.constant 0 : index
    %40 = vector.load %arg12[%39, %c0_17, %c0_18] : memref<8x2x32xf32, #tpu.memory_space<vmem>>, vector<1x2x32xf32>
    %41 = vector.shape_cast %40 : vector<1x2x32xf32> to vector<2x32xf32>
    %42 = vector.shape_cast %38 : vector<2x32xf32> to vector<1x2x32xf32>
    tpu.vector_store %arg12[%39, %c0_17, %c0_18], %42 {strides = array<i32>} : memref<8x2x32xf32, #tpu.memory_space<vmem>>, vector<1x2x32xf32>,
    %43 = arith.index_cast %13 : i32 to index
    %c0_19 = arith.constant 0 : index
    %c0_20 = arith.constant 0 : index
    %44 = vector.load %arg2[%43, %c0_19, %c0_20] : memref<8x2x96xf32, #tpu.memory_space<vmem>>, vector<1x2x96xf32>
    %45 = vector.shape_cast %44 : vector<1x2x96xf32> to vector<2x96xf32>
    %cst_21 = arith.constant dense<0.000000e+00> : vector<2x96xf32>
    %46 = tpu.matmul %12, %4, %cst_21 {dimension_numbers = #tpu.dot_dimension_numbers<[1], [0], [0], [1], [0, 0, 1, 1], [], []>} : vector<2x32xf32>, vector<32x96xf32>, vector<2x96xf32> -> vector<2x96xf32>
    %47 = vector.extract_strided_slice %45 {offsets = [0, 0], sizes = [2, 64], strides = [1, 1]} : vector<2x96xf32> to vector<2x64xf32>
    %48 = vector.extract_strided_slice %46 {offsets = [0, 0], sizes = [2, 64], strides = [1, 1]} : vector<2x96xf32> to vector<2x64xf32>
    %49 = arith.addf %47, %48 : vector<2x64xf32>
    %50 = arith.negf %49 : vector<2x64xf32>
    %51 = math.exp %50 : vector<2x64xf32>
    %cst_22 = arith.constant 1.000000e+00 : f32
    %52 = vector.broadcast %cst_22 : f32 to vector<2x64xf32>
    %53 = arith.addf %52, %51 : vector<2x64xf32>
    %54 = arith.divf %52, %53 : vector<2x64xf32>
    %55 = vector.extract_strided_slice %54 {offsets = [0, 0], sizes = [2, 32], strides = [1, 1]} : vector<2x64xf32> to vector<2x32xf32>
    %56 = vector.extract_strided_slice %54 {offsets = [0, 32], sizes = [2, 32], strides = [1, 1]} : vector<2x64xf32> to vector<2x32xf32>
    %57 = vector.extract_strided_slice %45 {offsets = [0, 64], sizes = [2, 32], strides = [1, 1]} : vector<2x96xf32> to vector<2x32xf32>
    %58 = vector.extract_strided_slice %46 {offsets = [0, 64], sizes = [2, 32], strides = [1, 1]} : vector<2x96xf32> to vector<2x32xf32>
    %59 = arith.addf %58, %10 : vector<2x32xf32>
    %60 = arith.mulf %55, %59 : vector<2x32xf32>
    %61 = arith.addf %57, %60 : vector<2x32xf32>
    %62 = math.tanh %61 : vector<2x32xf32>
    %cst_23 = arith.constant 1.000000e+00 : f32
    %63 = vector.broadcast %cst_23 : f32 to vector<2x32xf32>
    %64 = arith.subf %63, %56 : vector<2x32xf32>
    %65 = arith.mulf %64, %62 : vector<2x32xf32>
    %66 = arith.mulf %56, %12 : vector<2x32xf32>
    %67 = arith.addf %65, %66 : vector<2x32xf32>
    %68 = arith.index_cast %13 : i32 to index
    %c0_24 = arith.constant 0 : index
    %c0_25 = arith.constant 0 : index
    %69 = vector.load %arg13[%68, %c0_24, %c0_25] : memref<8x2x32xf32, #tpu.memory_space<vmem>>, vector<1x2x32xf32>
    %70 = vector.shape_cast %69 : vector<1x2x32xf32> to vector<2x32xf32>
    %71 = vector.shape_cast %67 : vector<2x32xf32> to vector<1x2x32xf32>
    tpu.vector_store %arg13[%68, %c0_24, %c0_25], %71 {strides = array<i32>} : memref<8x2x32xf32, #tpu.memory_space<vmem>>, vector<1x2x32xf32>,
    %c1_i32 = arith.constant 1 : i32
    %c7_i32_26 = arith.constant 7 : i32
    %72 = arith.subi %c7_i32_26, %c1_i32 : i32
    %73 = arith.index_cast %c1_i32 : i32 to index
    %c0_27 = arith.constant 0 : index
    %c0_28 = arith.constant 0 : index
    %74 = vector.load %arg1[%73, %c0_27, %c0_28] : memref<8x2x96xf32, #tpu.memory_space<vmem>>, vector<1x2x96xf32>
    %75 = vector.shape_cast %74 : vector<1x2x96xf32> to vector<2x96xf32>
    %cst_29 = arith.constant dense<0.000000e+00> : vector<2x96xf32>
    %76 = tpu.matmul %38, %3, %cst_29 {dimension_numbers = #tpu.dot_dimension_numbers<[1], [0], [0], [1], [0, 0, 1, 1], [], []>} : vector<2x32xf32>, vector<32x96xf32>, vector<2x96xf32> -> vector<2x96xf32>
    %77 = vector.extract_strided_slice %75 {offsets = [0, 0], sizes = [2, 64], strides = [1, 1]} : vector<2x96xf32> to vector<2x64xf32>
    %78 = vector.extract_strided_slice %76 {offsets = [0, 0], sizes = [2, 64], strides = [1, 1]} : vector<2x96xf32> to vector<2x64xf32>
    %79 = arith.addf %77, %78 : vector<2x64xf32>
    %80 = arith.negf %79 : vector<2x64xf32>
    %81 = math.exp %80 : vector<2x64xf32>
    %cst_30 = arith.constant 1.000000e+00 : f32
    %82 = vector.broadcast %cst_30 : f32 to vector<2x64xf32>
    %83 = arith.addf %82, %81 : vector<2x64xf32>
    %84 = arith.divf %82, %83 : vector<2x64xf32>
    %85 = vector.extract_strided_slice %84 {offsets = [0, 0], sizes = [2, 32], strides = [1, 1]} : vector<2x64xf32> to vector<2x32xf32>
    %86 = vector.extract_strided_slice %84 {offsets = [0, 32], sizes = [2, 32], strides = [1, 1]} : vector<2x64xf32> to vector<2x32xf32>
    %87 = vector.extract_strided_slice %75 {offsets = [0, 64], sizes = [2, 32], strides = [1, 1]} : vector<2x96xf32> to vector<2x32xf32>
    %88 = vector.extract_strided_slice %76 {offsets = [0, 64], sizes = [2, 32], strides = [1, 1]} : vector<2x96xf32> to vector<2x32xf32>
    %89 = arith.addf %88, %7 : vector<2x32xf32>
    %90 = arith.mulf %85, %89 : vector<2x32xf32>
    %91 = arith.addf %87, %90 : vector<2x32xf32>
    %92 = math.tanh %91 : vector<2x32xf32>
    %cst_31 = arith.constant 1.000000e+00 : f32
    %93 = vector.broadcast %cst_31 : f32 to vector<2x32xf32>
    %94 = arith.subf %93, %86 : vector<2x32xf32>
    %95 = arith.mulf %94, %92 : vector<2x32xf32>
    %96 = arith.mulf %86, %38 : vector<2x32xf32>
    %97 = arith.addf %95, %96 : vector<2x32xf32>
    %98 = arith.index_cast %c1_i32 : i32 to index
    %c0_32 = arith.constant 0 : index
    %c0_33 = arith.constant 0 : index
    %99 = vector.load %arg12[%98, %c0_32, %c0_33] : memref<8x2x32xf32, #tpu.memory_space<vmem>>, vector<1x2x32xf32>
    %100 = vector.shape_cast %99 : vector<1x2x32xf32> to vector<2x32xf32>
    %101 = vector.shape_cast %97 : vector<2x32xf32> to vector<1x2x32xf32>
    tpu.vector_store %arg12[%98, %c0_32, %c0_33], %101 {strides = array<i32>} : memref<8x2x32xf32, #tpu.memory_space<vmem>>, vector<1x2x32xf32>,
    %102 = arith.index_cast %72 : i32 to index
    %c0_34 = arith.constant 0 : index
    %c0_35 = arith.constant 0 : index
    %103 = vector.load %arg2[%102, %c0_34, %c0_35] : memref<8x2x96xf32, #tpu.memory_space<vmem>>, vector<1x2x96xf32>
    %104 = vector.shape_cast %103 : vector<1x2x96xf32> to vector<2x96xf32>
    %cst_36 = arith.constant dense<0.000000e+00> : vector<2x96xf32>
    %105 = tpu.matmul %67, %4, %cst_36 {dimension_numbers = #tpu.dot_dimension_numbers<[1], [0], [0], [1], [0, 0, 1, 1], [], []>} : vector<2x32xf32>, vector<32x96xf32>, vector<2x96xf32> -> vector<2x96xf32>
    %106 = vector.extract_strided_slice %104 {offsets = [0, 0], sizes = [2, 64], strides = [1, 1]} : vector<2x96xf32> to vector<2x64xf32>
    %107 = vector.extract_strided_slice %105 {offsets = [0, 0], sizes = [2, 64], strides = [1, 1]} : vector<2x96xf32> to vector<2x64xf32>
    %108 = arith.addf %106, %107 : vector<2x64xf32>
    %109 = arith.negf %108 : vector<2x64xf32>
    %110 = math.exp %109 : vector<2x64xf32>
    %cst_37 = arith.constant 1.000000e+00 : f32
    %111 = vector.broadcast %cst_37 : f32 to vector<2x64xf32>
    %112 = arith.addf %111, %110 : vector<2x64xf32>
    %113 = arith.divf %111, %112 : vector<2x64xf32>
    %114 = vector.extract_strided_slice %113 {offsets = [0, 0], sizes = [2, 32], strides = [1, 1]} : vector<2x64xf32> to vector<2x32xf32>
    %115 = vector.extract_strided_slice %113 {offsets = [0, 32], sizes = [2, 32], strides = [1, 1]} : vector<2x64xf32> to vector<2x32xf32>
    %116 = vector.extract_strided_slice %104 {offsets = [0, 64], sizes = [2, 32], strides = [1, 1]} : vector<2x96xf32> to vector<2x32xf32>
    %117 = vector.extract_strided_slice %105 {offsets = [0, 64], sizes = [2, 32], strides = [1, 1]} : vector<2x96xf32> to vector<2x32xf32>
    %118 = arith.addf %117, %10 : vector<2x32xf32>
    %119 = arith.mulf %114, %118 : vector<2x32xf32>
    %120 = arith.addf %116, %119 : vector<2x32xf32>
    %121 = math.tanh %120 : vector<2x32xf32>
    %cst_38 = arith.constant 1.000000e+00 : f32
    %122 = vector.broadcast %cst_38 : f32 to vector<2x32xf32>
    %123 = arith.subf %122, %115 : vector<2x32xf32>
    %124 = arith.mulf %123, %121 : vector<2x32xf32>
    %125 = arith.mulf %115, %67 : vector<2x32xf32>
    %126 = arith.addf %124, %125 : vector<2x32xf32>
    %127 = arith.index_cast %72 : i32 to index
    %c0_39 = arith.constant 0 : index
    %c0_40 = arith.constant 0 : index
    %128 = vector.load %arg13[%127, %c0_39, %c0_40] : memref<8x2x32xf32, #tpu.memory_space<vmem>>, vector<1x2x32xf32>
    %129 = vector.shape_cast %128 : vector<1x2x32xf32> to vector<2x32xf32>
    %130 = vector.shape_cast %126 : vector<2x32xf32> to vector<1x2x32xf32>
    tpu.vector_store %arg13[%127, %c0_39, %c0_40], %130 {strides = array<i32>} : memref<8x2x32xf32, #tpu.memory_space<vmem>>, vector<1x2x32xf32>,
    %c2_i32 = arith.constant 2 : i32
    %c7_i32_41 = arith.constant 7 : i32
    %131 = arith.subi %c7_i32_41, %c2_i32 : i32
    %132 = arith.index_cast %c2_i32 : i32 to index
    %c0_42 = arith.constant 0 : index
    %c0_43 = arith.constant 0 : index
    %133 = vector.load %arg1[%132, %c0_42, %c0_43] : memref<8x2x96xf32, #tpu.memory_space<vmem>>, vector<1x2x96xf32>
    %134 = vector.shape_cast %133 : vector<1x2x96xf32> to vector<2x96xf32>
    %cst_44 = arith.constant dense<0.000000e+00> : vector<2x96xf32>
    %135 = tpu.matmul %97, %3, %cst_44 {dimension_numbers = #tpu.dot_dimension_numbers<[1], [0], [0], [1], [0, 0, 1, 1], [], []>} : vector<2x32xf32>, vector<32x96xf32>, vector<2x96xf32> -> vector<2x96xf32>
    %136 = vector.extract_strided_slice %134 {offsets = [0, 0], sizes = [2, 64], strides = [1, 1]} : vector<2x96xf32> to vector<2x64xf32>
    %137 = vector.extract_strided_slice %135 {offsets = [0, 0], sizes = [2, 64], strides = [1, 1]} : vector<2x96xf32> to vector<2x64xf32>
    %138 = arith.addf %136, %137 : vector<2x64xf32>
    %139 = arith.negf %138 : vector<2x64xf32>
    %140 = math.exp %139 : vector<2x64xf32>
    %cst_45 = arith.constant 1.000000e+00 : f32
    %141 = vector.broadcast %cst_45 : f32 to vector<2x64xf32>
    %142 = arith.addf %141, %140 : vector<2x64xf32>
    %143 = arith.divf %141, %142 : vector<2x64xf32>
    %144 = vector.extract_strided_slice %143 {offsets = [0, 0], sizes = [2, 32], strides = [1, 1]} : vector<2x64xf32> to vector<2x32xf32>
    %145 = vector.extract_strided_slice %143 {offsets = [0, 32], sizes = [2, 32], strides = [1, 1]} : vector<2x64xf32> to vector<2x32xf32>
    %146 = vector.extract_strided_slice %134 {offsets = [0, 64], sizes = [2, 32], strides = [1, 1]} : vector<2x96xf32> to vector<2x32xf32>
    %147 = vector.extract_strided_slice %135 {offsets = [0, 64], sizes = [2, 32], strides = [1, 1]} : vector<2x96xf32> to vector<2x32xf32>
    %148 = arith.addf %147, %7 : vector<2x32xf32>
    %149 = arith.mulf %144, %148 : vector<2x32xf32>
    %150 = arith.addf %146, %149 : vector<2x32xf32>
    %151 = math.tanh %150 : vector<2x32xf32>
    %cst_46 = arith.constant 1.000000e+00 : f32
    %152 = vector.broadcast %cst_46 : f32 to vector<2x32xf32>
    %153 = arith.subf %152, %145 : vector<2x32xf32>
    %154 = arith.mulf %153, %151 : vector<2x32xf32>
    %155 = arith.mulf %145, %97 : vector<2x32xf32>
    %156 = arith.addf %154, %155 : vector<2x32xf32>
    %157 = arith.index_cast %c2_i32 : i32 to index
    %c0_47 = arith.constant 0 : index
    %c0_48 = arith.constant 0 : index
    %158 = vector.load %arg12[%157, %c0_47, %c0_48] : memref<8x2x32xf32, #tpu.memory_space<vmem>>, vector<1x2x32xf32>
    %159 = vector.shape_cast %158 : vector<1x2x32xf32> to vector<2x32xf32>
    %160 = vector.shape_cast %156 : vector<2x32xf32> to vector<1x2x32xf32>
    tpu.vector_store %arg12[%157, %c0_47, %c0_48], %160 {strides = array<i32>} : memref<8x2x32xf32, #tpu.memory_space<vmem>>, vector<1x2x32xf32>,
    %161 = arith.index_cast %131 : i32 to index
    %c0_49 = arith.constant 0 : index
    %c0_50 = arith.constant 0 : index
    %162 = vector.load %arg2[%161, %c0_49, %c0_50] : memref<8x2x96xf32, #tpu.memory_space<vmem>>, vector<1x2x96xf32>
    %163 = vector.shape_cast %162 : vector<1x2x96xf32> to vector<2x96xf32>
    %cst_51 = arith.constant dense<0.000000e+00> : vector<2x96xf32>
    %164 = tpu.matmul %126, %4, %cst_51 {dimension_numbers = #tpu.dot_dimension_numbers<[1], [0], [0], [1], [0, 0, 1, 1], [], []>} : vector<2x32xf32>, vector<32x96xf32>, vector<2x96xf32> -> vector<2x96xf32>
    %165 = vector.extract_strided_slice %163 {offsets = [0, 0], sizes = [2, 64], strides = [1, 1]} : vector<2x96xf32> to vector<2x64xf32>
    %166 = vector.extract_strided_slice %164 {offsets = [0, 0], sizes = [2, 64], strides = [1, 1]} : vector<2x96xf32> to vector<2x64xf32>
    %167 = arith.addf %165, %166 : vector<2x64xf32>
    %168 = arith.negf %167 : vector<2x64xf32>
    %169 = math.exp %168 : vector<2x64xf32>
    %cst_52 = arith.constant 1.000000e+00 : f32
    %170 = vector.broadcast %cst_52 : f32 to vector<2x64xf32>
    %171 = arith.addf %170, %169 : vector<2x64xf32>
    %172 = arith.divf %170, %171 : vector<2x64xf32>
    %173 = vector.extract_strided_slice %172 {offsets = [0, 0], sizes = [2, 32], strides = [1, 1]} : vector<2x64xf32> to vector<2x32xf32>
    %174 = vector.extract_strided_slice %172 {offsets = [0, 32], sizes = [2, 32], strides = [1, 1]} : vector<2x64xf32> to vector<2x32xf32>
    %175 = vector.extract_strided_slice %163 {offsets = [0, 64], sizes = [2, 32], strides = [1, 1]} : vector<2x96xf32> to vector<2x32xf32>
    %176 = vector.extract_strided_slice %164 {offsets = [0, 64], sizes = [2, 32], strides = [1, 1]} : vector<2x96xf32> to vector<2x32xf32>
    %177 = arith.addf %176, %10 : vector<2x32xf32>
    %178 = arith.mulf %173, %177 : vector<2x32xf32>
    %179 = arith.addf %175, %178 : vector<2x32xf32>
    %180 = math.tanh %179 : vector<2x32xf32>
    %cst_53 = arith.constant 1.000000e+00 : f32
    %181 = vector.broadcast %cst_53 : f32 to vector<2x32xf32>
    %182 = arith.subf %181, %174 : vector<2x32xf32>
    %183 = arith.mulf %182, %180 : vector<2x32xf32>
    %184 = arith.mulf %174, %126 : vector<2x32xf32>
    %185 = arith.addf %183, %184 : vector<2x32xf32>
    %186 = arith.index_cast %131 : i32 to index
    %c0_54 = arith.constant 0 : index
    %c0_55 = arith.constant 0 : index
    %187 = vector.load %arg13[%186, %c0_54, %c0_55] : memref<8x2x32xf32, #tpu.memory_space<vmem>>, vector<1x2x32xf32>
    %188 = vector.shape_cast %187 : vector<1x2x32xf32> to vector<2x32xf32>
    %189 = vector.shape_cast %185 : vector<2x32xf32> to vector<1x2x32xf32>
    tpu.vector_store %arg13[%186, %c0_54, %c0_55], %189 {strides = array<i32>} : memref<8x2x32xf32, #tpu.memory_space<vmem>>, vector<1x2x32xf32>,
    %c3_i32 = arith.constant 3 : i32
    %c7_i32_56 = arith.constant 7 : i32
    %190 = arith.subi %c7_i32_56, %c3_i32 : i32
    %191 = arith.index_cast %c3_i32 : i32 to index
    %c0_57 = arith.constant 0 : index
    %c0_58 = arith.constant 0 : index
    %192 = vector.load %arg1[%191, %c0_57, %c0_58] : memref<8x2x96xf32, #tpu.memory_space<vmem>>, vector<1x2x96xf32>
    %193 = vector.shape_cast %192 : vector<1x2x96xf32> to vector<2x96xf32>
    %cst_59 = arith.constant dense<0.000000e+00> : vector<2x96xf32>
    %194 = tpu.matmul %156, %3, %cst_59 {dimension_numbers = #tpu.dot_dimension_numbers<[1], [0], [0], [1], [0, 0, 1, 1], [], []>} : vector<2x32xf32>, vector<32x96xf32>, vector<2x96xf32> -> vector<2x96xf32>
    %195 = vector.extract_strided_slice %193 {offsets = [0, 0], sizes = [2, 64], strides = [1, 1]} : vector<2x96xf32> to vector<2x64xf32>
    %196 = vector.extract_strided_slice %194 {offsets = [0, 0], sizes = [2, 64], strides = [1, 1]} : vector<2x96xf32> to vector<2x64xf32>
    %197 = arith.addf %195, %196 : vector<2x64xf32>
    %198 = arith.negf %197 : vector<2x64xf32>
    %199 = math.exp %198 : vector<2x64xf32>
    %cst_60 = arith.constant 1.000000e+00 : f32
    %200 = vector.broadcast %cst_60 : f32 to vector<2x64xf32>
    %201 = arith.addf %200, %199 : vector<2x64xf32>
    %202 = arith.divf %200, %201 : vector<2x64xf32>
    %203 = vector.extract_strided_slice %202 {offsets = [0, 0], sizes = [2, 32], strides = [1, 1]} : vector<2x64xf32> to vector<2x32xf32>
    %204 = vector.extract_strided_slice %202 {offsets = [0, 32], sizes = [2, 32], strides = [1, 1]} : vector<2x64xf32> to vector<2x32xf32>
    %205 = vector.extract_strided_slice %193 {offsets = [0, 64], sizes = [2, 32], strides = [1, 1]} : vector<2x96xf32> to vector<2x32xf32>
    %206 = vector.extract_strided_slice %194 {offsets = [0, 64], sizes = [2, 32], strides = [1, 1]} : vector<2x96xf32> to vector<2x32xf32>
    %207 = arith.addf %206, %7 : vector<2x32xf32>
    %208 = arith.mulf %203, %207 : vector<2x32xf32>
    %209 = arith.addf %205, %208 : vector<2x32xf32>
    %210 = math.tanh %209 : vector<2x32xf32>
    %cst_61 = arith.constant 1.000000e+00 : f32
    %211 = vector.broadcast %cst_61 : f32 to vector<2x32xf32>
    %212 = arith.subf %211, %204 : vector<2x32xf32>
    %213 = arith.mulf %212, %210 : vector<2x32xf32>
    %214 = arith.mulf %204, %156 : vector<2x32xf32>
    %215 = arith.addf %213, %214 : vector<2x32xf32>
    %216 = arith.index_cast %c3_i32 : i32 to index
    %c0_62 = arith.constant 0 : index
    %c0_63 = arith.constant 0 : index
    %217 = vector.load %arg12[%216, %c0_62, %c0_63] : memref<8x2x32xf32, #tpu.memory_space<vmem>>, vector<1x2x32xf32>
    %218 = vector.shape_cast %217 : vector<1x2x32xf32> to vector<2x32xf32>
    %219 = vector.shape_cast %215 : vector<2x32xf32> to vector<1x2x32xf32>
    tpu.vector_store %arg12[%216, %c0_62, %c0_63], %219 {strides = array<i32>} : memref<8x2x32xf32, #tpu.memory_space<vmem>>, vector<1x2x32xf32>,
    %220 = arith.index_cast %190 : i32 to index
    %c0_64 = arith.constant 0 : index
    %c0_65 = arith.constant 0 : index
    %221 = vector.load %arg2[%220, %c0_64, %c0_65] : memref<8x2x96xf32, #tpu.memory_space<vmem>>, vector<1x2x96xf32>
    %222 = vector.shape_cast %221 : vector<1x2x96xf32> to vector<2x96xf32>
    %cst_66 = arith.constant dense<0.000000e+00> : vector<2x96xf32>
    %223 = tpu.matmul %185, %4, %cst_66 {dimension_numbers = #tpu.dot_dimension_numbers<[1], [0], [0], [1], [0, 0, 1, 1], [], []>} : vector<2x32xf32>, vector<32x96xf32>, vector<2x96xf32> -> vector<2x96xf32>
    %224 = vector.extract_strided_slice %222 {offsets = [0, 0], sizes = [2, 64], strides = [1, 1]} : vector<2x96xf32> to vector<2x64xf32>
    %225 = vector.extract_strided_slice %223 {offsets = [0, 0], sizes = [2, 64], strides = [1, 1]} : vector<2x96xf32> to vector<2x64xf32>
    %226 = arith.addf %224, %225 : vector<2x64xf32>
    %227 = arith.negf %226 : vector<2x64xf32>
    %228 = math.exp %227 : vector<2x64xf32>
    %cst_67 = arith.constant 1.000000e+00 : f32
    %229 = vector.broadcast %cst_67 : f32 to vector<2x64xf32>
    %230 = arith.addf %229, %228 : vector<2x64xf32>
    %231 = arith.divf %229, %230 : vector<2x64xf32>
    %232 = vector.extract_strided_slice %231 {offsets = [0, 0], sizes = [2, 32], strides = [1, 1]} : vector<2x64xf32> to vector<2x32xf32>
    %233 = vector.extract_strided_slice %231 {offsets = [0, 32], sizes = [2, 32], strides = [1, 1]} : vector<2x64xf32> to vector<2x32xf32>
    %234 = vector.extract_strided_slice %222 {offsets = [0, 64], sizes = [2, 32], strides = [1, 1]} : vector<2x96xf32> to vector<2x32xf32>
    %235 = vector.extract_strided_slice %223 {offsets = [0, 64], sizes = [2, 32], strides = [1, 1]} : vector<2x96xf32> to vector<2x32xf32>
    %236 = arith.addf %235, %10 : vector<2x32xf32>
    %237 = arith.mulf %232, %236 : vector<2x32xf32>
    %238 = arith.addf %234, %237 : vector<2x32xf32>
    %239 = math.tanh %238 : vector<2x32xf32>
    %cst_68 = arith.constant 1.000000e+00 : f32
    %240 = vector.broadcast %cst_68 : f32 to vector<2x32xf32>
    %241 = arith.subf %240, %233 : vector<2x32xf32>
    %242 = arith.mulf %241, %239 : vector<2x32xf32>
    %243 = arith.mulf %233, %185 : vector<2x32xf32>
    %244 = arith.addf %242, %243 : vector<2x32xf32>
    %245 = arith.index_cast %190 : i32 to index
    %c0_69 = arith.constant 0 : index
    %c0_70 = arith.constant 0 : index
    %246 = vector.load %arg13[%245, %c0_69, %c0_70] : memref<8x2x32xf32, #tpu.memory_space<vmem>>, vector<1x2x32xf32>
    %247 = vector.shape_cast %246 : vector<1x2x32xf32> to vector<2x32xf32>
    %248 = vector.shape_cast %244 : vector<2x32xf32> to vector<1x2x32xf32>
    tpu.vector_store %arg13[%245, %c0_69, %c0_70], %248 {strides = array<i32>} : memref<8x2x32xf32, #tpu.memory_space<vmem>>, vector<1x2x32xf32>,
    %c4_i32 = arith.constant 4 : i32
    %c7_i32_71 = arith.constant 7 : i32
    %249 = arith.subi %c7_i32_71, %c4_i32 : i32
    %250 = arith.index_cast %c4_i32 : i32 to index
    %c0_72 = arith.constant 0 : index
    %c0_73 = arith.constant 0 : index
    %251 = vector.load %arg1[%250, %c0_72, %c0_73] : memref<8x2x96xf32, #tpu.memory_space<vmem>>, vector<1x2x96xf32>
    %252 = vector.shape_cast %251 : vector<1x2x96xf32> to vector<2x96xf32>
    %cst_74 = arith.constant dense<0.000000e+00> : vector<2x96xf32>
    %253 = tpu.matmul %215, %3, %cst_74 {dimension_numbers = #tpu.dot_dimension_numbers<[1], [0], [0], [1], [0, 0, 1, 1], [], []>} : vector<2x32xf32>, vector<32x96xf32>, vector<2x96xf32> -> vector<2x96xf32>
    %254 = vector.extract_strided_slice %252 {offsets = [0, 0], sizes = [2, 64], strides = [1, 1]} : vector<2x96xf32> to vector<2x64xf32>
    %255 = vector.extract_strided_slice %253 {offsets = [0, 0], sizes = [2, 64], strides = [1, 1]} : vector<2x96xf32> to vector<2x64xf32>
    %256 = arith.addf %254, %255 : vector<2x64xf32>
    %257 = arith.negf %256 : vector<2x64xf32>
    %258 = math.exp %257 : vector<2x64xf32>
    %cst_75 = arith.constant 1.000000e+00 : f32
    %259 = vector.broadcast %cst_75 : f32 to vector<2x64xf32>
    %260 = arith.addf %259, %258 : vector<2x64xf32>
    %261 = arith.divf %259, %260 : vector<2x64xf32>
    %262 = vector.extract_strided_slice %261 {offsets = [0, 0], sizes = [2, 32], strides = [1, 1]} : vector<2x64xf32> to vector<2x32xf32>
    %263 = vector.extract_strided_slice %261 {offsets = [0, 32], sizes = [2, 32], strides = [1, 1]} : vector<2x64xf32> to vector<2x32xf32>
    %264 = vector.extract_strided_slice %252 {offsets = [0, 64], sizes = [2, 32], strides = [1, 1]} : vector<2x96xf32> to vector<2x32xf32>
    %265 = vector.extract_strided_slice %253 {offsets = [0, 64], sizes = [2, 32], strides = [1, 1]} : vector<2x96xf32> to vector<2x32xf32>
    %266 = arith.addf %265, %7 : vector<2x32xf32>
    %267 = arith.mulf %262, %266 : vector<2x32xf32>
    %268 = arith.addf %264, %267 : vector<2x32xf32>
    %269 = math.tanh %268 : vector<2x32xf32>
    %cst_76 = arith.constant 1.000000e+00 : f32
    %270 = vector.broadcast %cst_76 : f32 to vector<2x32xf32>
    %271 = arith.subf %270, %263 : vector<2x32xf32>
    %272 = arith.mulf %271, %269 : vector<2x32xf32>
    %273 = arith.mulf %263, %215 : vector<2x32xf32>
    %274 = arith.addf %272, %273 : vector<2x32xf32>
    %275 = arith.index_cast %c4_i32 : i32 to index
    %c0_77 = arith.constant 0 : index
    %c0_78 = arith.constant 0 : index
    %276 = vector.load %arg12[%275, %c0_77, %c0_78] : memref<8x2x32xf32, #tpu.memory_space<vmem>>, vector<1x2x32xf32>
    %277 = vector.shape_cast %276 : vector<1x2x32xf32> to vector<2x32xf32>
    %278 = vector.shape_cast %274 : vector<2x32xf32> to vector<1x2x32xf32>
    tpu.vector_store %arg12[%275, %c0_77, %c0_78], %278 {strides = array<i32>} : memref<8x2x32xf32, #tpu.memory_space<vmem>>, vector<1x2x32xf32>,
    %279 = arith.index_cast %249 : i32 to index
    %c0_79 = arith.constant 0 : index
    %c0_80 = arith.constant 0 : index
    %280 = vector.load %arg2[%279, %c0_79, %c0_80] : memref<8x2x96xf32, #tpu.memory_space<vmem>>, vector<1x2x96xf32>
    %281 = vector.shape_cast %280 : vector<1x2x96xf32> to vector<2x96xf32>
    %cst_81 = arith.constant dense<0.000000e+00> : vector<2x96xf32>
    %282 = tpu.matmul %244, %4, %cst_81 {dimension_numbers = #tpu.dot_dimension_numbers<[1], [0], [0], [1], [0, 0, 1, 1], [], []>} : vector<2x32xf32>, vector<32x96xf32>, vector<2x96xf32> -> vector<2x96xf32>
    %283 = vector.extract_strided_slice %281 {offsets = [0, 0], sizes = [2, 64], strides = [1, 1]} : vector<2x96xf32> to vector<2x64xf32>
    %284 = vector.extract_strided_slice %282 {offsets = [0, 0], sizes = [2, 64], strides = [1, 1]} : vector<2x96xf32> to vector<2x64xf32>
    %285 = arith.addf %283, %284 : vector<2x64xf32>
    %286 = arith.negf %285 : vector<2x64xf32>
    %287 = math.exp %286 : vector<2x64xf32>
    %cst_82 = arith.constant 1.000000e+00 : f32
    %288 = vector.broadcast %cst_82 : f32 to vector<2x64xf32>
    %289 = arith.addf %288, %287 : vector<2x64xf32>
    %290 = arith.divf %288, %289 : vector<2x64xf32>
    %291 = vector.extract_strided_slice %290 {offsets = [0, 0], sizes = [2, 32], strides = [1, 1]} : vector<2x64xf32> to vector<2x32xf32>
    %292 = vector.extract_strided_slice %290 {offsets = [0, 32], sizes = [2, 32], strides = [1, 1]} : vector<2x64xf32> to vector<2x32xf32>
    %293 = vector.extract_strided_slice %281 {offsets = [0, 64], sizes = [2, 32], strides = [1, 1]} : vector<2x96xf32> to vector<2x32xf32>
    %294 = vector.extract_strided_slice %282 {offsets = [0, 64], sizes = [2, 32], strides = [1, 1]} : vector<2x96xf32> to vector<2x32xf32>
    %295 = arith.addf %294, %10 : vector<2x32xf32>
    %296 = arith.mulf %291, %295 : vector<2x32xf32>
    %297 = arith.addf %293, %296 : vector<2x32xf32>
    %298 = math.tanh %297 : vector<2x32xf32>
    %cst_83 = arith.constant 1.000000e+00 : f32
    %299 = vector.broadcast %cst_83 : f32 to vector<2x32xf32>
    %300 = arith.subf %299, %292 : vector<2x32xf32>
    %301 = arith.mulf %300, %298 : vector<2x32xf32>
    %302 = arith.mulf %292, %244 : vector<2x32xf32>
    %303 = arith.addf %301, %302 : vector<2x32xf32>
    %304 = arith.index_cast %249 : i32 to index
    %c0_84 = arith.constant 0 : index
    %c0_85 = arith.constant 0 : index
    %305 = vector.load %arg13[%304, %c0_84, %c0_85] : memref<8x2x32xf32, #tpu.memory_space<vmem>>, vector<1x2x32xf32>
    %306 = vector.shape_cast %305 : vector<1x2x32xf32> to vector<2x32xf32>
    %307 = vector.shape_cast %303 : vector<2x32xf32> to vector<1x2x32xf32>
    tpu.vector_store %arg13[%304, %c0_84, %c0_85], %307 {strides = array<i32>} : memref<8x2x32xf32, #tpu.memory_space<vmem>>, vector<1x2x32xf32>,
    %c5_i32 = arith.constant 5 : i32
    %c7_i32_86 = arith.constant 7 : i32
    %308 = arith.subi %c7_i32_86, %c5_i32 : i32
    %309 = arith.index_cast %c5_i32 : i32 to index
    %c0_87 = arith.constant 0 : index
    %c0_88 = arith.constant 0 : index
    %310 = vector.load %arg1[%309, %c0_87, %c0_88] : memref<8x2x96xf32, #tpu.memory_space<vmem>>, vector<1x2x96xf32>
    %311 = vector.shape_cast %310 : vector<1x2x96xf32> to vector<2x96xf32>
    %cst_89 = arith.constant dense<0.000000e+00> : vector<2x96xf32>
    %312 = tpu.matmul %274, %3, %cst_89 {dimension_numbers = #tpu.dot_dimension_numbers<[1], [0], [0], [1], [0, 0, 1, 1], [], []>} : vector<2x32xf32>, vector<32x96xf32>, vector<2x96xf32> -> vector<2x96xf32>
    %313 = vector.extract_strided_slice %311 {offsets = [0, 0], sizes = [2, 64], strides = [1, 1]} : vector<2x96xf32> to vector<2x64xf32>
    %314 = vector.extract_strided_slice %312 {offsets = [0, 0], sizes = [2, 64], strides = [1, 1]} : vector<2x96xf32> to vector<2x64xf32>
    %315 = arith.addf %313, %314 : vector<2x64xf32>
    %316 = arith.negf %315 : vector<2x64xf32>
    %317 = math.exp %316 : vector<2x64xf32>
    %cst_90 = arith.constant 1.000000e+00 : f32
    %318 = vector.broadcast %cst_90 : f32 to vector<2x64xf32>
    %319 = arith.addf %318, %317 : vector<2x64xf32>
    %320 = arith.divf %318, %319 : vector<2x64xf32>
    %321 = vector.extract_strided_slice %320 {offsets = [0, 0], sizes = [2, 32], strides = [1, 1]} : vector<2x64xf32> to vector<2x32xf32>
    %322 = vector.extract_strided_slice %320 {offsets = [0, 32], sizes = [2, 32], strides = [1, 1]} : vector<2x64xf32> to vector<2x32xf32>
    %323 = vector.extract_strided_slice %311 {offsets = [0, 64], sizes = [2, 32], strides = [1, 1]} : vector<2x96xf32> to vector<2x32xf32>
    %324 = vector.extract_strided_slice %312 {offsets = [0, 64], sizes = [2, 32], strides = [1, 1]} : vector<2x96xf32> to vector<2x32xf32>
    %325 = arith.addf %324, %7 : vector<2x32xf32>
    %326 = arith.mulf %321, %325 : vector<2x32xf32>
    %327 = arith.addf %323, %326 : vector<2x32xf32>
    %328 = math.tanh %327 : vector<2x32xf32>
    %cst_91 = arith.constant 1.000000e+00 : f32
    %329 = vector.broadcast %cst_91 : f32 to vector<2x32xf32>
    %330 = arith.subf %329, %322 : vector<2x32xf32>
    %331 = arith.mulf %330, %328 : vector<2x32xf32>
    %332 = arith.mulf %322, %274 : vector<2x32xf32>
    %333 = arith.addf %331, %332 : vector<2x32xf32>
    %334 = arith.index_cast %c5_i32 : i32 to index
    %c0_92 = arith.constant 0 : index
    %c0_93 = arith.constant 0 : index
    %335 = vector.load %arg12[%334, %c0_92, %c0_93] : memref<8x2x32xf32, #tpu.memory_space<vmem>>, vector<1x2x32xf32>
    %336 = vector.shape_cast %335 : vector<1x2x32xf32> to vector<2x32xf32>
    %337 = vector.shape_cast %333 : vector<2x32xf32> to vector<1x2x32xf32>
    tpu.vector_store %arg12[%334, %c0_92, %c0_93], %337 {strides = array<i32>} : memref<8x2x32xf32, #tpu.memory_space<vmem>>, vector<1x2x32xf32>,
    %338 = arith.index_cast %308 : i32 to index
    %c0_94 = arith.constant 0 : index
    %c0_95 = arith.constant 0 : index
    %339 = vector.load %arg2[%338, %c0_94, %c0_95] : memref<8x2x96xf32, #tpu.memory_space<vmem>>, vector<1x2x96xf32>
    %340 = vector.shape_cast %339 : vector<1x2x96xf32> to vector<2x96xf32>
    %cst_96 = arith.constant dense<0.000000e+00> : vector<2x96xf32>
    %341 = tpu.matmul %303, %4, %cst_96 {dimension_numbers = #tpu.dot_dimension_numbers<[1], [0], [0], [1], [0, 0, 1, 1], [], []>} : vector<2x32xf32>, vector<32x96xf32>, vector<2x96xf32> -> vector<2x96xf32>
    %342 = vector.extract_strided_slice %340 {offsets = [0, 0], sizes = [2, 64], strides = [1, 1]} : vector<2x96xf32> to vector<2x64xf32>
    %343 = vector.extract_strided_slice %341 {offsets = [0, 0], sizes = [2, 64], strides = [1, 1]} : vector<2x96xf32> to vector<2x64xf32>
    %344 = arith.addf %342, %343 : vector<2x64xf32>
    %345 = arith.negf %344 : vector<2x64xf32>
    %346 = math.exp %345 : vector<2x64xf32>
    %cst_97 = arith.constant 1.000000e+00 : f32
    %347 = vector.broadcast %cst_97 : f32 to vector<2x64xf32>
    %348 = arith.addf %347, %346 : vector<2x64xf32>
    %349 = arith.divf %347, %348 : vector<2x64xf32>
    %350 = vector.extract_strided_slice %349 {offsets = [0, 0], sizes = [2, 32], strides = [1, 1]} : vector<2x64xf32> to vector<2x32xf32>
    %351 = vector.extract_strided_slice %349 {offsets = [0, 32], sizes = [2, 32], strides = [1, 1]} : vector<2x64xf32> to vector<2x32xf32>
    %352 = vector.extract_strided_slice %340 {offsets = [0, 64], sizes = [2, 32], strides = [1, 1]} : vector<2x96xf32> to vector<2x32xf32>
    %353 = vector.extract_strided_slice %341 {offsets = [0, 64], sizes = [2, 32], strides = [1, 1]} : vector<2x96xf32> to vector<2x32xf32>
    %354 = arith.addf %353, %10 : vector<2x32xf32>
    %355 = arith.mulf %350, %354 : vector<2x32xf32>
    %356 = arith.addf %352, %355 : vector<2x32xf32>
    %357 = math.tanh %356 : vector<2x32xf32>
    %cst_98 = arith.constant 1.000000e+00 : f32
    %358 = vector.broadcast %cst_98 : f32 to vector<2x32xf32>
    %359 = arith.subf %358, %351 : vector<2x32xf32>
    %360 = arith.mulf %359, %357 : vector<2x32xf32>
    %361 = arith.mulf %351, %303 : vector<2x32xf32>
    %362 = arith.addf %360, %361 : vector<2x32xf32>
    %363 = arith.index_cast %308 : i32 to index
    %c0_99 = arith.constant 0 : index
    %c0_100 = arith.constant 0 : index
    %364 = vector.load %arg13[%363, %c0_99, %c0_100] : memref<8x2x32xf32, #tpu.memory_space<vmem>>, vector<1x2x32xf32>
    %365 = vector.shape_cast %364 : vector<1x2x32xf32> to vector<2x32xf32>
    %366 = vector.shape_cast %362 : vector<2x32xf32> to vector<1x2x32xf32>
    tpu.vector_store %arg13[%363, %c0_99, %c0_100], %366 {strides = array<i32>} : memref<8x2x32xf32, #tpu.memory_space<vmem>>, vector<1x2x32xf32>,
    %c6_i32 = arith.constant 6 : i32
    %c7_i32_101 = arith.constant 7 : i32
    %367 = arith.subi %c7_i32_101, %c6_i32 : i32
    %368 = arith.index_cast %c6_i32 : i32 to index
    %c0_102 = arith.constant 0 : index
    %c0_103 = arith.constant 0 : index
    %369 = vector.load %arg1[%368, %c0_102, %c0_103] : memref<8x2x96xf32, #tpu.memory_space<vmem>>, vector<1x2x96xf32>
    %370 = vector.shape_cast %369 : vector<1x2x96xf32> to vector<2x96xf32>
    %cst_104 = arith.constant dense<0.000000e+00> : vector<2x96xf32>
    %371 = tpu.matmul %333, %3, %cst_104 {dimension_numbers = #tpu.dot_dimension_numbers<[1], [0], [0], [1], [0, 0, 1, 1], [], []>} : vector<2x32xf32>, vector<32x96xf32>, vector<2x96xf32> -> vector<2x96xf32>
    %372 = vector.extract_strided_slice %370 {offsets = [0, 0], sizes = [2, 64], strides = [1, 1]} : vector<2x96xf32> to vector<2x64xf32>
    %373 = vector.extract_strided_slice %371 {offsets = [0, 0], sizes = [2, 64], strides = [1, 1]} : vector<2x96xf32> to vector<2x64xf32>
    %374 = arith.addf %372, %373 : vector<2x64xf32>
    %375 = arith.negf %374 : vector<2x64xf32>
    %376 = math.exp %375 : vector<2x64xf32>
    %cst_105 = arith.constant 1.000000e+00 : f32
    %377 = vector.broadcast %cst_105 : f32 to vector<2x64xf32>
    %378 = arith.addf %377, %376 : vector<2x64xf32>
    %379 = arith.divf %377, %378 : vector<2x64xf32>
    %380 = vector.extract_strided_slice %379 {offsets = [0, 0], sizes = [2, 32], strides = [1, 1]} : vector<2x64xf32> to vector<2x32xf32>
    %381 = vector.extract_strided_slice %379 {offsets = [0, 32], sizes = [2, 32], strides = [1, 1]} : vector<2x64xf32> to vector<2x32xf32>
    %382 = vector.extract_strided_slice %370 {offsets = [0, 64], sizes = [2, 32], strides = [1, 1]} : vector<2x96xf32> to vector<2x32xf32>
    %383 = vector.extract_strided_slice %371 {offsets = [0, 64], sizes = [2, 32], strides = [1, 1]} : vector<2x96xf32> to vector<2x32xf32>
    %384 = arith.addf %383, %7 : vector<2x32xf32>
    %385 = arith.mulf %380, %384 : vector<2x32xf32>
    %386 = arith.addf %382, %385 : vector<2x32xf32>
    %387 = math.tanh %386 : vector<2x32xf32>
    %cst_106 = arith.constant 1.000000e+00 : f32
    %388 = vector.broadcast %cst_106 : f32 to vector<2x32xf32>
    %389 = arith.subf %388, %381 : vector<2x32xf32>
    %390 = arith.mulf %389, %387 : vector<2x32xf32>
    %391 = arith.mulf %381, %333 : vector<2x32xf32>
    %392 = arith.addf %390, %391 : vector<2x32xf32>
    %393 = arith.index_cast %c6_i32 : i32 to index
    %c0_107 = arith.constant 0 : index
    %c0_108 = arith.constant 0 : index
    %394 = vector.load %arg12[%393, %c0_107, %c0_108] : memref<8x2x32xf32, #tpu.memory_space<vmem>>, vector<1x2x32xf32>
    %395 = vector.shape_cast %394 : vector<1x2x32xf32> to vector<2x32xf32>
    %396 = vector.shape_cast %392 : vector<2x32xf32> to vector<1x2x32xf32>
    tpu.vector_store %arg12[%393, %c0_107, %c0_108], %396 {strides = array<i32>} : memref<8x2x32xf32, #tpu.memory_space<vmem>>, vector<1x2x32xf32>,
    %397 = arith.index_cast %367 : i32 to index
    %c0_109 = arith.constant 0 : index
    %c0_110 = arith.constant 0 : index
    %398 = vector.load %arg2[%397, %c0_109, %c0_110] : memref<8x2x96xf32, #tpu.memory_space<vmem>>, vector<1x2x96xf32>
    %399 = vector.shape_cast %398 : vector<1x2x96xf32> to vector<2x96xf32>
    %cst_111 = arith.constant dense<0.000000e+00> : vector<2x96xf32>
    %400 = tpu.matmul %362, %4, %cst_111 {dimension_numbers = #tpu.dot_dimension_numbers<[1], [0], [0], [1], [0, 0, 1, 1], [], []>} : vector<2x32xf32>, vector<32x96xf32>, vector<2x96xf32> -> vector<2x96xf32>
    %401 = vector.extract_strided_slice %399 {offsets = [0, 0], sizes = [2, 64], strides = [1, 1]} : vector<2x96xf32> to vector<2x64xf32>
    %402 = vector.extract_strided_slice %400 {offsets = [0, 0], sizes = [2, 64], strides = [1, 1]} : vector<2x96xf32> to vector<2x64xf32>
    %403 = arith.addf %401, %402 : vector<2x64xf32>
    %404 = arith.negf %403 : vector<2x64xf32>
    %405 = math.exp %404 : vector<2x64xf32>
    %cst_112 = arith.constant 1.000000e+00 : f32
    %406 = vector.broadcast %cst_112 : f32 to vector<2x64xf32>
    %407 = arith.addf %406, %405 : vector<2x64xf32>
    %408 = arith.divf %406, %407 : vector<2x64xf32>
    %409 = vector.extract_strided_slice %408 {offsets = [0, 0], sizes = [2, 32], strides = [1, 1]} : vector<2x64xf32> to vector<2x32xf32>
    %410 = vector.extract_strided_slice %408 {offsets = [0, 32], sizes = [2, 32], strides = [1, 1]} : vector<2x64xf32> to vector<2x32xf32>
    %411 = vector.extract_strided_slice %399 {offsets = [0, 64], sizes = [2, 32], strides = [1, 1]} : vector<2x96xf32> to vector<2x32xf32>
    %412 = vector.extract_strided_slice %400 {offsets = [0, 64], sizes = [2, 32], strides = [1, 1]} : vector<2x96xf32> to vector<2x32xf32>
    %413 = arith.addf %412, %10 : vector<2x32xf32>
    %414 = arith.mulf %409, %413 : vector<2x32xf32>
    %415 = arith.addf %411, %414 : vector<2x32xf32>
    %416 = math.tanh %415 : vector<2x32xf32>
    %cst_113 = arith.constant 1.000000e+00 : f32
    %417 = vector.broadcast %cst_113 : f32 to vector<2x32xf32>
    %418 = arith.subf %417, %410 : vector<2x32xf32>
    %419 = arith.mulf %418, %416 : vector<2x32xf32>
    %420 = arith.mulf %410, %362 : vector<2x32xf32>
    %421 = arith.addf %419, %420 : vector<2x32xf32>
    %422 = arith.index_cast %367 : i32 to index
    %c0_114 = arith.constant 0 : index
    %c0_115 = arith.constant 0 : index
    %423 = vector.load %arg13[%422, %c0_114, %c0_115] : memref<8x2x32xf32, #tpu.memory_space<vmem>>, vector<1x2x32xf32>
    %424 = vector.shape_cast %423 : vector<1x2x32xf32> to vector<2x32xf32>
    %425 = vector.shape_cast %421 : vector<2x32xf32> to vector<1x2x32xf32>
    tpu.vector_store %arg13[%422, %c0_114, %c0_115], %425 {strides = array<i32>} : memref<8x2x32xf32, #tpu.memory_space<vmem>>, vector<1x2x32xf32>,
    %c7_i32_116 = arith.constant 7 : i32
    %c7_i32_117 = arith.constant 7 : i32
    %426 = arith.subi %c7_i32_117, %c7_i32_116 : i32
    %427 = arith.index_cast %c7_i32_116 : i32 to index
    %c0_118 = arith.constant 0 : index
    %c0_119 = arith.constant 0 : index
    %428 = vector.load %arg1[%427, %c0_118, %c0_119] : memref<8x2x96xf32, #tpu.memory_space<vmem>>, vector<1x2x96xf32>
    %429 = vector.shape_cast %428 : vector<1x2x96xf32> to vector<2x96xf32>
    %cst_120 = arith.constant dense<0.000000e+00> : vector<2x96xf32>
    %430 = tpu.matmul %392, %3, %cst_120 {dimension_numbers = #tpu.dot_dimension_numbers<[1], [0], [0], [1], [0, 0, 1, 1], [], []>} : vector<2x32xf32>, vector<32x96xf32>, vector<2x96xf32> -> vector<2x96xf32>
    %431 = vector.extract_strided_slice %429 {offsets = [0, 0], sizes = [2, 64], strides = [1, 1]} : vector<2x96xf32> to vector<2x64xf32>
    %432 = vector.extract_strided_slice %430 {offsets = [0, 0], sizes = [2, 64], strides = [1, 1]} : vector<2x96xf32> to vector<2x64xf32>
    %433 = arith.addf %431, %432 : vector<2x64xf32>
    %434 = arith.negf %433 : vector<2x64xf32>
    %435 = math.exp %434 : vector<2x64xf32>
    %cst_121 = arith.constant 1.000000e+00 : f32
    %436 = vector.broadcast %cst_121 : f32 to vector<2x64xf32>
    %437 = arith.addf %436, %435 : vector<2x64xf32>
    %438 = arith.divf %436, %437 : vector<2x64xf32>
    %439 = vector.extract_strided_slice %438 {offsets = [0, 0], sizes = [2, 32], strides = [1, 1]} : vector<2x64xf32> to vector<2x32xf32>
    %440 = vector.extract_strided_slice %438 {offsets = [0, 32], sizes = [2, 32], strides = [1, 1]} : vector<2x64xf32> to vector<2x32xf32>
    %441 = vector.extract_strided_slice %429 {offsets = [0, 64], sizes = [2, 32], strides = [1, 1]} : vector<2x96xf32> to vector<2x32xf32>
    %442 = vector.extract_strided_slice %430 {offsets = [0, 64], sizes = [2, 32], strides = [1, 1]} : vector<2x96xf32> to vector<2x32xf32>
    %443 = arith.addf %442, %7 : vector<2x32xf32>
    %444 = arith.mulf %439, %443 : vector<2x32xf32>
    %445 = arith.addf %441, %444 : vector<2x32xf32>
    %446 = math.tanh %445 : vector<2x32xf32>
    %cst_122 = arith.constant 1.000000e+00 : f32
    %447 = vector.broadcast %cst_122 : f32 to vector<2x32xf32>
    %448 = arith.subf %447, %440 : vector<2x32xf32>
    %449 = arith.mulf %448, %446 : vector<2x32xf32>
    %450 = arith.mulf %440, %392 : vector<2x32xf32>
    %451 = arith.addf %449, %450 : vector<2x32xf32>
    %452 = arith.index_cast %c7_i32_116 : i32 to index
    %c0_123 = arith.constant 0 : index
    %c0_124 = arith.constant 0 : index
    %453 = vector.load %arg12[%452, %c0_123, %c0_124] : memref<8x2x32xf32, #tpu.memory_space<vmem>>, vector<1x2x32xf32>
    %454 = vector.shape_cast %453 : vector<1x2x32xf32> to vector<2x32xf32>
    %455 = vector.shape_cast %451 : vector<2x32xf32> to vector<1x2x32xf32>
    tpu.vector_store %arg12[%452, %c0_123, %c0_124], %455 {strides = array<i32>} : memref<8x2x32xf32, #tpu.memory_space<vmem>>, vector<1x2x32xf32>,
    %456 = arith.index_cast %426 : i32 to index
    %c0_125 = arith.constant 0 : index
    %c0_126 = arith.constant 0 : index
    %457 = vector.load %arg2[%456, %c0_125, %c0_126] : memref<8x2x96xf32, #tpu.memory_space<vmem>>, vector<1x2x96xf32>
    %458 = vector.shape_cast %457 : vector<1x2x96xf32> to vector<2x96xf32>
    %cst_127 = arith.constant dense<0.000000e+00> : vector<2x96xf32>
    %459 = tpu.matmul %421, %4, %cst_127 {dimension_numbers = #tpu.dot_dimension_numbers<[1], [0], [0], [1], [0, 0, 1, 1], [], []>} : vector<2x32xf32>, vector<32x96xf32>, vector<2x96xf32> -> vector<2x96xf32>
    %460 = vector.extract_strided_slice %458 {offsets = [0, 0], sizes = [2, 64], strides = [1, 1]} : vector<2x96xf32> to vector<2x64xf32>
    %461 = vector.extract_strided_slice %459 {offsets = [0, 0], sizes = [2, 64], strides = [1, 1]} : vector<2x96xf32> to vector<2x64xf32>
    %462 = arith.addf %460, %461 : vector<2x64xf32>
    %463 = arith.negf %462 : vector<2x64xf32>
    %464 = math.exp %463 : vector<2x64xf32>
    %cst_128 = arith.constant 1.000000e+00 : f32
    %465 = vector.broadcast %cst_128 : f32 to vector<2x64xf32>
    %466 = arith.addf %465, %464 : vector<2x64xf32>
    %467 = arith.divf %465, %466 : vector<2x64xf32>
    %468 = vector.extract_strided_slice %467 {offsets = [0, 0], sizes = [2, 32], strides = [1, 1]} : vector<2x64xf32> to vector<2x32xf32>
    %469 = vector.extract_strided_slice %467 {offsets = [0, 32], sizes = [2, 32], strides = [1, 1]} : vector<2x64xf32> to vector<2x32xf32>
    %470 = vector.extract_strided_slice %458 {offsets = [0, 64], sizes = [2, 32], strides = [1, 1]} : vector<2x96xf32> to vector<2x32xf32>
    %471 = vector.extract_strided_slice %459 {offsets = [0, 64], sizes = [2, 32], strides = [1, 1]} : vector<2x96xf32> to vector<2x32xf32>
    %472 = arith.addf %471, %10 : vector<2x32xf32>
    %473 = arith.mulf %468, %472 : vector<2x32xf32>
    %474 = arith.addf %470, %473 : vector<2x32xf32>
    %475 = math.tanh %474 : vector<2x32xf32>
    %cst_129 = arith.constant 1.000000e+00 : f32
    %476 = vector.broadcast %cst_129 : f32 to vector<2x32xf32>
    %477 = arith.subf %476, %469 : vector<2x32xf32>
    %478 = arith.mulf %477, %475 : vector<2x32xf32>
    %479 = arith.mulf %469, %421 : vector<2x32xf32>
    %480 = arith.addf %478, %479 : vector<2x32xf32>
    %481 = arith.index_cast %426 : i32 to index
    %c0_130 = arith.constant 0 : index
    %c0_131 = arith.constant 0 : index
    %482 = vector.load %arg13[%481, %c0_130, %c0_131] : memref<8x2x32xf32, #tpu.memory_space<vmem>>, vector<1x2x32xf32>
    %483 = vector.shape_cast %482 : vector<1x2x32xf32> to vector<2x32xf32>
    %484 = vector.shape_cast %480 : vector<2x32xf32> to vector<1x2x32xf32>
    tpu.vector_store %arg13[%481, %c0_130, %c0_131], %484 {strides = array<i32>} : memref<8x2x32xf32, #tpu.memory_space<vmem>>, vector<1x2x32xf32>,
    %c8_i32 = arith.constant 8 : i32
    %c0_132 = arith.constant 0 : index
    %c0_133 = arith.constant 0 : index
    %485 = vector.load %arg15[%c0_132, %c0_133] : memref<2x32xf32, #tpu.memory_space<vmem>>, vector<2x32xf32>
    tpu.vector_store %arg15[%c0_132, %c0_133], %451 {strides = array<i32>} : memref<2x32xf32, #tpu.memory_space<vmem>>, vector<2x32xf32>,
    %c0_134 = arith.constant 0 : index
    %c0_135 = arith.constant 0 : index
    %486 = vector.load %arg16[%c0_134, %c0_135] : memref<2x32xf32, #tpu.memory_space<vmem>>, vector<2x32xf32>
    tpu.vector_store %arg16[%c0_134, %c0_135], %480 {strides = array<i32>} : memref<2x32xf32, #tpu.memory_space<vmem>>, vector<2x32xf32>,
    %c0_i32_136 = arith.constant 0 : i32
    %487 = arith.cmpi eq, %arg0, %c0_i32_136 : i32
    %488 = arith.extui %487 : i1 to i32
    %c0_i32_137 = arith.constant 0 : i32
    %489 = arith.cmpi ne, %488, %c0_i32_137 : i32
    scf.if %489 {
      %c0_138 = arith.constant 0 : index
      %c0_139 = arith.constant 0 : index
      %490 = vector.load %arg7[%c0_138, %c0_139] : memref<32x32xf32, #tpu.memory_space<vmem>>, vector<32x32xf32>
      %cst_140 = arith.constant dense<0.000000e+00> : vector<2x32xf32>
      %491 = tpu.matmul %451, %490, %cst_140 {dimension_numbers = #tpu.dot_dimension_numbers<[1], [0], [0], [1], [0, 0, 1, 1], [], []>} : vector<2x32xf32>, vector<32x32xf32>, vector<2x32xf32> -> vector<2x32xf32>
      %c0_141 = arith.constant 0 : index
      %c0_142 = arith.constant 0 : index
      %492 = vector.load %arg8[%c0_141, %c0_142] : memref<32x32xf32, #tpu.memory_space<vmem>>, vector<32x32xf32>
      %cst_143 = arith.constant dense<0.000000e+00> : vector<2x32xf32>
      %493 = tpu.matmul %480, %492, %cst_143 {dimension_numbers = #tpu.dot_dimension_numbers<[1], [0], [0], [1], [0, 0, 1, 1], [], []>} : vector<2x32xf32>, vector<32x32xf32>, vector<2x32xf32> -> vector<2x32xf32>
      %494 = arith.addf %491, %493 : vector<2x32xf32>
      %c0_144 = arith.constant 0 : index
      %c0_145 = arith.constant 0 : index
      %495 = vector.load %arg9[%c0_144, %c0_145] : memref<1x32xf32, #tpu.memory_space<vmem>>, vector<1x32xf32>
      %496 = vector.broadcast %495 : vector<1x32xf32> to vector<2x32xf32>
      %497 = arith.addf %494, %496 : vector<2x32xf32>
      %cst_146 = arith.constant 0.000000e+00 : f32
      %498 = vector.broadcast %cst_146 : f32 to vector<2x32xf32>
      %499 = arith.maximumf %497, %498 : vector<2x32xf32>
      %c0_147 = arith.constant 0 : index
      %c0_148 = arith.constant 0 : index
      %500 = vector.load %arg10[%c0_147, %c0_148] : memref<32x32xf32, #tpu.memory_space<vmem>>, vector<32x32xf32>
      %cst_149 = arith.constant dense<0.000000e+00> : vector<2x32xf32>
      %501 = tpu.matmul %499, %500, %cst_149 {dimension_numbers = #tpu.dot_dimension_numbers<[1], [0], [0], [1], [0, 0, 1, 1], [], []>} : vector<2x32xf32>, vector<32x32xf32>, vector<2x32xf32> -> vector<2x32xf32>
      %c0_150 = arith.constant 0 : index
      %c0_151 = arith.constant 0 : index
      %502 = vector.load %arg11[%c0_150, %c0_151] : memref<1x32xf32, #tpu.memory_space<vmem>>, vector<1x32xf32>
      %503 = vector.broadcast %502 : vector<1x32xf32> to vector<2x32xf32>
      %504 = arith.addf %501, %503 : vector<2x32xf32>
      %c0_152 = arith.constant 0 : index
      %c0_153 = arith.constant 0 : index
      %505 = vector.load %arg14[%c0_152, %c0_153] : memref<2x32xf32, #tpu.memory_space<vmem>>, vector<2x32xf32>
      tpu.vector_store %arg14[%c0_152, %c0_153], %504 {strides = array<i32>} : memref<2x32xf32, #tpu.memory_space<vmem>>, vector<2x32xf32>,
    } else {
    }
    return
  }
  func.func @transform_0(%arg0: i32) -> (i32, i32, i32) {
    %c0_i32 = arith.constant 0 : i32
    %c0_i32_0 = arith.constant 0 : i32
    %c0_i32_1 = arith.constant 0 : i32
    return %arg0, %c0_i32, %c0_i32_0 : i32, i32, i32
  }
  func.func @transform_1(%arg0: i32) -> (i32, i32, i32) {
    %c0_i32 = arith.constant 0 : i32
    %0 = arith.subi %c0_i32, %arg0 : i32
    %c0_i32_0 = arith.constant 0 : i32
    %c0_i32_1 = arith.constant 0 : i32
    %c0_i32_2 = arith.constant 0 : i32
    return %0, %c0_i32_0, %c0_i32_1 : i32, i32, i32
  }
  func.func @transform_2(%arg0: i32) -> (i32, i32) {
    %c0_i32 = arith.constant 0 : i32
    %c0_i32_0 = arith.constant 0 : i32
    %c0_i32_1 = arith.constant 0 : i32
    return %c0_i32, %c0_i32_0 : i32, i32
  }
  func.func @transform_3(%arg0: i32) -> (i32, i32) {
    %c0_i32 = arith.constant 0 : i32
    %c0_i32_0 = arith.constant 0 : i32
    %c0_i32_1 = arith.constant 0 : i32
    return %c0_i32, %c0_i32_0 : i32, i32
  }
  func.func @transform_4(%arg0: i32) -> (i32, i32) {
    %c0_i32 = arith.constant 0 : i32
    %c0_i32_0 = arith.constant 0 : i32
    %c0_i32_1 = arith.constant 0 : i32
    return %c0_i32, %c0_i32_0 : i32, i32
  }
  func.func @transform_5(%arg0: i32) -> (i32, i32) {
    %c0_i32 = arith.constant 0 : i32
    %c0_i32_0 = arith.constant 0 : i32
    %c0_i32_1 = arith.constant 0 : i32
    return %c0_i32, %c0_i32_0 : i32, i32
  }
  func.func @transform_6(%arg0: i32) -> (i32, i32) {
    %c0_i32 = arith.constant 0 : i32
    %c0_i32_0 = arith.constant 0 : i32
    %c0_i32_1 = arith.constant 0 : i32
    return %c0_i32, %c0_i32_0 : i32, i32
  }
  func.func @transform_7(%arg0: i32) -> (i32, i32) {
    %c0_i32 = arith.constant 0 : i32
    %c0_i32_0 = arith.constant 0 : i32
    %c0_i32_1 = arith.constant 0 : i32
    return %c0_i32, %c0_i32_0 : i32, i32
  }
  func.func @transform_8(%arg0: i32) -> (i32, i32) {
    %c0_i32 = arith.constant 0 : i32
    %c0_i32_0 = arith.constant 0 : i32
    %c0_i32_1 = arith.constant 0 : i32
    return %c0_i32, %c0_i32_0 : i32, i32
  }
  func.func @transform_9(%arg0: i32) -> (i32, i32) {
    %c0_i32 = arith.constant 0 : i32
    %c0_i32_0 = arith.constant 0 : i32
    %c0_i32_1 = arith.constant 0 : i32
    return %c0_i32, %c0_i32_0 : i32, i32
  }
  func.func @transform_10(%arg0: i32) -> (i32, i32) {
    %c0_i32 = arith.constant 0 : i32
    %c0_i32_0 = arith.constant 0 : i32
    %c0_i32_1 = arith.constant 0 : i32
    return %c0_i32, %c0_i32_0 : i32, i32
  }
  func.func @transform_11(%arg0: i32) -> (i32, i32, i32) {
    %c0_i32 = arith.constant 0 : i32
    %c0_i32_0 = arith.constant 0 : i32
    %c0_i32_1 = arith.constant 0 : i32
    return %arg0, %c0_i32, %c0_i32_0 : i32, i32, i32
  }
  func.func @transform_12(%arg0: i32) -> (i32, i32, i32) {
    %c0_i32 = arith.constant 0 : i32
    %0 = arith.subi %c0_i32, %arg0 : i32
    %c0_i32_0 = arith.constant 0 : i32
    %c0_i32_1 = arith.constant 0 : i32
    %c0_i32_2 = arith.constant 0 : i32
    return %0, %c0_i32_0, %c0_i32_1 : i32, i32, i32
  }
  func.func @transform_13(%arg0: i32) -> (i32, i32) {
    %c0_i32 = arith.constant 0 : i32
    %c0_i32_0 = arith.constant 0 : i32
    %c0_i32_1 = arith.constant 0 : i32
    return %c0_i32, %c0_i32_0 : i32, i32
  }
}

</mosaic_0001>

<llo_original>
// kernel: gru_compressor_forward.3
$region0: #{gru_compressor_forward.3}
  #allocation0 [shape = 'u32[]', space=smem, size = 0x4, offset = 0x4, fixed_abs, tag = 'smem constant byte address 0x4 - core index']
  #allocation1 [shape = 'u32[144,128]{1,0:T(1,128)}', space=vmem, size = 0x12000, scoped, tag = 'internal scratch']
  #allocation2 [shape = 'f32[2,32]{1,0:T(2,128)}', space=vmem, size = 0x400, scoped, tag = 'scratch operand']
  #allocation3 [shape = 'f32[2,32]{1,0:T(2,128)}', space=vmem, size = 0x400, scoped, tag = 'scratch operand']
  %s0 = inlined_call_operand.vmem [shape: f32[8,2,96], index: 0, kind: input, shape index: {}]
  %s1 = inlined_call_operand.vmem [shape: f32[8,2,96], index: 1, kind: input, shape index: {}]
  %s2 = inlined_call_operand.vmem [shape: f32[32,96], index: 2, kind: input, shape index: {}]
  %s3 = inlined_call_operand.vmem [shape: f32[32,96], index: 3, kind: input, shape index: {}]
  %s4 = inlined_call_operand.vmem [shape: f32[1,32], index: 4, kind: input, shape index: {}]
  %s5 = inlined_call_operand.vmem [shape: f32[1,32], index: 5, kind: input, shape index: {}]
  %s6 = inlined_call_operand.vmem [shape: f32[32,32], index: 6, kind: input, shape index: {}]
  %s7 = inlined_call_operand.vmem [shape: f32[32,32], index: 7, kind: input, shape index: {}]
  %s8 = inlined_call_operand.vmem [shape: f32[1,32], index: 8, kind: input, shape index: {}]
  %s9 = inlined_call_operand.vmem [shape: f32[32,32], index: 9, kind: input, shape index: {}]
  %s10 = inlined_call_operand.vmem [shape: f32[1,32], index: 10, kind: input, shape index: {}]
  %s11 = inlined_call_operand.hbm [shape: f32[8,2,32], index: 11, kind: output, shape index: {0}]
  %s12 = inlined_call_operand.hbm [shape: f32[8,2,32], index: 12, kind: output, shape index: {1}]
  %s13 = inlined_call_operand.hbm [shape: f32[2,32], index: 13, kind: output, shape index: {2}]
  %14 = xla_tuple %s11, %s12, %s13
  %s15 = sld [smem:[#allocation0]]
  $region78: #{gru_compressor_forward.3} parent=0
    _
  %s17 = ssub.s32 1, %s15
  %s18 = scalar_select 0, %s17, %s15
  $region1: #{gru_compressor_forward.3} parent=0
    #allocation4 [shape = 'u8[8192]{0}', space=vmem, size = 0x2000, scoped, tag = 'output window, operand 0, single buffered']
    #allocation5 [shape = 's32[1]{0}', space=sflag, size = 0x4, scoped, tag = 'scoped memory for gru_compressor_forward.3']
    #allocation6 [shape = 'u8[8192]{0}', space=vmem, size = 0x2000, scoped, tag = 'output window, operand 1, single buffered']
    #allocation7 [shape = 's32[1]{0}', space=sflag, size = 0x4, scoped, tag = 'scoped memory for gru_compressor_forward.3']
    #allocation8 [shape = 'u8[1024]{0}', space=vmem, size = 0x400, scoped, tag = 'output window, operand 2, single buffered']
    %19 = vsyncpa [#allocation5], 0
    %20 = vsyncpa [#allocation7], 0
    // Predicated region
    $region2: #{gru_compressor_forward.3} parent=1 // pred_check
      _
    $region3: #{gru_compressor_forward.3} parent=1 // pred_check_branch
      %22 = sbr.rel (0) target = $region5
    $region4: #{gru_compressor_forward.3} parent=1 // pred_region
      _
    $region5: #{gru_compressor_forward.3} parent=1 // pred_fallthru
      _
    // Predicated region
    $region6: #{gru_compressor_forward.3} parent=1 // pred_check
      _
    $region7: #{gru_compressor_forward.3} parent=1 // pred_check_branch
      %24 = sbr.rel (0) target = $region9
    $region8: #{gru_compressor_forward.3} parent=1 // pred_region
      %s25 = ssub.s32 0, 0
      %s26 = smul.u32 8, %s25
      %p27 = scmp.lt.s32.totalorder %s26, 7
      %s28 = scalar_select %p27, %s26, 7
      %s29 = smul.addr %s28, 2
      %s30 = scalar_lea.vmem %s1, %s29
      %s31 = ssub.s32 0, 0
      %s32 = smul.u32 8, %s31
    $region9: #{gru_compressor_forward.3} parent=1 // pred_fallthru
      _
    // Predicated region
    $region10: #{gru_compressor_forward.3} parent=1 // pred_check
      _
    $region11: #{gru_compressor_forward.3} parent=1 // pred_check_branch
      %34 = sbr.rel (0) target = $region13
    $region12: #{gru_compressor_forward.3} parent=1 // pred_region
      _
    $region13: #{gru_compressor_forward.3} parent=1 // pred_fallthru
      _
    // Predicated region
    $region14: #{gru_compressor_forward.3} parent=1 // pred_check
      _
    $region15: #{gru_compressor_forward.3} parent=1 // pred_check_branch
      %36 = sbr.rel (0) target = $region17
    $region16: #{gru_compressor_forward.3} parent=1 // pred_region
      _
    $region17: #{gru_compressor_forward.3} parent=1 // pred_fallthru
      _
    // Predicated region
    $region18: #{gru_compressor_forward.3} parent=1 // pred_check
      _
    $region19: #{gru_compressor_forward.3} parent=1 // pred_check_branch
      %38 = sbr.rel (0) target = $region21
    $region20: #{gru_compressor_forward.3} parent=1 // pred_region
      _
    $region21: #{gru_compressor_forward.3} parent=1 // pred_fallthru
      _
    // Predicated region
    $region22: #{gru_compressor_forward.3} parent=1 // pred_check
      _
    $region23: #{gru_compressor_forward.3} parent=1 // pred_check_branch
      %40 = sbr.rel (0) target = $region25
    $region24: #{gru_compressor_forward.3} parent=1 // pred_region
      _
    $region25: #{gru_compressor_forward.3} parent=1 // pred_fallthru
      _
    // Predicated region
    $region26: #{gru_compressor_forward.3} parent=1 // pred_check
      _
    $region27: #{gru_compressor_forward.3} parent=1 // pred_check_branch
      %42 = sbr.rel (0) target = $region29
    $region28: #{gru_compressor_forward.3} parent=1 // pred_region
      _
    $region29: #{gru_compressor_forward.3} parent=1 // pred_fallthru
      _
    // Predicated region
    $region30: #{gru_compressor_forward.3} parent=1 // pred_check
      _
    $region31: #{gru_compressor_forward.3} parent=1 // pred_check_branch
      %44 = sbr.rel (0) target = $region33
    $region32: #{gru_compressor_forward.3} parent=1 // pred_region
      _
    $region33: #{gru_compressor_forward.3} parent=1 // pred_fallthru
      _
    // Predicated region
    $region34: #{gru_compressor_forward.3} parent=1 // pred_check
      _
    $region35: #{gru_compressor_forward.3} parent=1 // pred_check_branch
      %46 = sbr.rel (0) target = $region37
    $region36: #{gru_compressor_forward.3} parent=1 // pred_region
      _
    $region37: #{gru_compressor_forward.3} parent=1 // pred_fallthru
      _
    // Predicated region
    $region38: #{gru_compressor_forward.3} parent=1 // pred_check
      _
    $region39: #{gru_compressor_forward.3} parent=1 // pred_check_branch
      %48 = sbr.rel (0) target = $region41
    $region40: #{gru_compressor_forward.3} parent=1 // pred_region
      _
    $region41: #{gru_compressor_forward.3} parent=1 // pred_fallthru
      _
    // Predicated region
    $region42: #{gru_compressor_forward.3} parent=1 // pred_check
      _
    $region43: #{gru_compressor_forward.3} parent=1 // pred_check_branch
      %50 = sbr.rel (0) target = $region45
    $region44: #{gru_compressor_forward.3} parent=1 // pred_region
      _
    $region45: #{gru_compressor_forward.3} parent=1 // pred_fallthru
      _
    %s51 = ssub.s32 0, 0
    %s52 = smul.u32 8, %s51
    %p53 = scmp.lt.s32.totalorder %s52, 7
    %s54 = scalar_select %p53, %s52, 7
    %s55 = smul.addr %s54, 2
    %s56 = scalar_lea.vmem %s1, %s55
    %s57 = ssub.s32 0, 0
    %s58 = smul.u32 8, %s57
    %p59 = scmp.lt.s32.totalorder %s58, 7
    %s60 = scalar_select %p59, %s58, 7
    %s61 = smul.addr %s60, 2
    %s62 = scalar_lea.vmem %s1, %s61
    %s63 = ssub.s32 0, 0
    %s64 = smul.u32 8, %s63
    %s65 = ssub.s32 0, 0
    %s66 = smul.u32 8, %s65
    %p67 = scmp.eq.s32.totalorder 0, 0
    // Predicated region
    $region46: #{gru_compressor_forward.3} parent=1 // pred_check
      %p68 = pneg %p67
    $region47: #{gru_compressor_forward.3} parent=1 // pred_check_branch
      %70 = sbr.rel (%p68) target = $region49
    $region48: #{gru_compressor_forward.3} parent=1 // pred_region
      %vm71 = vcmask 254976
      %72 = vst.msk [vmem:[#allocation2] sm:$0x3] %vm71, 0.0
      %73 = vst.msk [vmem:[#allocation3] sm:$0x3] %vm71, 0.0
    $region49: #{gru_compressor_forward.3} parent=1 // pred_fallthru
      _
    %v74 = vld [vmem:[%s2] sm:$0xff]
    %v75 = vld [vmem:[%s2 + $0x8] sm:$0xff]
    %v76 = vld [vmem:[%s2 + $0x10] sm:$0xff]
    %v77 = vld [vmem:[%s2 + $0x18] sm:$0xff]
    %v78 = vld [vmem:[%s3] sm:$0xff]
    %v79 = vld [vmem:[%s3 + $0x8] sm:$0xff]
    %v80 = vld [vmem:[%s3 + $0x10] sm:$0xff]
    %v81 = vld [vmem:[%s3 + $0x18] sm:$0xff]
    %v82 = vld [vmem:[%s4] sm:$0x1]
    %v84 = vlaneseq
    %v85 = vshrl.u32 %v84, 7
    %v86 = vsub.s32 0, %v85
    %v87 = vrot.slane %v82, %v86
    %v88 = vld [vmem:[%s5] sm:$0x1]
    %v90 = vlaneseq
    %v91 = vshrl.u32 %v90, 7
    %v92 = vsub.s32 0, %v91
    %v93 = vrot.slane %v88, %v92
    %v94 = vld [vmem:[#allocation2] sm:$0x3]
    %v95 = vld [vmem:[#allocation3] sm:$0x3]
    %v96 = vld [vmem:[%s0] sm:$0x3]
    %vm97 = vcmask 261120
    %v99 = vsel %vm97, %v94, 0
    %101 = vmatprep.subr.mxu0 0.0
    %102 = vmatpush1.msra.mxu0 %v74
    %103 = vmatprep.subr.mxu0 0.0
    %104 = vmatpush1.msra.mxu0 %v75
    %105 = vmatprep.subr.mxu0 0.0
    %106 = vmatpush1.msra.mxu0 %v76
    %107 = vmatprep.subr.mxu0 0.0
    %108 = vmatpush1.msra.mxu0 %v77
    %109 = vmatprep.subr.mxu0 0.0
    %110 = vmatpush1.msra.mxu0 0.0
    %111 = vmatprep.subr.mxu0 0.0
    %112 = vmatpush1.msra.mxu0 0.0
    %113 = vmatprep.subr.mxu0 0.0
    %114 = vmatpush1.msra.mxu0 0.0
    %115 = vmatprep.subr.mxu0 0.0
    %116 = vmatpush1.msra.mxu0 0.0
    %117 = vmatprep.subr.mxu0 0.0
    %118 = vmatpush1.msra.mxu0 0.0
    %119 = vmatprep.subr.mxu0 0.0
    %120 = vmatpush1.msra.mxu0 0.0
    %121 = vmatprep.subr.mxu0 0.0
    %122 = vmatpush1.msra.mxu0 0.0
    %123 = vmatprep.subr.mxu0 0.0
    %124 = vmatpush1.msra.mxu0 0.0
    %125 = vmatprep.subr.mxu0 0.0
    %126 = vmatpush1.msra.mxu0 0.0
    %127 = vmatprep.subr.mxu0 0.0
    %128 = vmatpush1.msra.mxu0 0.0
    %129 = vmatprep.subr.mxu0 0.0
    %130 = vmatpush1.msra.mxu0 0.0
    %131 = vmatprep.subr.mxu0 0.0
    %132 = vmatpush1.msra.mxu0 0.0
    %133 = vmatprep.subr.mxu0 0.0
    %134 = vmatpush1.msra.mxu0 0.0
    %135 = vmatprep.subr.mxu0 0.0
    %136 = vmatpush1.msra.mxu0 0.0
    %137 = vmatprep.subr.mxu0 0.0
    %138 = vmatpush1.msra.mxu0 0.0
    %139 = vmatprep.subr.mxu0 0.0
    %140 = vmatpush1.msra.mxu0 0.0
    %141 = vmatprep.subr.mxu0 0.0
    %142 = vmatpush1.msra.mxu0 0.0
    %143 = vmatprep.subr.mxu0 0.0
    %144 = vmatpush1.msra.mxu0 0.0
    %145 = vmatprep.subr.mxu0 0.0
    %146 = vmatpush1.msra.mxu0 0.0
    %147 = vmatprep.subr.mxu0 0.0
    %148 = vmatpush1.msra.mxu0 0.0
    %149 = vmatprep.subr.mxu0 0.0
    %150 = vmatpush1.msra.mxu0 0.0
    %151 = vmatprep.subr.mxu0 0.0
    %152 = vmatpush1.msra.mxu0 0.0
    %153 = vmatprep.subr.mxu0 0.0
    %154 = vmatpush1.msra.mxu0 0.0
    %155 = vmatprep.subr.mxu0 0.0
    %156 = vmatpush1.msra.mxu0 0.0
    %157 = vmatprep.subr.mxu0 0.0
    %158 = vmatpush1.msra.mxu0 0.0
    %159 = vmatprep.subr.mxu0 0.0
    %160 = vmatpush1.msra.mxu0 0.0
    %161 = vmatprep.subr.mxu0 0.0
    %162 = vmatpush1.msra.mxu0 0.0
    %163 = vmatprep.subr.mxu0 0.0
    %164 = vmatpush1.msra.mxu0 0.0
    %165 = vmatprep.mubr.f32.mxu0 0.0
    %166 = vmatmul.mubr.f32.gmra.mrb[0].mxu0 %v99
    %v167 = vpop.f32.mrb[0].mxu0
    %v168 = vadd.f32 0.0, %v167
    %v169 = vpop.f32.mrb[0].mxu0
    %170 = vdwg.mxu0
    %v171 = vadd.f32 %v96, %v168
    %v172 = vxor.u32 %v171, 2147483648
    %v173 = vmul.f32 %v172, 1.442695
    %v174 = vpow.pop %v173
    %v175 = vadd.f32 %v174, 1.0
    %v176 = vrcp.pop %v175
    %v177 = vmul.f32 1.0, %v176
    %178 = vrot.lane.b32.xlu0 %v87, 64
    %v179 = vpop.permute.xlu0 %178
    %v181 = vadd.f32 %v168, %v179
    %183 = vrot.lane.b32.xlu0 %v181, 64
    %v184 = vpop.permute.xlu0 %183
    %v186 = vmul.f32 %v177, %v184
    %188 = vrot.lane.b32.xlu0 %v186, 64
    %v189 = vpop.permute.xlu0 %188
    %v191 = vadd.f32 %v96, %v189
    %v192 = vtanh.pop %v191
    %v193 = vsub.f32 1.0, %v177
    %195 = vrot.lane.b32.xlu0 %v192, 96
    %v196 = vpop.permute.xlu0 %195
    %v198 = vmul.f32 %v193, %v196
    %199 = vrot.lane.b32.xlu0 %v94, 32
    %v200 = vpop.permute.xlu0 %199
    %v202 = vmul.f32 %v177, %v200
    %v203 = vadd.f32 %v198, %v202
    %205 = vrot.lane.b32.xlu0 %v203, 96
    %v206 = vpop.permute.xlu0 %205
    %vm208 = vcmask 254976
    %209 = vst.msk [vmem:[#allocation4] sm:$0x3] %vm208, %v206
    %s210 = scalar_lea.vmem %s62, 14
    %v211 = vld [vmem:[%s210] sm:$0x3]
    %v213 = vsel %vm97, %v95, 0
    %215 = vmatprep.subr.mxu0 0.0
    %216 = vmatpush1.msra.mxu0 %v78
    %217 = vmatprep.subr.mxu0 0.0
    %218 = vmatpush1.msra.mxu0 %v79
    %219 = vmatprep.subr.mxu0 0.0
    %220 = vmatpush1.msra.mxu0 %v80
    %221 = vmatprep.subr.mxu0 0.0
    %222 = vmatpush1.msra.mxu0 %v81
    %223 = vmatprep.subr.mxu0 0.0
    %224 = vmatpush1.msra.mxu0 0.0
    %225 = vmatprep.subr.mxu0 0.0
    %226 = vmatpush1.msra.mxu0 0.0
    %227 = vmatprep.subr.mxu0 0.0
    %228 = vmatpush1.msra.mxu0 0.0
    %229 = vmatprep.subr.mxu0 0.0
    %230 = vmatpush1.msra.mxu0 0.0
    %231 = vmatprep.subr.mxu0 0.0
    %232 = vmatpush1.msra.mxu0 0.0
    %233 = vmatprep.subr.mxu0 0.0
    %234 = vmatpush1.msra.mxu0 0.0
    %235 = vmatprep.subr.mxu0 0.0
    %236 = vmatpush1.msra.mxu0 0.0
    %237 = vmatprep.subr.mxu0 0.0
    %238 = vmatpush1.msra.mxu0 0.0
    %239 = vmatprep.subr.mxu0 0.0
    %240 = vmatpush1.msra.mxu0 0.0
    %241 = vmatprep.subr.mxu0 0.0
    %242 = vmatpush1.msra.mxu0 0.0
    %243 = vmatprep.subr.mxu0 0.0
    %244 = vmatpush1.msra.mxu0 0.0
    %245 = vmatprep.subr.mxu0 0.0
    %246 = vmatpush1.msra.mxu0 0.0
    %247 = vmatprep.subr.mxu0 0.0
    %248 = vmatpush1.msra.mxu0 0.0
    %249 = vmatprep.subr.mxu0 0.0
    %250 = vmatpush1.msra.mxu0 0.0
    %251 = vmatprep.subr.mxu0 0.0
    %252 = vmatpush1.msra.mxu0 0.0
    %253 = vmatprep.subr.mxu0 0.0
    %254 = vmatpush1.msra.mxu0 0.0
    %255 = vmatprep.subr.mxu0 0.0
    %256 = vmatpush1.msra.mxu0 0.0
    %257 = vmatprep.subr.mxu0 0.0
    %258 = vmatpush1.msra.mxu0 0.0
    %259 = vmatprep.subr.mxu0 0.0
    %260 = vmatpush1.msra.mxu0 0.0
    %261 = vmatprep.subr.mxu0 0.0
    %262 = vmatpush1.msra.mxu0 0.0
    %263 = vmatprep.subr.mxu0 0.0
    %264 = vmatpush1.msra.mxu0 0.0
    %265 = vmatprep.subr.mxu0 0.0
    %266 = vmatpush1.msra.mxu0 0.0
    %267 = vmatprep.subr.mxu0 0.0
    %268 = vmatpush1.msra.mxu0 0.0
    %269 = vmatprep.subr.mxu0 0.0
    %270 = vmatpush1.msra.mxu0 0.0
    %271 = vmatprep.subr.mxu0 0.0
    %272 = vmatpush1.msra.mxu0 0.0
    %273 = vmatprep.subr.mxu0 0.0
    %274 = vmatpush1.msra.mxu0 0.0
    %275 = vmatprep.subr.mxu0 0.0
    %276 = vmatpush1.msra.mxu0 0.0
    %277 = vmatprep.subr.mxu0 0.0
    %278 = vmatpush1.msra.mxu0 0.0
    %279 = vmatprep.mubr.f32.mxu0 0.0
    %280 = vmatmul.mubr.f32.gmra.mrb[0].mxu0 %v213
    %v281 = vpop.f32.mrb[0].mxu0
    %v282 = vadd.f32 0.0, %v281
    %v283 = vpop.f32.mrb[0].mxu0
    %284 = vdwg.mxu0
    %v285 = vadd.f32 %v211, %v282
    %v286 = vxor.u32 %v285, 2147483648
    %v287 = vmul.f32 %v286, 1.442695
    %v288 = vpow.pop %v287
    %v289 = vadd.f32 %v288, 1.0
    %v290 = vrcp.pop %v289
    %v291 = vmul.f32 1.0, %v290
    %292 = vrot.lane.b32.xlu0 %v93, 64
    %v293 = vpop.permute.xlu0 %292
    %v295 = vadd.f32 %v282, %v293
    %297 = vrot.lane.b32.xlu0 %v295, 64
    %v298 = vpop.permute.xlu0 %297
    %v300 = vmul.f32 %v291, %v298
    %302 = vrot.lane.b32.xlu0 %v300, 64
    %v303 = vpop.permute.xlu0 %302
    %v305 = vadd.f32 %v211, %v303
    %v306 = vtanh.pop %v305
    %v307 = vsub.f32 1.0, %v291
    %309 = vrot.lane.b32.xlu0 %v306, 96
    %v310 = vpop.permute.xlu0 %309
    %v312 = vmul.f32 %v307, %v310
    %313 = vrot.lane.b32.xlu0 %v95, 32
    %v314 = vpop.permute.xlu0 %313
    %v316 = vmul.f32 %v291, %v314
    %v317 = vadd.f32 %v312, %v316
    %319 = vrot.lane.b32.xlu0 %v317, 96
    %v320 = vpop.permute.xlu0 %319
    %s322 = scalar_lea.vmem [#allocation6], 14
    %323 = vst.msk [vmem:[%s322] sm:$0x3] %vm208, %v320
    %s324 = scalar_lea.vmem %s0, 2
    %v325 = vld [vmem:[%s324] sm:$0x3]
    %v326 = vsel %vm97, %v206, 0
    %328 = vmatprep.subr.mxu0 0.0
    %329 = vmatpush1.msra.mxu0 %v74
    %330 = vmatprep.subr.mxu0 0.0
    %331 = vmatpush1.msra.mxu0 %v75
    %332 = vmatprep.subr.mxu0 0.0
    %333 = vmatpush1.msra.mxu0 %v76
    %334 = vmatprep.subr.mxu0 0.0
    %335 = vmatpush1.msra.mxu0 %v77
    %336 = vmatprep.subr.mxu0 0.0
    %337 = vmatpush1.msra.mxu0 0.0
    %338 = vmatprep.subr.mxu0 0.0
    %339 = vmatpush1.msra.mxu0 0.0
    %340 = vmatprep.subr.mxu0 0.0
    %341 = vmatpush1.msra.mxu0 0.0
    %342 = vmatprep.subr.mxu0 0.0
    %343 = vmatpush1.msra.mxu0 0.0
    %344 = vmatprep.subr.mxu0 0.0
    %345 = vmatpush1.msra.mxu0 0.0
    %346 = vmatprep.subr.mxu0 0.0
    %347 = vmatpush1.msra.mxu0 0.0
    %348 = vmatprep.subr.mxu0 0.0
    %349 = vmatpush1.msra.mxu0 0.0
    %350 = vmatprep.subr.mxu0 0.0
    %351 = vmatpush1.msra.mxu0 0.0
    %352 = vmatprep.subr.mxu0 0.0
    %353 = vmatpush1.msra.mxu0 0.0
    %354 = vmatprep.subr.mxu0 0.0
    %355 = vmatpush1.msra.mxu0 0.0
    %356 = vmatprep.subr.mxu0 0.0
    %357 = vmatpush1.msra.mxu0 0.0
    %358 = vmatprep.subr.mxu0 0.0
    %359 = vmatpush1.msra.mxu0 0.0
    %360 = vmatprep.subr.mxu0 0.0
    %361 = vmatpush1.msra.mxu0 0.0
    %362 = vmatprep.subr.mxu0 0.0
    %363 = vmatpush1.msra.mxu0 0.0
    %364 = vmatprep.subr.mxu0 0.0
    %365 = vmatpush1.msra.mxu0 0.0
    %366 = vmatprep.subr.mxu0 0.0
    %367 = vmatpush1.msra.mxu0 0.0
    %368 = vmatprep.subr.mxu0 0.0
    %369 = vmatpush1.msra.mxu0 0.0
    %370 = vmatprep.subr.mxu0 0.0
    %371 = vmatpush1.msra.mxu0 0.0
    %372 = vmatprep.subr.mxu0 0.0
    %373 = vmatpush1.msra.mxu0 0.0
    %374 = vmatprep.subr.mxu0 0.0
    %375 = vmatpush1.msra.mxu0 0.0
    %376 = vmatprep.subr.mxu0 0.0
    %377 = vmatpush1.msra.mxu0 0.0
    %378 = vmatprep.subr.mxu0 0.0
    %379 = vmatpush1.msra.mxu0 0.0
    %380 = vmatprep.subr.mxu0 0.0
    %381 = vmatpush1.msra.mxu0 0.0
    %382 = vmatprep.subr.mxu0 0.0
    %383 = vmatpush1.msra.mxu0 0.0
    %384 = vmatprep.subr.mxu0 0.0
    %385 = vmatpush1.msra.mxu0 0.0
    %386 = vmatprep.subr.mxu0 0.0
    %387 = vmatpush1.msra.mxu0 0.0
    %388 = vmatprep.subr.mxu0 0.0
    %389 = vmatpush1.msra.mxu0 0.0
    %390 = vmatprep.subr.mxu0 0.0
    %391 = vmatpush1.msra.mxu0 0.0
    %392 = vmatprep.mubr.f32.mxu0 0.0
    %393 = vmatmul.mubr.f32.gmra.mrb[0].mxu0 %v326
    %v394 = vpop.f32.mrb[0].mxu0
    %v395 = vadd.f32 0.0, %v394
    %v396 = vpop.f32.mrb[0].mxu0
    %397 = vdwg.mxu0
    %v398 = vadd.f32 %v325, %v395
    %v399 = vxor.u32 %v398, 2147483648
    %v400 = vmul.f32 %v399, 1.442695
    %v401 = vpow.pop %v400
    %v402 = vadd.f32 %v401, 1.0
    %v403 = vrcp.pop %v402
    %v404 = vmul.f32 1.0, %v403
    %v405 = vadd.f32 %v395, %v179
    %407 = vrot.lane.b32.xlu0 %v405, 64
    %v408 = vpop.permute.xlu0 %407
    %v410 = vmul.f32 %v404, %v408
    %412 = vrot.lane.b32.xlu0 %v410, 64
    %v413 = vpop.permute.xlu0 %412
    %v415 = vadd.f32 %v325, %v413
    %v416 = vtanh.pop %v415
    %v417 = vsub.f32 1.0, %v404
    %419 = vrot.lane.b32.xlu0 %v416, 96
    %v420 = vpop.permute.xlu0 %419
    %v422 = vmul.f32 %v417, %v420
    %v423 = vmul.f32 %v404, %v203
    %v424 = vadd.f32 %v422, %v423
    %426 = vrot.lane.b32.xlu0 %v424, 96
    %v427 = vpop.permute.xlu0 %426
    %s429 = scalar_lea.vmem [#allocation4], 2
    %430 = vst.msk [vmem:[%s429] sm:$0x3] %vm208, %v427
    %s431 = scalar_lea.vmem %s62, 12
    %v432 = vld [vmem:[%s431] sm:$0x3]
    %v433 = vsel %vm97, %v320, 0
    %435 = vmatprep.subr.mxu0 0.0
    %436 = vmatpush1.msra.mxu0 %v78
    %437 = vmatprep.subr.mxu0 0.0
    %438 = vmatpush1.msra.mxu0 %v79
    %439 = vmatprep.subr.mxu0 0.0
    %440 = vmatpush1.msra.mxu0 %v80
    %441 = vmatprep.subr.mxu0 0.0
    %442 = vmatpush1.msra.mxu0 %v81
    %443 = vmatprep.subr.mxu0 0.0
    %444 = vmatpush1.msra.mxu0 0.0
    %445 = vmatprep.subr.mxu0 0.0
    %446 = vmatpush1.msra.mxu0 0.0
    %447 = vmatprep.subr.mxu0 0.0
    %448 = vmatpush1.msra.mxu0 0.0
    %449 = vmatprep.subr.mxu0 0.0
    %450 = vmatpush1.msra.mxu0 0.0
    %451 = vmatprep.subr.mxu0 0.0
    %452 = vmatpush1.msra.mxu0 0.0
    %453 = vmatprep.subr.mxu0 0.0
    %454 = vmatpush1.msra.mxu0 0.0
    %455 = vmatprep.subr.mxu0 0.0
    %456 = vmatpush1.msra.mxu0 0.0
    %457 = vmatprep.subr.mxu0 0.0
    %458 = vmatpush1.msra.mxu0 0.0
    %459 = vmatprep.subr.mxu0 0.0
    %460 = vmatpush1.msra.mxu0 0.0
    %461 = vmatprep.subr.mxu0 0.0
    %462 = vmatpush1.msra.mxu0 0.0
    %463 = vmatprep.subr.mxu0 0.0
    %464 = vmatpush1.msra.mxu0 0.0
    %465 = vmatprep.subr.mxu0 0.0
    %466 = vmatpush1.msra.mxu0 0.0
    %467 = vmatprep.subr.mxu0 0.0
    %468 = vmatpush1.msra.mxu0 0.0
    %469 = vmatprep.subr.mxu0 0.0
    %470 = vmatpush1.msra.mxu0 0.0
    %471 = vmatprep.subr.mxu0 0.0
    %472 = vmatpush1.msra.mxu0 0.0
    %473 = vmatprep.subr.mxu0 0.0
    %474 = vmatpush1.msra.mxu0 0.0
    %475 = vmatprep.subr.mxu0 0.0
    %476 = vmatpush1.msra.mxu0 0.0
    %477 = vmatprep.subr.mxu0 0.0
    %478 = vmatpush1.msra.mxu0 0.0
    %479 = vmatprep.subr.mxu0 0.0
    %480 = vmatpush1.msra.mxu0 0.0
    %481 = vmatprep.subr.mxu0 0.0
    %482 = vmatpush1.msra.mxu0 0.0
    %483 = vmatprep.subr.mxu0 0.0
    %484 = vmatpush1.msra.mxu0 0.0
    %485 = vmatprep.subr.mxu0 0.0
    %486 = vmatpush1.msra.mxu0 0.0
    %487 = vmatprep.subr.mxu0 0.0
    %488 = vmatpush1.msra.mxu0 0.0
    %489 = vmatprep.subr.mxu0 0.0
    %490 = vmatpush1.msra.mxu0 0.0
    %491 = vmatprep.subr.mxu0 0.0
    %492 = vmatpush1.msra.mxu0 0.0
    %493 = vmatprep.subr.mxu0 0.0
    %494 = vmatpush1.msra.mxu0 0.0
    %495 = vmatprep.subr.mxu0 0.0
    %496 = vmatpush1.msra.mxu0 0.0
    %497 = vmatprep.subr.mxu0 0.0
    %498 = vmatpush1.msra.mxu0 0.0
    %499 = vmatprep.mubr.f32.mxu0 0.0
    %500 = vmatmul.mubr.f32.gmra.mrb[0].mxu0 %v433
    %v501 = vpop.f32.mrb[0].mxu0
    %v502 = vadd.f32 0.0, %v501
    %v503 = vpop.f32.mrb[0].mxu0
    %504 = vdwg.mxu0
    %v505 = vadd.f32 %v432, %v502
    %v506 = vxor.u32 %v505, 2147483648
    %v507 = vmul.f32 %v506, 1.442695
    %v508 = vpow.pop %v507
    %v509 = vadd.f32 %v508, 1.0
    %v510 = vrcp.pop %v509
    %v511 = vmul.f32 1.0, %v510
    %v512 = vadd.f32 %v502, %v293
    %514 = vrot.lane.b32.xlu0 %v512, 64
    %v515 = vpop.permute.xlu0 %514
    %v517 = vmul.f32 %v511, %v515
    %519 = vrot.lane.b32.xlu0 %v517, 64
    %v520 = vpop.permute.xlu0 %519
    %v522 = vadd.f32 %v432, %v520
    %v523 = vtanh.pop %v522
    %v524 = vsub.f32 1.0, %v511
    %526 = vrot.lane.b32.xlu0 %v523, 96
    %v527 = vpop.permute.xlu0 %526
    %v529 = vmul.f32 %v524, %v527
    %v530 = vmul.f32 %v511, %v317
    %v531 = vadd.f32 %v529, %v530
    %533 = vrot.lane.b32.xlu0 %v531, 96
    %v534 = vpop.permute.xlu0 %533
    %s536 = scalar_lea.vmem [#allocation6], 12
    %537 = vst.msk [vmem:[%s536] sm:$0x3] %vm208, %v534
    %s538 = scalar_lea.vmem %s0, 4
    %v539 = vld [vmem:[%s538] sm:$0x3]
    %v540 = vsel %vm97, %v427, 0
    %542 = vmatprep.subr.mxu0 0.0
    %543 = vmatpush1.msra.mxu0 %v74
    %544 = vmatprep.subr.mxu0 0.0
    %545 = vmatpush1.msra.mxu0 %v75
    %546 = vmatprep.subr.mxu0 0.0
    %547 = vmatpush1.msra.mxu0 %v76
    %548 = vmatprep.subr.mxu0 0.0
    %549 = vmatpush1.msra.mxu0 %v77
    %550 = vmatprep.subr.mxu0 0.0
    %551 = vmatpush1.msra.mxu0 0.0
    %552 = vmatprep.subr.mxu0 0.0
    %553 = vmatpush1.msra.mxu0 0.0
    %554 = vmatprep.subr.mxu0 0.0
    %555 = vmatpush1.msra.mxu0 0.0
    %556 = vmatprep.subr.mxu0 0.0
    %557 = vmatpush1.msra.mxu0 0.0
    %558 = vmatprep.subr.mxu0 0.0
    %559 = vmatpush1.msra.mxu0 0.0
    %560 = vmatprep.subr.mxu0 0.0
    %561 = vmatpush1.msra.mxu0 0.0
    %562 = vmatprep.subr.mxu0 0.0
    %563 = vmatpush1.msra.mxu0 0.0
    %564 = vmatprep.subr.mxu0 0.0
    %565 = vmatpush1.msra.mxu0 0.0
    %566 = vmatprep.subr.mxu0 0.0
    %567 = vmatpush1.msra.mxu0 0.0
    %568 = vmatprep.subr.mxu0 0.0
    %569 = vmatpush1.msra.mxu0 0.0
    %570 = vmatprep.subr.mxu0 0.0
    %571 = vmatpush1.msra.mxu0 0.0
    %572 = vmatprep.subr.mxu0 0.0
    %573 = vmatpush1.msra.mxu0 0.0
    %574 = vmatprep.subr.mxu0 0.0
    %575 = vmatpush1.msra.mxu0 0.0
    %576 = vmatprep.subr.mxu0 0.0
    %577 = vmatpush1.msra.mxu0 0.0
    %578 = vmatprep.subr.mxu0 0.0
    %579 = vmatpush1.msra.mxu0 0.0
    %580 = vmatprep.subr.mxu0 0.0
    %581 = vmatpush1.msra.mxu0 0.0
    %582 = vmatprep.subr.mxu0 0.0
    %583 = vmatpush1.msra.mxu0 0.0
    %584 = vmatprep.subr.mxu0 0.0
    %585 = vmatpush1.msra.mxu0 0.0
    %586 = vmatprep.subr.mxu0 0.0
    %587 = vmatpush1.msra.mxu0 0.0
    %588 = vmatprep.subr.mxu0 0.0
    %589 = vmatpush1.msra.mxu0 0.0
    %590 = vmatprep.subr.mxu0 0.0
    %591 = vmatpush1.msra.mxu0 0.0
    %592 = vmatprep.subr.mxu0 0.0
    %593 = vmatpush1.msra.mxu0 0.0
    %594 = vmatprep.subr.mxu0 0.0
    %595 = vmatpush1.msra.mxu0 0.0
    %596 = vmatprep.subr.mxu0 0.0
    %597 = vmatpush1.msra.mxu0 0.0
    %598 = vmatprep.subr.mxu0 0.0
    %599 = vmatpush1.msra.mxu0 0.0
    %600 = vmatprep.subr.mxu0 0.0
    %601 = vmatpush1.msra.mxu0 0.0
    %602 = vmatprep.subr.mxu0 0.0
    %603 = vmatpush1.msra.mxu0 0.0
    %604 = vmatprep.subr.mxu0 0.0
    %605 = vmatpush1.msra.mxu0 0.0
    %606 = vmatprep.mubr.f32.mxu0 0.0
    %607 = vmatmul.mubr.f32.gmra.mrb[0].mxu0 %v540
    %v608 = vpop.f32.mrb[0].mxu0
    %v609 = vadd.f32 0.0, %v608
    %v610 = vpop.f32.mrb[0].mxu0
    %611 = vdwg.mxu0
    %v612 = vadd.f32 %v539, %v609
    %v613 = vxor.u32 %v612, 2147483648
    %v614 = vmul.f32 %v613, 1.442695
    %v615 = vpow.pop %v614
    %v616 = vadd.f32 %v615, 1.0
    %v617 = vrcp.pop %v616
    %v618 = vmul.f32 1.0, %v617
    %v619 = vadd.f32 %v609, %v179
    %621 = vrot.lane.b32.xlu0 %v619, 64
    %v622 = vpop.permute.xlu0 %621
    %v624 = vmul.f32 %v618, %v622
    %626 = vrot.lane.b32.xlu0 %v624, 64
    %v627 = vpop.permute.xlu0 %626
    %v629 = vadd.f32 %v539, %v627
    %v630 = vtanh.pop %v629
    %v631 = vsub.f32 1.0, %v618
    %633 = vrot.lane.b32.xlu0 %v630, 96
    %v634 = vpop.permute.xlu0 %633
    %v636 = vmul.f32 %v631, %v634
    %v637 = vmul.f32 %v618, %v424
    %v638 = vadd.f32 %v636, %v637
    %640 = vrot.lane.b32.xlu0 %v638, 96
    %v641 = vpop.permute.xlu0 %640
    %s643 = scalar_lea.vmem [#allocation4], 4
    %644 = vst.msk [vmem:[%s643] sm:$0x3] %vm208, %v641
    %s645 = scalar_lea.vmem %s62, 10
    %v646 = vld [vmem:[%s645] sm:$0x3]
    %v647 = vsel %vm97, %v534, 0
    %649 = vmatprep.subr.mxu0 0.0
    %650 = vmatpush1.msra.mxu0 %v78
    %651 = vmatprep.subr.mxu0 0.0
    %652 = vmatpush1.msra.mxu0 %v79
    %653 = vmatprep.subr.mxu0 0.0
    %654 = vmatpush1.msra.mxu0 %v80
    %655 = vmatprep.subr.mxu0 0.0
    %656 = vmatpush1.msra.mxu0 %v81
    %657 = vmatprep.subr.mxu0 0.0
    %658 = vmatpush1.msra.mxu0 0.0
    %659 = vmatprep.subr.mxu0 0.0
    %660 = vmatpush1.msra.mxu0 0.0
    %661 = vmatprep.subr.mxu0 0.0
    %662 = vmatpush1.msra.mxu0 0.0
    %663 = vmatprep.subr.mxu0 0.0
    %664 = vmatpush1.msra.mxu0 0.0
    %665 = vmatprep.subr.mxu0 0.0
    %666 = vmatpush1.msra.mxu0 0.0
    %667 = vmatprep.subr.mxu0 0.0
    %668 = vmatpush1.msra.mxu0 0.0
    %669 = vmatprep.subr.mxu0 0.0
    %670 = vmatpush1.msra.mxu0 0.0
    %671 = vmatprep.subr.mxu0 0.0
    %672 = vmatpush1.msra.mxu0 0.0
    %673 = vmatprep.subr.mxu0 0.0
    %674 = vmatpush1.msra.mxu0 0.0
    %675 = vmatprep.subr.mxu0 0.0
    %676 = vmatpush1.msra.mxu0 0.0
    %677 = vmatprep.subr.mxu0 0.0
    %678 = vmatpush1.msra.mxu0 0.0
    %679 = vmatprep.subr.mxu0 0.0
    %680 = vmatpush1.msra.mxu0 0.0
    %681 = vmatprep.subr.mxu0 0.0
    %682 = vmatpush1.msra.mxu0 0.0
    %683 = vmatprep.subr.mxu0 0.0
    %684 = vmatpush1.msra.mxu0 0.0
    %685 = vmatprep.subr.mxu0 0.0
    %686 = vmatpush1.msra.mxu0 0.0
    %687 = vmatprep.subr.mxu0 0.0
    %688 = vmatpush1.msra.mxu0 0.0
    %689 = vmatprep.subr.mxu0 0.0
    %690 = vmatpush1.msra.mxu0 0.0
    %691 = vmatprep.subr.mxu0 0.0
    %692 = vmatpush1.msra.mxu0 0.0
    %693 = vmatprep.subr.mxu0 0.0
    %694 = vmatpush1.msra.mxu0 0.0
    %695 = vmatprep.subr.mxu0 0.0
    %696 = vmatpush1.msra.mxu0 0.0
    %697 = vmatprep.subr.mxu0 0.0
    %698 = vmatpush1.msra.mxu0 0.0
    %699 = vmatprep.subr.mxu0 0.0
    %700 = vmatpush1.msra.mxu0 0.0
    %701 = vmatprep.subr.mxu0 0.0
    %702 = vmatpush1.msra.mxu0 0.0
    %703 = vmatprep.subr.mxu0 0.0
    %704 = vmatpush1.msra.mxu0 0.0
    %705 = vmatprep.subr.mxu0 0.0
    %706 = vmatpush1.msra.mxu0 0.0
    %707 = vmatprep.subr.mxu0 0.0
    %708 = vmatpush1.msra.mxu0 0.0
    %709 = vmatprep.subr.mxu0 0.0
    %710 = vmatpush1.msra.mxu0 0.0
    %711 = vmatprep.subr.mxu0 0.0
    %712 = vmatpush1.msra.mxu0 0.0
    %713 = vmatprep.mubr.f32.mxu0 0.0
    %714 = vmatmul.mubr.f32.gmra.mrb[0].mxu0 %v647
    %v715 = vpop.f32.mrb[0].mxu0
    %v716 = vadd.f32 0.0, %v715
    %v717 = vpop.f32.mrb[0].mxu0
    %718 = vdwg.mxu0
    %v719 = vadd.f32 %v646, %v716
    %v720 = vxor.u32 %v719, 2147483648
    %v721 = vmul.f32 %v720, 1.442695
    %v722 = vpow.pop %v721
    %v723 = vadd.f32 %v722, 1.0
    %v724 = vrcp.pop %v723
    %v725 = vmul.f32 1.0, %v724
    %v726 = vadd.f32 %v716, %v293
    %728 = vrot.lane.b32.xlu0 %v726, 64
    %v729 = vpop.permute.xlu0 %728
    %v731 = vmul.f32 %v725, %v729
    %733 = vrot.lane.b32.xlu0 %v731, 64
    %v734 = vpop.permute.xlu0 %733
    %v736 = vadd.f32 %v646, %v734
    %v737 = vtanh.pop %v736
    %v738 = vsub.f32 1.0, %v725
    %740 = vrot.lane.b32.xlu0 %v737, 96
    %v741 = vpop.permute.xlu0 %740
    %v743 = vmul.f32 %v738, %v741
    %v744 = vmul.f32 %v725, %v531
    %v745 = vadd.f32 %v743, %v744
    %747 = vrot.lane.b32.xlu0 %v745, 96
    %v748 = vpop.permute.xlu0 %747
    %s750 = scalar_lea.vmem [#allocation6], 10
    %751 = vst.msk [vmem:[%s750] sm:$0x3] %vm208, %v748
    %s752 = scalar_lea.vmem %s0, 6
    %v753 = vld [vmem:[%s752] sm:$0x3]
    %v754 = vsel %vm97, %v641, 0
    %756 = vmatprep.subr.mxu0 0.0
    %757 = vmatpush1.msra.mxu0 %v74
    %758 = vmatprep.subr.mxu0 0.0
    %759 = vmatpush1.msra.mxu0 %v75
    %760 = vmatprep.subr.mxu0 0.0
    %761 = vmatpush1.msra.mxu0 %v76
    %762 = vmatprep.subr.mxu0 0.0
    %763 = vmatpush1.msra.mxu0 %v77
    %764 = vmatprep.subr.mxu0 0.0
    %765 = vmatpush1.msra.mxu0 0.0
    %766 = vmatprep.subr.mxu0 0.0
    %767 = vmatpush1.msra.mxu0 0.0
    %768 = vmatprep.subr.mxu0 0.0
    %769 = vmatpush1.msra.mxu0 0.0
    %770 = vmatprep.subr.mxu0 0.0
    %771 = vmatpush1.msra.mxu0 0.0
    %772 = vmatprep.subr.mxu0 0.0
    %773 = vmatpush1.msra.mxu0 0.0
    %774 = vmatprep.subr.mxu0 0.0
    %775 = vmatpush1.msra.mxu0 0.0
    %776 = vmatprep.subr.mxu0 0.0
    %777 = vmatpush1.msra.mxu0 0.0
    %778 = vmatprep.subr.mxu0 0.0
    %779 = vmatpush1.msra.mxu0 0.0
    %780 = vmatprep.subr.mxu0 0.0
    %781 = vmatpush1.msra.mxu0 0.0
    %782 = vmatprep.subr.mxu0 0.0
    %783 = vmatpush1.msra.mxu0 0.0
    %784 = vmatprep.subr.mxu0 0.0
    %785 = vmatpush1.msra.mxu0 0.0
    %786 = vmatprep.subr.mxu0 0.0
    %787 = vmatpush1.msra.mxu0 0.0
    %788 = vmatprep.subr.mxu0 0.0
    %789 = vmatpush1.msra.mxu0 0.0
    %790 = vmatprep.subr.mxu0 0.0
    %791 = vmatpush1.msra.mxu0 0.0
    %792 = vmatprep.subr.mxu0 0.0
    %793 = vmatpush1.msra.mxu0 0.0
    %794 = vmatprep.subr.mxu0 0.0
    %795 = vmatpush1.msra.mxu0 0.0
    %796 = vmatprep.subr.mxu0 0.0
    %797 = vmatpush1.msra.mxu0 0.0
    %798 = vmatprep.subr.mxu0 0.0
    %799 = vmatpush1.msra.mxu0 0.0
    %800 = vmatprep.subr.mxu0 0.0
    %801 = vmatpush1.msra.mxu0 0.0
    %802 = vmatprep.subr.mxu0 0.0
    %803 = vmatpush1.msra.mxu0 0.0
    %804 = vmatprep.subr.mxu0 0.0
    %805 = vmatpush1.msra.mxu0 0.0
    %806 = vmatprep.subr.mxu0 0.0
    %807 = vmatpush1.msra.mxu0 0.0
    %808 = vmatprep.subr.mxu0 0.0
    %809 = vmatpush1.msra.mxu0 0.0
    %810 = vmatprep.subr.mxu0 0.0
    %811 = vmatpush1.msra.mxu0 0.0
    %812 = vmatprep.subr.mxu0 0.0
    %813 = vmatpush1.msra.mxu0 0.0
    %814 = vmatprep.subr.mxu0 0.0
    %815 = vmatpush1.msra.mxu0 0.0
    %816 = vmatprep.subr.mxu0 0.0
    %817 = vmatpush1.msra.mxu0 0.0
    %818 = vmatprep.subr.mxu0 0.0
    %819 = vmatpush1.msra.mxu0 0.0
    %820 = vmatprep.mubr.f32.mxu0 0.0
    %821 = vmatmul.mubr.f32.gmra.mrb[0].mxu0 %v754
    %v822 = vpop.f32.mrb[0].mxu0
    %v823 = vadd.f32 0.0, %v822
    %v824 = vpop.f32.mrb[0].mxu0
    %825 = vdwg.mxu0
    %v826 = vadd.f32 %v753, %v823
    %v827 = vxor.u32 %v826, 2147483648
    %v828 = vmul.f32 %v827, 1.442695
    %v829 = vpow.pop %v828
    %v830 = vadd.f32 %v829, 1.0
    %v831 = vrcp.pop %v830
    %v832 = vmul.f32 1.0, %v831
    %v833 = vadd.f32 %v823, %v179
    %835 = vrot.lane.b32.xlu0 %v833, 64
    %v836 = vpop.permute.xlu0 %835
    %v838 = vmul.f32 %v832, %v836
    %840 = vrot.lane.b32.xlu0 %v838, 64
    %v841 = vpop.permute.xlu0 %840
    %v843 = vadd.f32 %v753, %v841
    %v844 = vtanh.pop %v843
    %v845 = vsub.f32 1.0, %v832
    %847 = vrot.lane.b32.xlu0 %v844, 96
    %v848 = vpop.permute.xlu0 %847
    %v850 = vmul.f32 %v845, %v848
    %v851 = vmul.f32 %v832, %v638
    %v852 = vadd.f32 %v850, %v851
    %854 = vrot.lane.b32.xlu0 %v852, 96
    %v855 = vpop.permute.xlu0 %854
    %s857 = scalar_lea.vmem [#allocation4], 6
    %858 = vst.msk [vmem:[%s857] sm:$0x3] %vm208, %v855
    %s859 = scalar_lea.vmem %s62, 8
    %v860 = vld [vmem:[%s859] sm:$0x3]
    %v861 = vsel %vm97, %v748, 0
    %863 = vmatprep.subr.mxu0 0.0
    %864 = vmatpush1.msra.mxu0 %v78
    %865 = vmatprep.subr.mxu0 0.0
    %866 = vmatpush1.msra.mxu0 %v79
    %867 = vmatprep.subr.mxu0 0.0
    %868 = vmatpush1.msra.mxu0 %v80
    %869 = vmatprep.subr.mxu0 0.0
    %870 = vmatpush1.msra.mxu0 %v81
    %871 = vmatprep.subr.mxu0 0.0
    %872 = vmatpush1.msra.mxu0 0.0
    %873 = vmatprep.subr.mxu0 0.0
    %874 = vmatpush1.msra.mxu0 0.0
    %875 = vmatprep.subr.mxu0 0.0
    %876 = vmatpush1.msra.mxu0 0.0
    %877 = vmatprep.subr.mxu0 0.0
    %878 = vmatpush1.msra.mxu0 0.0
    %879 = vmatprep.subr.mxu0 0.0
    %880 = vmatpush1.msra.mxu0 0.0
    %881 = vmatprep.subr.mxu0 0.0
    %882 = vmatpush1.msra.mxu0 0.0
    %883 = vmatprep.subr.mxu0 0.0
    %884 = vmatpush1.msra.mxu0 0.0
    %885 = vmatprep.subr.mxu0 0.0
    %886 = vmatpush1.msra.mxu0 0.0
    %887 = vmatprep.subr.mxu0 0.0
    %888 = vmatpush1.msra.mxu0 0.0
    %889 = vmatprep.subr.mxu0 0.0
    %890 = vmatpush1.msra.mxu0 0.0
    %891 = vmatprep.subr.mxu0 0.0
    %892 = vmatpush1.msra.mxu0 0.0
    %893 = vmatprep.subr.mxu0 0.0
    %894 = vmatpush1.msra.mxu0 0.0
    %895 = vmatprep.subr.mxu0 0.0
    %896 = vmatpush1.msra.mxu0 0.0
    %897 = vmatprep.subr.mxu0 0.0
    %898 = vmatpush1.msra.mxu0 0.0
    %899 = vmatprep.subr.mxu0 0.0
    %900 = vmatpush1.msra.mxu0 0.0
    %901 = vmatprep.subr.mxu0 0.0
    %902 = vmatpush1.msra.mxu0 0.0
    %903 = vmatprep.subr.mxu0 0.0
    %904 = vmatpush1.msra.mxu0 0.0
    %905 = vmatprep.subr.mxu0 0.0
    %906 = vmatpush1.msra.mxu0 0.0
    %907 = vmatprep.subr.mxu0 0.0
    %908 = vmatpush1.msra.mxu0 0.0
    %909 = vmatprep.subr.mxu0 0.0
    %910 = vmatpush1.msra.mxu0 0.0
    %911 = vmatprep.subr.mxu0 0.0
    %912 = vmatpush1.msra.mxu0 0.0
    %913 = vmatprep.subr.mxu0 0.0
    %914 = vmatpush1.msra.mxu0 0.0
    %915 = vmatprep.subr.mxu0 0.0
    %916 = vmatpush1.msra.mxu0 0.0
    %917 = vmatprep.subr.mxu0 0.0
    %918 = vmatpush1.msra.mxu0 0.0
    %919 = vmatprep.subr.mxu0 0.0
    %920 = vmatpush1.msra.mxu0 0.0
    %921 = vmatprep.subr.mxu0 0.0
    %922 = vmatpush1.msra.mxu0 0.0
    %923 = vmatprep.subr.mxu0 0.0
    %924 = vmatpush1.msra.mxu0 0.0
    %925 = vmatprep.subr.mxu0 0.0
    %926 = vmatpush1.msra.mxu0 0.0
    %927 = vmatprep.mubr.f32.mxu0 0.0
    %928 = vmatmul.mubr.f32.gmra.mrb[0].mxu0 %v861
    %v929 = vpop.f32.mrb[0].mxu0
    %v930 = vadd.f32 0.0, %v929
    %v931 = vpop.f32.mrb[0].mxu0
    %932 = vdwg.mxu0
    %v933 = vadd.f32 %v860, %v930
    %v934 = vxor.u32 %v933, 2147483648
    %v935 = vmul.f32 %v934, 1.442695
    %v936 = vpow.pop %v935
    %v937 = vadd.f32 %v936, 1.0
    %v938 = vrcp.pop %v937
    %v939 = vmul.f32 1.0, %v938
    %v940 = vadd.f32 %v930, %v293
    %942 = vrot.lane.b32.xlu0 %v940, 64
    %v943 = vpop.permute.xlu0 %942
    %v945 = vmul.f32 %v939, %v943
    %947 = vrot.lane.b32.xlu0 %v945, 64
    %v948 = vpop.permute.xlu0 %947
    %v950 = vadd.f32 %v860, %v948
    %v951 = vtanh.pop %v950
    %v952 = vsub.f32 1.0, %v939
    %954 = vrot.lane.b32.xlu0 %v951, 96
    %v955 = vpop.permute.xlu0 %954
    %v957 = vmul.f32 %v952, %v955
    %v958 = vmul.f32 %v939, %v745
    %v959 = vadd.f32 %v957, %v958
    %961 = vrot.lane.b32.xlu0 %v959, 96
    %v962 = vpop.permute.xlu0 %961
    %s964 = scalar_lea.vmem [#allocation6], 8
    %965 = vst.msk [vmem:[%s964] sm:$0x3] %vm208, %v962
    %s966 = scalar_lea.vmem %s0, 8
    %v967 = vld [vmem:[%s966] sm:$0x3]
    %v968 = vsel %vm97, %v855, 0
    %970 = vmatprep.subr.mxu0 0.0
    %971 = vmatpush1.msra.mxu0 %v74
    %972 = vmatprep.subr.mxu0 0.0
    %973 = vmatpush1.msra.mxu0 %v75
    %974 = vmatprep.subr.mxu0 0.0
    %975 = vmatpush1.msra.mxu0 %v76
    %976 = vmatprep.subr.mxu0 0.0
    %977 = vmatpush1.msra.mxu0 %v77
    %978 = vmatprep.subr.mxu0 0.0
    %979 = vmatpush1.msra.mxu0 0.0
    %980 = vmatprep.subr.mxu0 0.0
    %981 = vmatpush1.msra.mxu0 0.0
    %982 = vmatprep.subr.mxu0 0.0
    %983 = vmatpush1.msra.mxu0 0.0
    %984 = vmatprep.subr.mxu0 0.0
    %985 = vmatpush1.msra.mxu0 0.0
    %986 = vmatprep.subr.mxu0 0.0
    %987 = vmatpush1.msra.mxu0 0.0
    %988 = vmatprep.subr.mxu0 0.0
    %989 = vmatpush1.msra.mxu0 0.0
    %990 = vmatprep.subr.mxu0 0.0
    %991 = vmatpush1.msra.mxu0 0.0
    %992 = vmatprep.subr.mxu0 0.0
    %993 = vmatpush1.msra.mxu0 0.0
    %994 = vmatprep.subr.mxu0 0.0
    %995 = vmatpush1.msra.mxu0 0.0
    %996 = vmatprep.subr.mxu0 0.0
    %997 = vmatpush1.msra.mxu0 0.0
    %998 = vmatprep.subr.mxu0 0.0
    %999 = vmatpush1.msra.mxu0 0.0
    %1000 = vmatprep.subr.mxu0 0.0
    %1001 = vmatpush1.msra.mxu0 0.0
    %1002 = vmatprep.subr.mxu0 0.0
    %1003 = vmatpush1.msra.mxu0 0.0
    %1004 = vmatprep.subr.mxu0 0.0
    %1005 = vmatpush1.msra.mxu0 0.0
    %1006 = vmatprep.subr.mxu0 0.0
    %1007 = vmatpush1.msra.mxu0 0.0
    %1008 = vmatprep.subr.mxu0 0.0
    %1009 = vmatpush1.msra.mxu0 0.0
    %1010 = vmatprep.subr.mxu0 0.0
    %1011 = vmatpush1.msra.mxu0 0.0
    %1012 = vmatprep.subr.mxu0 0.0
    %1013 = vmatpush1.msra.mxu0 0.0
    %1014 = vmatprep.subr.mxu0 0.0
    %1015 = vmatpush1.msra.mxu0 0.0
    %1016 = vmatprep.subr.mxu0 0.0
    %1017 = vmatpush1.msra.mxu0 0.0
    %1018 = vmatprep.subr.mxu0 0.0
    %1019 = vmatpush1.msra.mxu0 0.0
    %1020 = vmatprep.subr.mxu0 0.0
    %1021 = vmatpush1.msra.mxu0 0.0
    %1022 = vmatprep.subr.mxu0 0.0
    %1023 = vmatpush1.msra.mxu0 0.0
    %1024 = vmatprep.subr.mxu0 0.0
    %1025 = vmatpush1.msra.mxu0 0.0
    %1026 = vmatprep.subr.mxu0 0.0
    %1027 = vmatpush1.msra.mxu0 0.0
    %1028 = vmatprep.subr.mxu0 0.0
    %1029 = vmatpush1.msra.mxu0 0.0
    %1030 = vmatprep.subr.mxu0 0.0
    %1031 = vmatpush1.msra.mxu0 0.0
    %1032 = vmatprep.subr.mxu0 0.0
    %1033 = vmatpush1.msra.mxu0 0.0
    %1034 = vmatprep.mubr.f32.mxu0 0.0
    %1035 = vmatmul.mubr.f32.gmra.mrb[0].mxu0 %v968
    %v1036 = vpop.f32.mrb[0].mxu0
    %v1037 = vadd.f32 0.0, %v1036
    %v1038 = vpop.f32.mrb[0].mxu0
    %1039 = vdwg.mxu0
    %v1040 = vadd.f32 %v967, %v1037
    %v1041 = vxor.u32 %v1040, 2147483648
    %v1042 = vmul.f32 %v1041, 1.442695
    %v1043 = vpow.pop %v1042
    %v1044 = vadd.f32 %v1043, 1.0
    %v1045 = vrcp.pop %v1044
    %v1046 = vmul.f32 1.0, %v1045
    %v1047 = vadd.f32 %v1037, %v179
    %1049 = vrot.lane.b32.xlu0 %v1047, 64
    %v1050 = vpop.permute.xlu0 %1049
    %v1052 = vmul.f32 %v1046, %v1050
    %1054 = vrot.lane.b32.xlu0 %v1052, 64
    %v1055 = vpop.permute.xlu0 %1054
    %v1057 = vadd.f32 %v967, %v1055
    %v1058 = vtanh.pop %v1057
    %v1059 = vsub.f32 1.0, %v1046
    %1061 = vrot.lane.b32.xlu0 %v1058, 96
    %v1062 = vpop.permute.xlu0 %1061
    %v1064 = vmul.f32 %v1059, %v1062
    %v1065 = vmul.f32 %v1046, %v852
    %v1066 = vadd.f32 %v1064, %v1065
    %1068 = vrot.lane.b32.xlu0 %v1066, 96
    %v1069 = vpop.permute.xlu0 %1068
    %s1071 = scalar_lea.vmem [#allocation4], 8
    %1072 = vst.msk [vmem:[%s1071] sm:$0x3] %vm208, %v1069
    %s1073 = scalar_lea.vmem %s62, 6
    %v1074 = vld [vmem:[%s1073] sm:$0x3]
    %v1075 = vsel %vm97, %v962, 0
    %1077 = vmatprep.subr.mxu0 0.0
    %1078 = vmatpush1.msra.mxu0 %v78
    %1079 = vmatprep.subr.mxu0 0.0
    %1080 = vmatpush1.msra.mxu0 %v79
    %1081 = vmatprep.subr.mxu0 0.0
    %1082 = vmatpush1.msra.mxu0 %v80
    %1083 = vmatprep.subr.mxu0 0.0
    %1084 = vmatpush1.msra.mxu0 %v81
    %1085 = vmatprep.subr.mxu0 0.0
    %1086 = vmatpush1.msra.mxu0 0.0
    %1087 = vmatprep.subr.mxu0 0.0
    %1088 = vmatpush1.msra.mxu0 0.0
    %1089 = vmatprep.subr.mxu0 0.0
    %1090 = vmatpush1.msra.mxu0 0.0
    %1091 = vmatprep.subr.mxu0 0.0
    %1092 = vmatpush1.msra.mxu0 0.0
    %1093 = vmatprep.subr.mxu0 0.0
    %1094 = vmatpush1.msra.mxu0 0.0
    %1095 = vmatprep.subr.mxu0 0.0
    %1096 = vmatpush1.msra.mxu0 0.0
    %1097 = vmatprep.subr.mxu0 0.0
    %1098 = vmatpush1.msra.mxu0 0.0
    %1099 = vmatprep.subr.mxu0 0.0
    %1100 = vmatpush1.msra.mxu0 0.0
    %1101 = vmatprep.subr.mxu0 0.0
    %1102 = vmatpush1.msra.mxu0 0.0
    %1103 = vmatprep.subr.mxu0 0.0
    %1104 = vmatpush1.msra.mxu0 0.0
    %1105 = vmatprep.subr.mxu0 0.0
    %1106 = vmatpush1.msra.mxu0 0.0
    %1107 = vmatprep.subr.mxu0 0.0
    %1108 = vmatpush1.msra.mxu0 0.0
    %1109 = vmatprep.subr.mxu0 0.0
    %1110 = vmatpush1.msra.mxu0 0.0
    %1111 = vmatprep.subr.mxu0 0.0
    %1112 = vmatpush1.msra.mxu0 0.0
    %1113 = vmatprep.subr.mxu0 0.0
    %1114 = vmatpush1.msra.mxu0 0.0
    %1115 = vmatprep.subr.mxu0 0.0
    %1116 = vmatpush1.msra.mxu0 0.0
    %1117 = vmatprep.subr.mxu0 0.0
    %1118 = vmatpush1.msra.mxu0 0.0
    %1119 = vmatprep.subr.mxu0 0.0
    %1120 = vmatpush1.msra.mxu0 0.0
    %1121 = vmatprep.subr.mxu0 0.0
    %1122 = vmatpush1.msra.mxu0 0.0
    %1123 = vmatprep.subr.mxu0 0.0
    %1124 = vmatpush1.msra.mxu0 0.0
    %1125 = vmatprep.subr.mxu0 0.0
    %1126 = vmatpush1.msra.mxu0 0.0
    %1127 = vmatprep.subr.mxu0 0.0
    %1128 = vmatpush1.msra.mxu0 0.0
    %1129 = vmatprep.subr.mxu0 0.0
    %1130 = vmatpush1.msra.mxu0 0.0
    %1131 = vmatprep.subr.mxu0 0.0
    %1132 = vmatpush1.msra.mxu0 0.0
    %1133 = vmatprep.subr.mxu0 0.0
    %1134 = vmatpush1.msra.mxu0 0.0
    %1135 = vmatprep.subr.mxu0 0.0
    %1136 = vmatpush1.msra.mxu0 0.0
    %1137 = vmatprep.subr.mxu0 0.0
    %1138 = vmatpush1.msra.mxu0 0.0
    %1139 = vmatprep.subr.mxu0 0.0
    %1140 = vmatpush1.msra.mxu0 0.0
    %1141 = vmatprep.mubr.f32.mxu0 0.0
    %1142 = vmatmul.mubr.f32.gmra.mrb[0].mxu0 %v1075
    %v1143 = vpop.f32.mrb[0].mxu0
    %v1144 = vadd.f32 0.0, %v1143
    %v1145 = vpop.f32.mrb[0].mxu0
    %1146 = vdwg.mxu0
    %v1147 = vadd.f32 %v1074, %v1144
    %v1148 = vxor.u32 %v1147, 2147483648
    %v1149 = vmul.f32 %v1148, 1.442695
    %v1150 = vpow.pop %v1149
    %v1151 = vadd.f32 %v1150, 1.0
    %v1152 = vrcp.pop %v1151
    %v1153 = vmul.f32 1.0, %v1152
    %v1154 = vadd.f32 %v1144, %v293
    %1156 = vrot.lane.b32.xlu0 %v1154, 64
    %v1157 = vpop.permute.xlu0 %1156
    %v1159 = vmul.f32 %v1153, %v1157
    %1161 = vrot.lane.b32.xlu0 %v1159, 64
    %v1162 = vpop.permute.xlu0 %1161
    %v1164 = vadd.f32 %v1074, %v1162
    %v1165 = vtanh.pop %v1164
    %v1166 = vsub.f32 1.0, %v1153
    %1168 = vrot.lane.b32.xlu0 %v1165, 96
    %v1169 = vpop.permute.xlu0 %1168
    %v1171 = vmul.f32 %v1166, %v1169
    %v1172 = vmul.f32 %v1153, %v959
    %v1173 = vadd.f32 %v1171, %v1172
    %1175 = vrot.lane.b32.xlu0 %v1173, 96
    %v1176 = vpop.permute.xlu0 %1175
    %s1178 = scalar_lea.vmem [#allocation6], 6
    %1179 = vst.msk [vmem:[%s1178] sm:$0x3] %vm208, %v1176
    %s1180 = scalar_lea.vmem %s0, 10
    %v1181 = vld [vmem:[%s1180] sm:$0x3]
    %v1182 = vsel %vm97, %v1069, 0
    %1184 = vmatprep.subr.mxu0 0.0
    %1185 = vmatpush1.msra.mxu0 %v74
    %1186 = vmatprep.subr.mxu0 0.0
    %1187 = vmatpush1.msra.mxu0 %v75
    %1188 = vmatprep.subr.mxu0 0.0
    %1189 = vmatpush1.msra.mxu0 %v76
    %1190 = vmatprep.subr.mxu0 0.0
    %1191 = vmatpush1.msra.mxu0 %v77
    %1192 = vmatprep.subr.mxu0 0.0
    %1193 = vmatpush1.msra.mxu0 0.0
    %1194 = vmatprep.subr.mxu0 0.0
    %1195 = vmatpush1.msra.mxu0 0.0
    %1196 = vmatprep.subr.mxu0 0.0
    %1197 = vmatpush1.msra.mxu0 0.0
    %1198 = vmatprep.subr.mxu0 0.0
    %1199 = vmatpush1.msra.mxu0 0.0
    %1200 = vmatprep.subr.mxu0 0.0
    %1201 = vmatpush1.msra.mxu0 0.0
    %1202 = vmatprep.subr.mxu0 0.0
    %1203 = vmatpush1.msra.mxu0 0.0
    %1204 = vmatprep.subr.mxu0 0.0
    %1205 = vmatpush1.msra.mxu0 0.0
    %1206 = vmatprep.subr.mxu0 0.0
    %1207 = vmatpush1.msra.mxu0 0.0
    %1208 = vmatprep.subr.mxu0 0.0
    %1209 = vmatpush1.msra.mxu0 0.0
    %1210 = vmatprep.subr.mxu0 0.0
    %1211 = vmatpush1.msra.mxu0 0.0
    %1212 = vmatprep.subr.mxu0 0.0
    %1213 = vmatpush1.msra.mxu0 0.0
    %1214 = vmatprep.subr.mxu0 0.0
    %1215 = vmatpush1.msra.mxu0 0.0
    %1216 = vmatprep.subr.mxu0 0.0
    %1217 = vmatpush1.msra.mxu0 0.0
    %1218 = vmatprep.subr.mxu0 0.0
    %1219 = vmatpush1.msra.mxu0 0.0
    %1220 = vmatprep.subr.mxu0 0.0
    %1221 = vmatpush1.msra.mxu0 0.0
    %1222 = vmatprep.subr.mxu0 0.0
    %1223 = vmatpush1.msra.mxu0 0.0
    %1224 = vmatprep.subr.mxu0 0.0
    %1225 = vmatpush1.msra.mxu0 0.0
    %1226 = vmatprep.subr.mxu0 0.0
    %1227 = vmatpush1.msra.mxu0 0.0
    %1228 = vmatprep.subr.mxu0 0.0
    %1229 = vmatpush1.msra.mxu0 0.0
    %1230 = vmatprep.subr.mxu0 0.0
    %1231 = vmatpush1.msra.mxu0 0.0
    %1232 = vmatprep.subr.mxu0 0.0
    %1233 = vmatpush1.msra.mxu0 0.0
    %1234 = vmatprep.subr.mxu0 0.0
    %1235 = vmatpush1.msra.mxu0 0.0
    %1236 = vmatprep.subr.mxu0 0.0
    %1237 = vmatpush1.msra.mxu0 0.0
    %1238 = vmatprep.subr.mxu0 0.0
    %1239 = vmatpush1.msra.mxu0 0.0
    %1240 = vmatprep.subr.mxu0 0.0
    %1241 = vmatpush1.msra.mxu0 0.0
    %1242 = vmatprep.subr.mxu0 0.0
    %1243 = vmatpush1.msra.mxu0 0.0
    %1244 = vmatprep.subr.mxu0 0.0
    %1245 = vmatpush1.msra.mxu0 0.0
    %1246 = vmatprep.subr.mxu0 0.0
    %1247 = vmatpush1.msra.mxu0 0.0
    %1248 = vmatprep.mubr.f32.mxu0 0.0
    %1249 = vmatmul.mubr.f32.gmra.mrb[0].mxu0 %v1182
    %v1250 = vpop.f32.mrb[0].mxu0
    %v1251 = vadd.f32 0.0, %v1250
    %v1252 = vpop.f32.mrb[0].mxu0
    %1253 = vdwg.mxu0
    %v1254 = vadd.f32 %v1181, %v1251
    %v1255 = vxor.u32 %v1254, 2147483648
    %v1256 = vmul.f32 %v1255, 1.442695
    %v1257 = vpow.pop %v1256
    %v1258 = vadd.f32 %v1257, 1.0
    %v1259 = vrcp.pop %v1258
    %v1260 = vmul.f32 1.0, %v1259
    %v1261 = vadd.f32 %v1251, %v179
    %1263 = vrot.lane.b32.xlu0 %v1261, 64
    %v1264 = vpop.permute.xlu0 %1263
    %v1266 = vmul.f32 %v1260, %v1264
    %1268 = vrot.lane.b32.xlu0 %v1266, 64
    %v1269 = vpop.permute.xlu0 %1268
    %v1271 = vadd.f32 %v1181, %v1269
    %v1272 = vtanh.pop %v1271
    %v1273 = vsub.f32 1.0, %v1260
    %1275 = vrot.lane.b32.xlu0 %v1272, 96
    %v1276 = vpop.permute.xlu0 %1275
    %v1278 = vmul.f32 %v1273, %v1276
    %v1279 = vmul.f32 %v1260, %v1066
    %v1280 = vadd.f32 %v1278, %v1279
    %1282 = vrot.lane.b32.xlu0 %v1280, 96
    %v1283 = vpop.permute.xlu0 %1282
    %s1285 = scalar_lea.vmem [#allocation4], 10
    %1286 = vst.msk [vmem:[%s1285] sm:$0x3] %vm208, %v1283
    %s1287 = scalar_lea.vmem %s62, 4
    %v1288 = vld [vmem:[%s1287] sm:$0x3]
    %v1289 = vsel %vm97, %v1176, 0
    %1291 = vmatprep.subr.mxu0 0.0
    %1292 = vmatpush1.msra.mxu0 %v78
    %1293 = vmatprep.subr.mxu0 0.0
    %1294 = vmatpush1.msra.mxu0 %v79
    %1295 = vmatprep.subr.mxu0 0.0
    %1296 = vmatpush1.msra.mxu0 %v80
    %1297 = vmatprep.subr.mxu0 0.0
    %1298 = vmatpush1.msra.mxu0 %v81
    %1299 = vmatprep.subr.mxu0 0.0
    %1300 = vmatpush1.msra.mxu0 0.0
    %1301 = vmatprep.subr.mxu0 0.0
    %1302 = vmatpush1.msra.mxu0 0.0
    %1303 = vmatprep.subr.mxu0 0.0
    %1304 = vmatpush1.msra.mxu0 0.0
    %1305 = vmatprep.subr.mxu0 0.0
    %1306 = vmatpush1.msra.mxu0 0.0
    %1307 = vmatprep.subr.mxu0 0.0
    %1308 = vmatpush1.msra.mxu0 0.0
    %1309 = vmatprep.subr.mxu0 0.0
    %1310 = vmatpush1.msra.mxu0 0.0
    %1311 = vmatprep.subr.mxu0 0.0
    %1312 = vmatpush1.msra.mxu0 0.0
    %1313 = vmatprep.subr.mxu0 0.0
    %1314 = vmatpush1.msra.mxu0 0.0
    %1315 = vmatprep.subr.mxu0 0.0
    %1316 = vmatpush1.msra.mxu0 0.0
    %1317 = vmatprep.subr.mxu0 0.0
    %1318 = vmatpush1.msra.mxu0 0.0
    %1319 = vmatprep.subr.mxu0 0.0
    %1320 = vmatpush1.msra.mxu0 0.0
    %1321 = vmatprep.subr.mxu0 0.0
    %1322 = vmatpush1.msra.mxu0 0.0
    %1323 = vmatprep.subr.mxu0 0.0
    %1324 = vmatpush1.msra.mxu0 0.0
    %1325 = vmatprep.subr.mxu0 0.0
    %1326 = vmatpush1.msra.mxu0 0.0
    %1327 = vmatprep.subr.mxu0 0.0
    %1328 = vmatpush1.msra.mxu0 0.0
    %1329 = vmatprep.subr.mxu0 0.0
    %1330 = vmatpush1.msra.mxu0 0.0
    %1331 = vmatprep.subr.mxu0 0.0
    %1332 = vmatpush1.msra.mxu0 0.0
    %1333 = vmatprep.subr.mxu0 0.0
    %1334 = vmatpush1.msra.mxu0 0.0
    %1335 = vmatprep.subr.mxu0 0.0
    %1336 = vmatpush1.msra.mxu0 0.0
    %1337 = vmatprep.subr.mxu0 0.0
    %1338 = vmatpush1.msra.mxu0 0.0
    %1339 = vmatprep.subr.mxu0 0.0
    %1340 = vmatpush1.msra.mxu0 0.0
    %1341 = vmatprep.subr.mxu0 0.0
    %1342 = vmatpush1.msra.mxu0 0.0
    %1343 = vmatprep.subr.mxu0 0.0
    %1344 = vmatpush1.msra.mxu0 0.0
    %1345 = vmatprep.subr.mxu0 0.0
    %1346 = vmatpush1.msra.mxu0 0.0
    %1347 = vmatprep.subr.mxu0 0.0
    %1348 = vmatpush1.msra.mxu0 0.0
    %1349 = vmatprep.subr.mxu0 0.0
    %1350 = vmatpush1.msra.mxu0 0.0
    %1351 = vmatprep.subr.mxu0 0.0
    %1352 = vmatpush1.msra.mxu0 0.0
    %1353 = vmatprep.subr.mxu0 0.0
    %1354 = vmatpush1.msra.mxu0 0.0
    %1355 = vmatprep.mubr.f32.mxu0 0.0
    %1356 = vmatmul.mubr.f32.gmra.mrb[0].mxu0 %v1289
    %v1357 = vpop.f32.mrb[0].mxu0
    %v1358 = vadd.f32 0.0, %v1357
    %v1359 = vpop.f32.mrb[0].mxu0
    %1360 = vdwg.mxu0
    %v1361 = vadd.f32 %v1288, %v1358
    %v1362 = vxor.u32 %v1361, 2147483648
    %v1363 = vmul.f32 %v1362, 1.442695
    %v1364 = vpow.pop %v1363
    %v1365 = vadd.f32 %v1364, 1.0
    %v1366 = vrcp.pop %v1365
    %v1367 = vmul.f32 1.0, %v1366
    %v1368 = vadd.f32 %v1358, %v293
    %1370 = vrot.lane.b32.xlu0 %v1368, 64
    %v1371 = vpop.permute.xlu0 %1370
    %v1373 = vmul.f32 %v1367, %v1371
    %1375 = vrot.lane.b32.xlu0 %v1373, 64
    %v1376 = vpop.permute.xlu0 %1375
    %v1378 = vadd.f32 %v1288, %v1376
    %v1379 = vtanh.pop %v1378
    %v1380 = vsub.f32 1.0, %v1367
    %1382 = vrot.lane.b32.xlu0 %v1379, 96
    %v1383 = vpop.permute.xlu0 %1382
    %v1385 = vmul.f32 %v1380, %v1383
    %v1386 = vmul.f32 %v1367, %v1173
    %v1387 = vadd.f32 %v1385, %v1386
    %1389 = vrot.lane.b32.xlu0 %v1387, 96
    %v1390 = vpop.permute.xlu0 %1389
    %s1392 = scalar_lea.vmem [#allocation6], 4
    %1393 = vst.msk [vmem:[%s1392] sm:$0x3] %vm208, %v1390
    %s1394 = scalar_lea.vmem %s0, 12
    %v1395 = vld [vmem:[%s1394] sm:$0x3]
    %v1396 = vsel %vm97, %v1283, 0
    %1398 = vmatprep.subr.mxu0 0.0
    %1399 = vmatpush1.msra.mxu0 %v74
    %1400 = vmatprep.subr.mxu0 0.0
    %1401 = vmatpush1.msra.mxu0 %v75
    %1402 = vmatprep.subr.mxu0 0.0
    %1403 = vmatpush1.msra.mxu0 %v76
    %1404 = vmatprep.subr.mxu0 0.0
    %1405 = vmatpush1.msra.mxu0 %v77
    %1406 = vmatprep.subr.mxu0 0.0
    %1407 = vmatpush1.msra.mxu0 0.0
    %1408 = vmatprep.subr.mxu0 0.0
    %1409 = vmatpush1.msra.mxu0 0.0
    %1410 = vmatprep.subr.mxu0 0.0
    %1411 = vmatpush1.msra.mxu0 0.0
    %1412 = vmatprep.subr.mxu0 0.0
    %1413 = vmatpush1.msra.mxu0 0.0
    %1414 = vmatprep.subr.mxu0 0.0
    %1415 = vmatpush1.msra.mxu0 0.0
    %1416 = vmatprep.subr.mxu0 0.0
    %1417 = vmatpush1.msra.mxu0 0.0
    %1418 = vmatprep.subr.mxu0 0.0
    %1419 = vmatpush1.msra.mxu0 0.0
    %1420 = vmatprep.subr.mxu0 0.0
    %1421 = vmatpush1.msra.mxu0 0.0
    %1422 = vmatprep.subr.mxu0 0.0
    %1423 = vmatpush1.msra.mxu0 0.0
    %1424 = vmatprep.subr.mxu0 0.0
    %1425 = vmatpush1.msra.mxu0 0.0
    %1426 = vmatprep.subr.mxu0 0.0
    %1427 = vmatpush1.msra.mxu0 0.0
    %1428 = vmatprep.subr.mxu0 0.0
    %1429 = vmatpush1.msra.mxu0 0.0
    %1430 = vmatprep.subr.mxu0 0.0
    %1431 = vmatpush1.msra.mxu0 0.0
    %1432 = vmatprep.subr.mxu0 0.0
    %1433 = vmatpush1.msra.mxu0 0.0
    %1434 = vmatprep.subr.mxu0 0.0
    %1435 = vmatpush1.msra.mxu0 0.0
    %1436 = vmatprep.subr.mxu0 0.0
    %1437 = vmatpush1.msra.mxu0 0.0
    %1438 = vmatprep.subr.mxu0 0.0
    %1439 = vmatpush1.msra.mxu0 0.0
    %1440 = vmatprep.subr.mxu0 0.0
    %1441 = vmatpush1.msra.mxu0 0.0
    %1442 = vmatprep.subr.mxu0 0.0
    %1443 = vmatpush1.msra.mxu0 0.0
    %1444 = vmatprep.subr.mxu0 0.0
    %1445 = vmatpush1.msra.mxu0 0.0
    %1446 = vmatprep.subr.mxu0 0.0
    %1447 = vmatpush1.msra.mxu0 0.0
    %1448 = vmatprep.subr.mxu0 0.0
    %1449 = vmatpush1.msra.mxu0 0.0
    %1450 = vmatprep.subr.mxu0 0.0
    %1451 = vmatpush1.msra.mxu0 0.0
    %1452 = vmatprep.subr.mxu0 0.0
    %1453 = vmatpush1.msra.mxu0 0.0
    %1454 = vmatprep.subr.mxu0 0.0
    %1455 = vmatpush1.msra.mxu0 0.0
    %1456 = vmatprep.subr.mxu0 0.0
    %1457 = vmatpush1.msra.mxu0 0.0
    %1458 = vmatprep.subr.mxu0 0.0
    %1459 = vmatpush1.msra.mxu0 0.0
    %1460 = vmatprep.subr.mxu0 0.0
    %1461 = vmatpush1.msra.mxu0 0.0
    %1462 = vmatprep.mubr.f32.mxu0 0.0
    %1463 = vmatmul.mubr.f32.gmra.mrb[0].mxu0 %v1396
    %v1464 = vpop.f32.mrb[0].mxu0
    %v1465 = vadd.f32 0.0, %v1464
    %v1466 = vpop.f32.mrb[0].mxu0
    %1467 = vdwg.mxu0
    %v1468 = vadd.f32 %v1395, %v1465
    %v1469 = vxor.u32 %v1468, 2147483648
    %v1470 = vmul.f32 %v1469, 1.442695
    %v1471 = vpow.pop %v1470
    %v1472 = vadd.f32 %v1471, 1.0
    %v1473 = vrcp.pop %v1472
    %v1474 = vmul.f32 1.0, %v1473
    %v1475 = vadd.f32 %v1465, %v179
    %1477 = vrot.lane.b32.xlu0 %v1475, 64
    %v1478 = vpop.permute.xlu0 %1477
    %v1480 = vmul.f32 %v1474, %v1478
    %1482 = vrot.lane.b32.xlu0 %v1480, 64
    %v1483 = vpop.permute.xlu0 %1482
    %v1485 = vadd.f32 %v1395, %v1483
    %v1486 = vtanh.pop %v1485
    %v1487 = vsub.f32 1.0, %v1474
    %1489 = vrot.lane.b32.xlu0 %v1486, 96
    %v1490 = vpop.permute.xlu0 %1489
    %v1492 = vmul.f32 %v1487, %v1490
    %v1493 = vmul.f32 %v1474, %v1280
    %v1494 = vadd.f32 %v1492, %v1493
    %1496 = vrot.lane.b32.xlu0 %v1494, 96
    %v1497 = vpop.permute.xlu0 %1496
    %s1499 = scalar_lea.vmem [#allocation4], 12
    %1500 = vst.msk [vmem:[%s1499] sm:$0x3] %vm208, %v1497
    %s1501 = scalar_lea.vmem %s62, 2
    %v1502 = vld [vmem:[%s1501] sm:$0x3]
    %v1503 = vsel %vm97, %v1390, 0
    %1505 = vmatprep.subr.mxu0 0.0
    %1506 = vmatpush1.msra.mxu0 %v78
    %1507 = vmatprep.subr.mxu0 0.0
    %1508 = vmatpush1.msra.mxu0 %v79
    %1509 = vmatprep.subr.mxu0 0.0
    %1510 = vmatpush1.msra.mxu0 %v80
    %1511 = vmatprep.subr.mxu0 0.0
    %1512 = vmatpush1.msra.mxu0 %v81
    %1513 = vmatprep.subr.mxu0 0.0
    %1514 = vmatpush1.msra.mxu0 0.0
    %1515 = vmatprep.subr.mxu0 0.0
    %1516 = vmatpush1.msra.mxu0 0.0
    %1517 = vmatprep.subr.mxu0 0.0
    %1518 = vmatpush1.msra.mxu0 0.0
    %1519 = vmatprep.subr.mxu0 0.0
    %1520 = vmatpush1.msra.mxu0 0.0
    %1521 = vmatprep.subr.mxu0 0.0
    %1522 = vmatpush1.msra.mxu0 0.0
    %1523 = vmatprep.subr.mxu0 0.0
    %1524 = vmatpush1.msra.mxu0 0.0
    %1525 = vmatprep.subr.mxu0 0.0
    %1526 = vmatpush1.msra.mxu0 0.0
    %1527 = vmatprep.subr.mxu0 0.0
    %1528 = vmatpush1.msra.mxu0 0.0
    %1529 = vmatprep.subr.mxu0 0.0
    %1530 = vmatpush1.msra.mxu0 0.0
    %1531 = vmatprep.subr.mxu0 0.0
    %1532 = vmatpush1.msra.mxu0 0.0
    %1533 = vmatprep.subr.mxu0 0.0
    %1534 = vmatpush1.msra.mxu0 0.0
    %1535 = vmatprep.subr.mxu0 0.0
    %1536 = vmatpush1.msra.mxu0 0.0
    %1537 = vmatprep.subr.mxu0 0.0
    %1538 = vmatpush1.msra.mxu0 0.0
    %1539 = vmatprep.subr.mxu0 0.0
    %1540 = vmatpush1.msra.mxu0 0.0
    %1541 = vmatprep.subr.mxu0 0.0
    %1542 = vmatpush1.msra.mxu0 0.0
    %1543 = vmatprep.subr.mxu0 0.0
    %1544 = vmatpush1.msra.mxu0 0.0
    %1545 = vmatprep.subr.mxu0 0.0
    %1546 = vmatpush1.msra.mxu0 0.0
    %1547 = vmatprep.subr.mxu0 0.0
    %1548 = vmatpush1.msra.mxu0 0.0
    %1549 = vmatprep.subr.mxu0 0.0
    %1550 = vmatpush1.msra.mxu0 0.0
    %1551 = vmatprep.subr.mxu0 0.0
    %1552 = vmatpush1.msra.mxu0 0.0
    %1553 = vmatprep.subr.mxu0 0.0
    %1554 = vmatpush1.msra.mxu0 0.0
    %1555 = vmatprep.subr.mxu0 0.0
    %1556 = vmatpush1.msra.mxu0 0.0
    %1557 = vmatprep.subr.mxu0 0.0
    %1558 = vmatpush1.msra.mxu0 0.0
    %1559 = vmatprep.subr.mxu0 0.0
    %1560 = vmatpush1.msra.mxu0 0.0
    %1561 = vmatprep.subr.mxu0 0.0
    %1562 = vmatpush1.msra.mxu0 0.0
    %1563 = vmatprep.subr.mxu0 0.0
    %1564 = vmatpush1.msra.mxu0 0.0
    %1565 = vmatprep.subr.mxu0 0.0
    %1566 = vmatpush1.msra.mxu0 0.0
    %1567 = vmatprep.subr.mxu0 0.0
    %1568 = vmatpush1.msra.mxu0 0.0
    %1569 = vmatprep.mubr.f32.mxu0 0.0
    %1570 = vmatmul.mubr.f32.gmra.mrb[0].mxu0 %v1503
    %v1571 = vpop.f32.mrb[0].mxu0
    %v1572 = vadd.f32 0.0, %v1571
    %v1573 = vpop.f32.mrb[0].mxu0
    %1574 = vdwg.mxu0
    %v1575 = vadd.f32 %v1502, %v1572
    %v1576 = vxor.u32 %v1575, 2147483648
    %v1577 = vmul.f32 %v1576, 1.442695
    %v1578 = vpow.pop %v1577
    %v1579 = vadd.f32 %v1578, 1.0
    %v1580 = vrcp.pop %v1579
    %v1581 = vmul.f32 1.0, %v1580
    %v1582 = vadd.f32 %v1572, %v293
    %1584 = vrot.lane.b32.xlu0 %v1582, 64
    %v1585 = vpop.permute.xlu0 %1584
    %v1587 = vmul.f32 %v1581, %v1585
    %1589 = vrot.lane.b32.xlu0 %v1587, 64
    %v1590 = vpop.permute.xlu0 %1589
    %v1592 = vadd.f32 %v1502, %v1590
    %v1593 = vtanh.pop %v1592
    %v1594 = vsub.f32 1.0, %v1581
    %1596 = vrot.lane.b32.xlu0 %v1593, 96
    %v1597 = vpop.permute.xlu0 %1596
    %v1599 = vmul.f32 %v1594, %v1597
    %v1600 = vmul.f32 %v1581, %v1387
    %v1601 = vadd.f32 %v1599, %v1600
    %1603 = vrot.lane.b32.xlu0 %v1601, 96
    %v1604 = vpop.permute.xlu0 %1603
    %s1606 = scalar_lea.vmem [#allocation6], 2
    %1607 = vst.msk [vmem:[%s1606] sm:$0x3] %vm208, %v1604
    %s1608 = scalar_lea.vmem %s0, 14
    %v1609 = vld [vmem:[%s1608] sm:$0x3]
    %v1610 = vsel %vm97, %v1497, 0
    %1612 = vmatprep.subr.mxu0 0.0
    %1613 = vmatpush1.msra.mxu0 %v74
    %1614 = vmatprep.subr.mxu0 0.0
    %1615 = vmatpush1.msra.mxu0 %v75
    %1616 = vmatprep.subr.mxu0 0.0
    %1617 = vmatpush1.msra.mxu0 %v76
    %1618 = vmatprep.subr.mxu0 0.0
    %1619 = vmatpush1.msra.mxu0 %v77
    %1620 = vmatprep.subr.mxu0 0.0
    %1621 = vmatpush1.msra.mxu0 0.0
    %1622 = vmatprep.subr.mxu0 0.0
    %1623 = vmatpush1.msra.mxu0 0.0
    %1624 = vmatprep.subr.mxu0 0.0
    %1625 = vmatpush1.msra.mxu0 0.0
    %1626 = vmatprep.subr.mxu0 0.0
    %1627 = vmatpush1.msra.mxu0 0.0
    %1628 = vmatprep.subr.mxu0 0.0
    %1629 = vmatpush1.msra.mxu0 0.0
    %1630 = vmatprep.subr.mxu0 0.0
    %1631 = vmatpush1.msra.mxu0 0.0
    %1632 = vmatprep.subr.mxu0 0.0
    %1633 = vmatpush1.msra.mxu0 0.0
    %1634 = vmatprep.subr.mxu0 0.0
    %1635 = vmatpush1.msra.mxu0 0.0
    %1636 = vmatprep.subr.mxu0 0.0
    %1637 = vmatpush1.msra.mxu0 0.0
    %1638 = vmatprep.subr.mxu0 0.0
    %1639 = vmatpush1.msra.mxu0 0.0
    %1640 = vmatprep.subr.mxu0 0.0
    %1641 = vmatpush1.msra.mxu0 0.0
    %1642 = vmatprep.subr.mxu0 0.0
    %1643 = vmatpush1.msra.mxu0 0.0
    %1644 = vmatprep.subr.mxu0 0.0
    %1645 = vmatpush1.msra.mxu0 0.0
    %1646 = vmatprep.subr.mxu0 0.0
    %1647 = vmatpush1.msra.mxu0 0.0
    %1648 = vmatprep.subr.mxu0 0.0
    %1649 = vmatpush1.msra.mxu0 0.0
    %1650 = vmatprep.subr.mxu0 0.0
    %1651 = vmatpush1.msra.mxu0 0.0
    %1652 = vmatprep.subr.mxu0 0.0
    %1653 = vmatpush1.msra.mxu0 0.0
    %1654 = vmatprep.subr.mxu0 0.0
    %1655 = vmatpush1.msra.mxu0 0.0
    %1656 = vmatprep.subr.mxu0 0.0
    %1657 = vmatpush1.msra.mxu0 0.0
    %1658 = vmatprep.subr.mxu0 0.0
    %1659 = vmatpush1.msra.mxu0 0.0
    %1660 = vmatprep.subr.mxu0 0.0
    %1661 = vmatpush1.msra.mxu0 0.0
    %1662 = vmatprep.subr.mxu0 0.0
    %1663 = vmatpush1.msra.mxu0 0.0
    %1664 = vmatprep.subr.mxu0 0.0
    %1665 = vmatpush1.msra.mxu0 0.0
    %1666 = vmatprep.subr.mxu0 0.0
    %1667 = vmatpush1.msra.mxu0 0.0
    %1668 = vmatprep.subr.mxu0 0.0
    %1669 = vmatpush1.msra.mxu0 0.0
    %1670 = vmatprep.subr.mxu0 0.0
    %1671 = vmatpush1.msra.mxu0 0.0
    %1672 = vmatprep.subr.mxu0 0.0
    %1673 = vmatpush1.msra.mxu0 0.0
    %1674 = vmatprep.subr.mxu0 0.0
    %1675 = vmatpush1.msra.mxu0 0.0
    %1676 = vmatprep.mubr.f32.mxu0 0.0
    %1677 = vmatmul.mubr.f32.gmra.mrb[0].mxu0 %v1610
    %v1678 = vpop.f32.mrb[0].mxu0
    %v1679 = vadd.f32 0.0, %v1678
    %v1680 = vpop.f32.mrb[0].mxu0
    %1681 = vdwg.mxu0
    %v1682 = vadd.f32 %v1609, %v1679
    %v1683 = vxor.u32 %v1682, 2147483648
    %v1684 = vmul.f32 %v1683, 1.442695
    %v1685 = vpow.pop %v1684
    %v1686 = vadd.f32 %v1685, 1.0
    %v1687 = vrcp.pop %v1686
    %v1688 = vmul.f32 1.0, %v1687
    %v1689 = vadd.f32 %v1679, %v179
    %1691 = vrot.lane.b32.xlu0 %v1689, 64
    %v1692 = vpop.permute.xlu0 %1691
    %v1694 = vmul.f32 %v1688, %v1692
    %1696 = vrot.lane.b32.xlu0 %v1694, 64
    %v1697 = vpop.permute.xlu0 %1696
    %v1699 = vadd.f32 %v1609, %v1697
    %v1700 = vtanh.pop %v1699
    %v1701 = vsub.f32 1.0, %v1688
    %1703 = vrot.lane.b32.xlu0 %v1700, 96
    %v1704 = vpop.permute.xlu0 %1703
    %v1706 = vmul.f32 %v1701, %v1704
    %v1707 = vmul.f32 %v1688, %v1494
    %v1708 = vadd.f32 %v1706, %v1707
    %1710 = vrot.lane.b32.xlu0 %v1708, 96
    %v1711 = vpop.permute.xlu0 %1710
    %s1713 = scalar_lea.vmem [#allocation4], 14
    %1714 = vst.msk [vmem:[%s1713] sm:$0x3] %vm208, %v1711
    %v1715 = vld [vmem:[%s62] sm:$0x3]
    %v1716 = vsel %vm97, %v1604, 0
    %1718 = vmatprep.subr.mxu0 0.0
    %1719 = vmatpush1.msra.mxu0 %v78
    %1720 = vmatprep.subr.mxu0 0.0
    %1721 = vmatpush1.msra.mxu0 %v79
    %1722 = vmatprep.subr.mxu0 0.0
    %1723 = vmatpush1.msra.mxu0 %v80
    %1724 = vmatprep.subr.mxu0 0.0
    %1725 = vmatpush1.msra.mxu0 %v81
    %1726 = vmatprep.subr.mxu0 0.0
    %1727 = vmatpush1.msra.mxu0 0.0
    %1728 = vmatprep.subr.mxu0 0.0
    %1729 = vmatpush1.msra.mxu0 0.0
    %1730 = vmatprep.subr.mxu0 0.0
    %1731 = vmatpush1.msra.mxu0 0.0
    %1732 = vmatprep.subr.mxu0 0.0
    %1733 = vmatpush1.msra.mxu0 0.0
    %1734 = vmatprep.subr.mxu0 0.0
    %1735 = vmatpush1.msra.mxu0 0.0
    %1736 = vmatprep.subr.mxu0 0.0
    %1737 = vmatpush1.msra.mxu0 0.0
    %1738 = vmatprep.subr.mxu0 0.0
    %1739 = vmatpush1.msra.mxu0 0.0
    %1740 = vmatprep.subr.mxu0 0.0
    %1741 = vmatpush1.msra.mxu0 0.0
    %1742 = vmatprep.subr.mxu0 0.0
    %1743 = vmatpush1.msra.mxu0 0.0
    %1744 = vmatprep.subr.mxu0 0.0
    %1745 = vmatpush1.msra.mxu0 0.0
    %1746 = vmatprep.subr.mxu0 0.0
    %1747 = vmatpush1.msra.mxu0 0.0
    %1748 = vmatprep.subr.mxu0 0.0
    %1749 = vmatpush1.msra.mxu0 0.0
    %1750 = vmatprep.subr.mxu0 0.0
    %1751 = vmatpush1.msra.mxu0 0.0
    %1752 = vmatprep.subr.mxu0 0.0
    %1753 = vmatpush1.msra.mxu0 0.0
    %1754 = vmatprep.subr.mxu0 0.0
    %1755 = vmatpush1.msra.mxu0 0.0
    %1756 = vmatprep.subr.mxu0 0.0
    %1757 = vmatpush1.msra.mxu0 0.0
    %1758 = vmatprep.subr.mxu0 0.0
    %1759 = vmatpush1.msra.mxu0 0.0
    %1760 = vmatprep.subr.mxu0 0.0
    %1761 = vmatpush1.msra.mxu0 0.0
    %1762 = vmatprep.subr.mxu0 0.0
    %1763 = vmatpush1.msra.mxu0 0.0
    %1764 = vmatprep.subr.mxu0 0.0
    %1765 = vmatpush1.msra.mxu0 0.0
    %1766 = vmatprep.subr.mxu0 0.0
    %1767 = vmatpush1.msra.mxu0 0.0
    %1768 = vmatprep.subr.mxu0 0.0
    %1769 = vmatpush1.msra.mxu0 0.0
    %1770 = vmatprep.subr.mxu0 0.0
    %1771 = vmatpush1.msra.mxu0 0.0
    %1772 = vmatprep.subr.mxu0 0.0
    %1773 = vmatpush1.msra.mxu0 0.0
    %1774 = vmatprep.subr.mxu0 0.0
    %1775 = vmatpush1.msra.mxu0 0.0
    %1776 = vmatprep.subr.mxu0 0.0
    %1777 = vmatpush1.msra.mxu0 0.0
    %1778 = vmatprep.subr.mxu0 0.0
    %1779 = vmatpush1.msra.mxu0 0.0
    %1780 = vmatprep.subr.mxu0 0.0
    %1781 = vmatpush1.msra.mxu0 0.0
    %1782 = vmatprep.mubr.f32.mxu0 0.0
    %1783 = vmatmul.mubr.f32.gmra.mrb[0].mxu0 %v1716
    %v1784 = vpop.f32.mrb[0].mxu0
    %v1785 = vadd.f32 0.0, %v1784
    %v1786 = vpop.f32.mrb[0].mxu0
    %1787 = vdwg.mxu0
    %v1788 = vadd.f32 %v1715, %v1785
    %v1789 = vxor.u32 %v1788, 2147483648
    %v1790 = vmul.f32 %v1789, 1.442695
    %v1791 = vpow.pop %v1790
    %v1792 = vadd.f32 %v1791, 1.0
    %v1793 = vrcp.pop %v1792
    %v1794 = vmul.f32 1.0, %v1793
    %v1795 = vadd.f32 %v1785, %v293
    %1797 = vrot.lane.b32.xlu0 %v1795, 64
    %v1798 = vpop.permute.xlu0 %1797
    %v1800 = vmul.f32 %v1794, %v1798
    %1802 = vrot.lane.b32.xlu0 %v1800, 64
    %v1803 = vpop.permute.xlu0 %1802
    %v1805 = vadd.f32 %v1715, %v1803
    %v1806 = vtanh.pop %v1805
    %v1807 = vsub.f32 1.0, %v1794
    %1809 = vrot.lane.b32.xlu0 %v1806, 96
    %v1810 = vpop.permute.xlu0 %1809
    %v1812 = vmul.f32 %v1807, %v1810
    %v1813 = vmul.f32 %v1794, %v1601
    %v1814 = vadd.f32 %v1812, %v1813
    %1816 = vrot.lane.b32.xlu0 %v1814, 96
    %v1817 = vpop.permute.xlu0 %1816
    %1819 = vst.msk [vmem:[#allocation6] sm:$0x3] %vm208, %v1817
    %1820 = vst.msk [vmem:[#allocation2] sm:$0x3] %vm208, %v1711
    %1821 = vst.msk [vmem:[#allocation3] sm:$0x3] %vm208, %v1817
    // Predicated region
    $region50: #{gru_compressor_forward.3} parent=1 // pred_check
      %p1822 = pneg %p67
    $region51: #{gru_compressor_forward.3} parent=1 // pred_check_branch
      %1824 = sbr.rel (%p1822) target = $region53
    $region52: #{gru_compressor_forward.3} parent=1 // pred_region
      %v1825 = vld [vmem:[%s6] sm:$0xff]
      %v1826 = vld [vmem:[%s6 + $0x8] sm:$0xff]
      %v1827 = vld [vmem:[%s6 + $0x10] sm:$0xff]
      %v1828 = vld [vmem:[%s6 + $0x18] sm:$0xff]
      %v1829 = vld [vmem:[%s7] sm:$0xff]
      %v1830 = vld [vmem:[%s7 + $0x8] sm:$0xff]
      %v1831 = vld [vmem:[%s7 + $0x10] sm:$0xff]
      %v1832 = vld [vmem:[%s7 + $0x18] sm:$0xff]
      %v1833 = vsel %vm97, %v1817, 0
      %1835 = vmatprep.subr.mxu0 0.0
      %1836 = vmatpush1.msra.mxu0 %v1829
      %1837 = vmatprep.subr.mxu0 0.0
      %1838 = vmatpush1.msra.mxu0 %v1830
      %1839 = vmatprep.subr.mxu0 0.0
      %1840 = vmatpush1.msra.mxu0 %v1831
      %1841 = vmatprep.subr.mxu0 0.0
      %1842 = vmatpush1.msra.mxu0 %v1832
      %1843 = vmatprep.subr.mxu0 0.0
      %1844 = vmatpush1.msra.mxu0 0.0
      %1845 = vmatprep.subr.mxu0 0.0
      %1846 = vmatpush1.msra.mxu0 0.0
      %1847 = vmatprep.subr.mxu0 0.0
      %1848 = vmatpush1.msra.mxu0 0.0
      %1849 = vmatprep.subr.mxu0 0.0
      %1850 = vmatpush1.msra.mxu0 0.0
      %1851 = vmatprep.subr.mxu0 0.0
      %1852 = vmatpush1.msra.mxu0 0.0
      %1853 = vmatprep.subr.mxu0 0.0
      %1854 = vmatpush1.msra.mxu0 0.0
      %1855 = vmatprep.subr.mxu0 0.0
      %1856 = vmatpush1.msra.mxu0 0.0
      %1857 = vmatprep.subr.mxu0 0.0
      %1858 = vmatpush1.msra.mxu0 0.0
      %1859 = vmatprep.subr.mxu0 0.0
      %1860 = vmatpush1.msra.mxu0 0.0
      %1861 = vmatprep.subr.mxu0 0.0
      %1862 = vmatpush1.msra.mxu0 0.0
      %1863 = vmatprep.subr.mxu0 0.0
      %1864 = vmatpush1.msra.mxu0 0.0
      %1865 = vmatprep.subr.mxu0 0.0
      %1866 = vmatpush1.msra.mxu0 0.0
      %1867 = vmatprep.subr.mxu0 0.0
      %1868 = vmatpush1.msra.mxu0 0.0
      %1869 = vmatprep.subr.mxu0 0.0
      %1870 = vmatpush1.msra.mxu0 0.0
      %1871 = vmatprep.subr.mxu0 0.0
      %1872 = vmatpush1.msra.mxu0 0.0
      %1873 = vmatprep.subr.mxu0 0.0
      %1874 = vmatpush1.msra.mxu0 0.0
      %1875 = vmatprep.subr.mxu0 0.0
      %1876 = vmatpush1.msra.mxu0 0.0
      %1877 = vmatprep.subr.mxu0 0.0
      %1878 = vmatpush1.msra.mxu0 0.0
      %1879 = vmatprep.subr.mxu0 0.0
      %1880 = vmatpush1.msra.mxu0 0.0
      %1881 = vmatprep.subr.mxu0 0.0
      %1882 = vmatpush1.msra.mxu0 0.0
      %1883 = vmatprep.subr.mxu0 0.0
      %1884 = vmatpush1.msra.mxu0 0.0
      %1885 = vmatprep.subr.mxu0 0.0
      %1886 = vmatpush1.msra.mxu0 0.0
      %1887 = vmatprep.subr.mxu0 0.0
      %1888 = vmatpush1.msra.mxu0 0.0
      %1889 = vmatprep.subr.mxu0 0.0
      %1890 = vmatpush1.msra.mxu0 0.0
      %1891 = vmatprep.subr.mxu0 0.0
      %1892 = vmatpush1.msra.mxu0 0.0
      %1893 = vmatprep.subr.mxu0 0.0
      %1894 = vmatpush1.msra.mxu0 0.0
      %1895 = vmatprep.subr.mxu0 0.0
      %1896 = vmatpush1.msra.mxu0 0.0
      %1897 = vmatprep.subr.mxu0 0.0
      %1898 = vmatpush1.msra.mxu0 0.0
      %1899 = vmatprep.mubr.f32.mxu0 0.0
      %1900 = vmatmul.mubr.f32.gmra.mrb[0].mxu0 %v1833
      %v1901 = vpop.f32.mrb[0].mxu0
      %v1902 = vadd.f32 0.0, %v1901
      %v1903 = vpop.f32.mrb[0].mxu0
      %1904 = vdwg.mxu0
      %v1905 = vsel %vm97, %v1711, 0
      %1907 = vmatprep.subr.mxu0 0.0
      %1908 = vmatpush1.msra.mxu0 %v1825
      %1909 = vmatprep.subr.mxu0 0.0
      %1910 = vmatpush1.msra.mxu0 %v1826
      %1911 = vmatprep.subr.mxu0 0.0
      %1912 = vmatpush1.msra.mxu0 %v1827
      %1913 = vmatprep.subr.mxu0 0.0
      %1914 = vmatpush1.msra.mxu0 %v1828
      %1915 = vmatprep.subr.mxu0 0.0
      %1916 = vmatpush1.msra.mxu0 0.0
      %1917 = vmatprep.subr.mxu0 0.0
      %1918 = vmatpush1.msra.mxu0 0.0
      %1919 = vmatprep.subr.mxu0 0.0
      %1920 = vmatpush1.msra.mxu0 0.0
      %1921 = vmatprep.subr.mxu0 0.0
      %1922 = vmatpush1.msra.mxu0 0.0
      %1923 = vmatprep.subr.mxu0 0.0
      %1924 = vmatpush1.msra.mxu0 0.0
      %1925 = vmatprep.subr.mxu0 0.0
      %1926 = vmatpush1.msra.mxu0 0.0
      %1927 = vmatprep.subr.mxu0 0.0
      %1928 = vmatpush1.msra.mxu0 0.0
      %1929 = vmatprep.subr.mxu0 0.0
      %1930 = vmatpush1.msra.mxu0 0.0
      %1931 = vmatprep.subr.mxu0 0.0
      %1932 = vmatpush1.msra.mxu0 0.0
      %1933 = vmatprep.subr.mxu0 0.0
      %1934 = vmatpush1.msra.mxu0 0.0
      %1935 = vmatprep.subr.mxu0 0.0
      %1936 = vmatpush1.msra.mxu0 0.0
      %1937 = vmatprep.subr.mxu0 0.0
      %1938 = vmatpush1.msra.mxu0 0.0
      %1939 = vmatprep.subr.mxu0 0.0
      %1940 = vmatpush1.msra.mxu0 0.0
      %1941 = vmatprep.subr.mxu0 0.0
      %1942 = vmatpush1.msra.mxu0 0.0
      %1943 = vmatprep.subr.mxu0 0.0
      %1944 = vmatpush1.msra.mxu0 0.0
      %1945 = vmatprep.subr.mxu0 0.0
      %1946 = vmatpush1.msra.mxu0 0.0
      %1947 = vmatprep.subr.mxu0 0.0
      %1948 = vmatpush1.msra.mxu0 0.0
      %1949 = vmatprep.subr.mxu0 0.0
      %1950 = vmatpush1.msra.mxu0 0.0
      %1951 = vmatprep.subr.mxu0 0.0
      %1952 = vmatpush1.msra.mxu0 0.0
      %1953 = vmatprep.subr.mxu0 0.0
      %1954 = vmatpush1.msra.mxu0 0.0
      %1955 = vmatprep.subr.mxu0 0.0
      %1956 = vmatpush1.msra.mxu0 0.0
      %1957 = vmatprep.subr.mxu0 0.0
      %1958 = vmatpush1.msra.mxu0 0.0
      %1959 = vmatprep.subr.mxu0 0.0
      %1960 = vmatpush1.msra.mxu0 0.0
      %1961 = vmatprep.subr.mxu0 0.0
      %1962 = vmatpush1.msra.mxu0 0.0
      %1963 = vmatprep.subr.mxu0 0.0
      %1964 = vmatpush1.msra.mxu0 0.0
      %1965 = vmatprep.subr.mxu0 0.0
      %1966 = vmatpush1.msra.mxu0 0.0
      %1967 = vmatprep.subr.mxu0 0.0
      %1968 = vmatpush1.msra.mxu0 0.0
      %1969 = vmatprep.subr.mxu0 0.0
      %1970 = vmatpush1.msra.mxu0 0.0
      %1971 = vmatprep.mubr.f32.mxu0 0.0
      %1972 = vmatmul.mubr.f32.gmra.mrb[0].mxu0 %v1905
      %v1973 = vpop.f32.mrb[0].mxu0
      %v1974 = vadd.f32 %v1902, %v1973
      %v1975 = vpop.f32.mrb[0].mxu0
      %1976 = vdwg.mxu0
      %v1977 = vld [vmem:[%s8] sm:$0x1]
      %v1979 = vlaneseq
      %v1980 = vshrl.u32 %v1979, 7
      %v1981 = vsub.s32 0, %v1980
      %v1982 = vrot.slane %v1977, %v1981
      %v1984 = vadd.f32 %v1974, %v1982
      %v1985 = vmax.f32 %v1984, 0.0
      %v1986 = vld [vmem:[%s9] sm:$0xff]
      %v1987 = vld [vmem:[%s9 + $0x8] sm:$0xff]
      %v1988 = vld [vmem:[%s9 + $0x10] sm:$0xff]
      %v1989 = vld [vmem:[%s9 + $0x18] sm:$0xff]
      %v1990 = vld [vmem:[%s10] sm:$0x1]
      %v1992 = vlaneseq
      %v1993 = vshrl.u32 %v1992, 7
      %v1994 = vsub.s32 0, %v1993
      %v1995 = vrot.slane %v1990, %v1994
      %v1998 = vsel %vm97, %v1985, 0
      %2000 = vmatprep.subr.mxu0 0.0
      %2001 = vmatpush1.msra.mxu0 %v1986
      %2002 = vmatprep.subr.mxu0 0.0
      %2003 = vmatpush1.msra.mxu0 %v1987
      %2004 = vmatprep.subr.mxu0 0.0
      %2005 = vmatpush1.msra.mxu0 %v1988
      %2006 = vmatprep.subr.mxu0 0.0
      %2007 = vmatpush1.msra.mxu0 %v1989
      %2008 = vmatprep.subr.mxu0 0.0
      %2009 = vmatpush1.msra.mxu0 0.0
      %2010 = vmatprep.subr.mxu0 0.0
      %2011 = vmatpush1.msra.mxu0 0.0
      %2012 = vmatprep.subr.mxu0 0.0
      %2013 = vmatpush1.msra.mxu0 0.0
      %2014 = vmatprep.subr.mxu0 0.0
      %2015 = vmatpush1.msra.mxu0 0.0
      %2016 = vmatprep.subr.mxu0 0.0
      %2017 = vmatpush1.msra.mxu0 0.0
      %2018 = vmatprep.subr.mxu0 0.0
      %2019 = vmatpush1.msra.mxu0 0.0
      %2020 = vmatprep.subr.mxu0 0.0
      %2021 = vmatpush1.msra.mxu0 0.0
      %2022 = vmatprep.subr.mxu0 0.0
      %2023 = vmatpush1.msra.mxu0 0.0
      %2024 = vmatprep.subr.mxu0 0.0
      %2025 = vmatpush1.msra.mxu0 0.0
      %2026 = vmatprep.subr.mxu0 0.0
      %2027 = vmatpush1.msra.mxu0 0.0
      %2028 = vmatprep.subr.mxu0 0.0
      %2029 = vmatpush1.msra.mxu0 0.0
      %2030 = vmatprep.subr.mxu0 0.0
      %2031 = vmatpush1.msra.mxu0 0.0
      %2032 = vmatprep.subr.mxu0 0.0
      %2033 = vmatpush1.msra.mxu0 0.0
      %2034 = vmatprep.subr.mxu0 0.0
      %2035 = vmatpush1.msra.mxu0 0.0
      %2036 = vmatprep.subr.mxu0 0.0
      %2037 = vmatpush1.msra.mxu0 0.0
      %2038 = vmatprep.subr.mxu0 0.0
      %2039 = vmatpush1.msra.mxu0 0.0
      %2040 = vmatprep.subr.mxu0 0.0
      %2041 = vmatpush1.msra.mxu0 0.0
      %2042 = vmatprep.subr.mxu0 0.0
      %2043 = vmatpush1.msra.mxu0 0.0
      %2044 = vmatprep.subr.mxu0 0.0
      %2045 = vmatpush1.msra.mxu0 0.0
      %2046 = vmatprep.subr.mxu0 0.0
      %2047 = vmatpush1.msra.mxu0 0.0
      %2048 = vmatprep.subr.mxu0 0.0
      %2049 = vmatpush1.msra.mxu0 0.0
      %2050 = vmatprep.subr.mxu0 0.0
      %2051 = vmatpush1.msra.mxu0 0.0
      %2052 = vmatprep.subr.mxu0 0.0
      %2053 = vmatpush1.msra.mxu0 0.0
      %2054 = vmatprep.subr.mxu0 0.0
      %2055 = vmatpush1.msra.mxu0 0.0
      %2056 = vmatprep.subr.mxu0 0.0
      %2057 = vmatpush1.msra.mxu0 0.0
      %2058 = vmatprep.subr.mxu0 0.0
      %2059 = vmatpush1.msra.mxu0 0.0
      %2060 = vmatprep.subr.mxu0 0.0
      %2061 = vmatpush1.msra.mxu0 0.0
      %2062 = vmatprep.subr.mxu0 0.0
      %2063 = vmatpush1.msra.mxu0 0.0
      %2064 = vmatprep.mubr.f32.mxu0 0.0
      %2065 = vmatmul.mubr.f32.gmra.mrb[0].mxu0 %v1998
      %v2066 = vpop.f32.mrb[0].mxu0
      %v2067 = vadd.f32 %v1995, %v2066
      %v2068 = vpop.f32.mrb[0].mxu0
      %2069 = vdwg.mxu0
      %2070 = vst.msk [vmem:[#allocation8] sm:$0x3] %vm208, %v2067
    $region53: #{gru_compressor_forward.3} parent=1 // pred_fallthru
      _
    // Predicated region
    $region54: #{gru_compressor_forward.3} parent=1 // pred_check
      _
    $region55: #{gru_compressor_forward.3} parent=1 // pred_check_branch
      %2072 = sbr.rel (0) target = $region57
    $region56: #{gru_compressor_forward.3} parent=1 // pred_region
      %s2074 = ssub.s32 256, 256
      %2075 = vsyncadd [#allocation5], %s2074
      %s2076 = sshll.u32 [#allocation4], 4
      %s2077 = int_to_ptr.vmem [resolvable:$true] %s2076
      %2082 = dma.vmem_to_hbm [thread:$0]  %s2077, 256, %s11, [#allocation5], 32, 32, 2
    $region57: #{gru_compressor_forward.3} parent=1 // pred_fallthru
      _
    // Predicated region
    $region58: #{gru_compressor_forward.3} parent=1 // pred_check
      _
    $region59: #{gru_compressor_forward.3} parent=1 // pred_check_branch
      %2084 = sbr.rel (0) target = $region61
    $region60: #{gru_compressor_forward.3} parent=1 // pred_region
      %s2085 = ssub.s32 0, 0
      %s2086 = smul.u32 8, %s2085
      %s2088 = ssub.s32 256, 256
      %2089 = vsyncadd [#allocation7], %s2088
      %s2090 = smul.addr %s2086, 32
      %s2091 = scalar_lea.hbm %s12, %s2090
      %s2092 = sshll.u32 [#allocation6], 4
      %s2093 = int_to_ptr.vmem [resolvable:$true] %s2092
      %2098 = dma.vmem_to_hbm [thread:$0]  %s2093, 256, %s2091, [#allocation7], 32, 32, 2
    $region61: #{gru_compressor_forward.3} parent=1 // pred_fallthru
      _
    // Predicated region
    $region62: #{gru_compressor_forward.3} parent=1 // pred_check
      _
    $region63: #{gru_compressor_forward.3} parent=1 // pred_check_branch
      %2100 = sbr.rel (0) target = $region65
    $region64: #{gru_compressor_forward.3} parent=1 // pred_region
      %s2102 = ssub.s32 32, 32
      %2103 = vsyncadd [#allocation7], %s2102
      %s2105 = sshll.u32 [#allocation8], 4
      %s2106 = int_to_ptr.vmem [resolvable:$true] %s2105
      %2108 = dma.vmem_to_hbm [thread:$0]  %s2106, 32, %s13, [#allocation7]
    $region65: #{gru_compressor_forward.3} parent=1 // pred_fallthru
      _
    // Predicated region
    $region66: #{gru_compressor_forward.3} parent=1 // pred_check
      _
    $region67: #{gru_compressor_forward.3} parent=1 // pred_check_branch
      %2110 = sbr.rel (0) target = $region69
    $region68: #{gru_compressor_forward.3} parent=1 // pred_region
      %2111 = dma.done [#allocation5], 256
    $region69: #{gru_compressor_forward.3} parent=1 // pred_fallthru
      _
    // Predicated region
    $region70: #{gru_compressor_forward.3} parent=1 // pred_check
      _
    $region71: #{gru_compressor_forward.3} parent=1 // pred_check_branch
      %2113 = sbr.rel (0) target = $region73
    $region72: #{gru_compressor_forward.3} parent=1 // pred_region
      %2114 = dma.done [#allocation7], 256
    $region73: #{gru_compressor_forward.3} parent=1 // pred_fallthru
      _
    // Predicated region
    $region74: #{gru_compressor_forward.3} parent=1 // pred_check
      _
    $region75: #{gru_compressor_forward.3} parent=1 // pred_check_branch
      %2116 = sbr.rel (0) target = $region77
    $region76: #{gru_compressor_forward.3} parent=1 // pred_region
      %2117 = dma.done [#allocation7], 32
    $region77: #{gru_compressor_forward.3} parent=1 // pred_fallthru
      _
    %2118 = vsyncpa [#allocation5], 1
    %2119 = vsyncpa [#allocation7], 1

// kernel: gru_compressor_forward.2
$region0: #{gru_compressor_forward.2}
  #allocation0 [shape = 'u32[]', space=smem, size = 0x4, offset = 0x4, fixed_abs, tag = 'smem constant byte address 0x4 - core index']
  #allocation1 [shape = 'u32[144,128]{1,0:T(1,128)}', space=vmem, size = 0x12000, scoped, tag = 'internal scratch']
  #allocation2 [shape = 'f32[2,32]{1,0:T(2,128)}', space=vmem, size = 0x400, scoped, tag = 'scratch operand']
  #allocation3 [shape = 'f32[2,32]{1,0:T(2,128)}', space=vmem, size = 0x400, scoped, tag = 'scratch operand']
  %s0 = inlined_call_operand.vmem [shape: f32[8,2,96], index: 0, kind: input, shape index: {}]
  %s1 = inlined_call_operand.vmem [shape: f32[8,2,96], index: 1, kind: input, shape index: {}]
  %s2 = inlined_call_operand.vmem [shape: f32[32,96], index: 2, kind: input, shape index: {}]
  %s3 = inlined_call_operand.vmem [shape: f32[32,96], index: 3, kind: input, shape index: {}]
  %s4 = inlined_call_operand.vmem [shape: f32[1,32], index: 4, kind: input, shape index: {}]
  %s5 = inlined_call_operand.vmem [shape: f32[1,32], index: 5, kind: input, shape index: {}]
  %s6 = inlined_call_operand.vmem [shape: f32[8,2,32], index: 6, kind: output, shape index: {0}]
  %s7 = inlined_call_operand.vmem [shape: f32[8,2,32], index: 7, kind: output, shape index: {1}]
  %8 = xla_tuple %s6, %s7
  %s9 = sld [smem:[#allocation0]]
  $region46: #{gru_compressor_forward.2} parent=0
    _
  %s11 = ssub.s32 1, %s9
  %s12 = scalar_select 0, %s11, %s9
  // Predicated region
  $region2: #{gru_compressor_forward.2} parent=0 // pred_check
    _
  $region3: #{gru_compressor_forward.2} parent=0 // pred_check_branch
    %14 = sbr.rel (0) target = $region5
  $region4: #{gru_compressor_forward.2} parent=0 // pred_region
    _
  $region5: #{gru_compressor_forward.2} parent=0 // pred_fallthru
    _
  // Predicated region
  $region6: #{gru_compressor_forward.2} parent=0 // pred_check
    _
  $region7: #{gru_compressor_forward.2} parent=0 // pred_check_branch
    %16 = sbr.rel (0) target = $region9
  $region8: #{gru_compressor_forward.2} parent=0 // pred_region
    %s17 = ssub.s32 0, 0
    %s18 = smul.u32 8, %s17
    %p19 = scmp.lt.s32.totalorder %s18, 7
    %s20 = scalar_select %p19, %s18, 7
    %s21 = smul.addr %s20, 2
    %s22 = scalar_lea.vmem %s1, %s21
    %s23 = ssub.s32 0, 0
    %s24 = smul.u32 8, %s23
  $region9: #{gru_compressor_forward.2} parent=0 // pred_fallthru
    _
  // Predicated region
  $region10: #{gru_compressor_forward.2} parent=0 // pred_check
    _
  $region11: #{gru_compressor_forward.2} parent=0 // pred_check_branch
    %26 = sbr.rel (0) target = $region13
  $region12: #{gru_compressor_forward.2} parent=0 // pred_region
    _
  $region13: #{gru_compressor_forward.2} parent=0 // pred_fallthru
    _
  // Predicated region
  $region14: #{gru_compressor_forward.2} parent=0 // pred_check
    _
  $region15: #{gru_compressor_forward.2} parent=0 // pred_check_branch
    %28 = sbr.rel (0) target = $region17
  $region16: #{gru_compressor_forward.2} parent=0 // pred_region
    _
  $region17: #{gru_compressor_forward.2} parent=0 // pred_fallthru
    _
  // Predicated region
  $region18: #{gru_compressor_forward.2} parent=0 // pred_check
    _
  $region19: #{gru_compressor_forward.2} parent=0 // pred_check_branch
    %30 = sbr.rel (0) target = $region21
  $region20: #{gru_compressor_forward.2} parent=0 // pred_region
    _
  $region21: #{gru_compressor_forward.2} parent=0 // pred_fallthru
    _
  // Predicated region
  $region22: #{gru_compressor_forward.2} parent=0 // pred_check
    _
  $region23: #{gru_compressor_forward.2} parent=0 // pred_check_branch
    %32 = sbr.rel (0) target = $region25
  $region24: #{gru_compressor_forward.2} parent=0 // pred_region
    _
  $region25: #{gru_compressor_forward.2} parent=0 // pred_fallthru
    _
  %s33 = ssub.s32 0, 0
  %s34 = smul.u32 8, %s33
  %p35 = scmp.lt.s32.totalorder %s34, 7
  %s36 = scalar_select %p35, %s34, 7
  %s37 = smul.addr %s36, 2
  %s38 = scalar_lea.vmem %s1, %s37
  %s39 = ssub.s32 0, 0
  %s40 = smul.u32 8, %s39
  %p41 = scmp.lt.s32.totalorder %s40, 7
  %s42 = scalar_select %p41, %s40, 7
  %s43 = smul.addr %s42, 2
  %s44 = scalar_lea.vmem %s7, %s43
  %s45 = ssub.s32 0, 0
  %s46 = smul.u32 8, %s45
  %p47 = scmp.lt.s32.totalorder %s46, 7
  %s48 = scalar_select %p47, %s46, 7
  %s49 = smul.addr %s48, 2
  %s50 = scalar_lea.vmem %s1, %s49
  %s51 = ssub.s32 0, 0
  %s52 = smul.u32 8, %s51
  %s53 = ssub.s32 0, 0
  %s54 = smul.u32 8, %s53
  %p55 = scmp.lt.s32.totalorder %s54, 7
  %s56 = scalar_select %p55, %s54, 7
  %s57 = smul.addr %s56, 2
  %s58 = scalar_lea.vmem %s7, %s57
  %s59 = ssub.s32 0, 0
  %s60 = smul.u32 8, %s59
  %p61 = scmp.eq.s32.totalorder 0, 0
  // Predicated region
  $region26: #{gru_compressor_forward.2} parent=0 // pred_check
    %p62 = pneg %p61
  $region27: #{gru_compressor_forward.2} parent=0 // pred_check_branch
    %64 = sbr.rel (%p62) target = $region29
  $region28: #{gru_compressor_forward.2} parent=0 // pred_region
    %vm65 = vcmask 254976
    %66 = vst.msk [vmem:[#allocation2] sm:$0x3] %vm65, 0.0
    %67 = vst.msk [vmem:[#allocation3] sm:$0x3] %vm65, 0.0
  $region29: #{gru_compressor_forward.2} parent=0 // pred_fallthru
    _
  %v68 = vld [vmem:[%s2] sm:$0xff]
  %v69 = vld [vmem:[%s2 + $0x8] sm:$0xff]
  %v70 = vld [vmem:[%s2 + $0x10] sm:$0xff]
  %v71 = vld [vmem:[%s2 + $0x18] sm:$0xff]
  %v72 = vld [vmem:[%s3] sm:$0xff]
  %v73 = vld [vmem:[%s3 + $0x8] sm:$0xff]
  %v74 = vld [vmem:[%s3 + $0x10] sm:$0xff]
  %v75 = vld [vmem:[%s3 + $0x18] sm:$0xff]
  %v76 = vld [vmem:[%s4] sm:$0x1]
  %v78 = vlaneseq
  %v79 = vshrl.u32 %v78, 7
  %v80 = vsub.s32 0, %v79
  %v81 = vrot.slane %v76, %v80
  %v82 = vld [vmem:[%s5] sm:$0x1]
  %v84 = vlaneseq
  %v85 = vshrl.u32 %v84, 7
  %v86 = vsub.s32 0, %v85
  %v87 = vrot.slane %v82, %v86
  %v88 = vld [vmem:[#allocation2] sm:$0x3]
  %v89 = vld [vmem:[#allocation3] sm:$0x3]
  %v90 = vld [vmem:[%s0] sm:$0x3]
  %vm91 = vcmask 261120
  %v93 = vsel %vm91, %v88, 0
  %95 = vmatprep.subr.mxu0 0.0
  %96 = vmatpush1.msra.mxu0 %v68
  %97 = vmatprep.subr.mxu0 0.0
  %98 = vmatpush1.msra.mxu0 %v69
  %99 = vmatprep.subr.mxu0 0.0
  %100 = vmatpush1.msra.mxu0 %v70
  %101 = vmatprep.subr.mxu0 0.0
  %102 = vmatpush1.msra.mxu0 %v71
  %103 = vmatprep.subr.mxu0 0.0
  %104 = vmatpush1.msra.mxu0 0.0
  %105 = vmatprep.subr.mxu0 0.0
  %106 = vmatpush1.msra.mxu0 0.0
  %107 = vmatprep.subr.mxu0 0.0
  %108 = vmatpush1.msra.mxu0 0.0
  %109 = vmatprep.subr.mxu0 0.0
  %110 = vmatpush1.msra.mxu0 0.0
  %111 = vmatprep.subr.mxu0 0.0
  %112 = vmatpush1.msra.mxu0 0.0
  %113 = vmatprep.subr.mxu0 0.0
  %114 = vmatpush1.msra.mxu0 0.0
  %115 = vmatprep.subr.mxu0 0.0
  %116 = vmatpush1.msra.mxu0 0.0
  %117 = vmatprep.subr.mxu0 0.0
  %118 = vmatpush1.msra.mxu0 0.0
  %119 = vmatprep.subr.mxu0 0.0
  %120 = vmatpush1.msra.mxu0 0.0
  %121 = vmatprep.subr.mxu0 0.0
  %122 = vmatpush1.msra.mxu0 0.0
  %123 = vmatprep.subr.mxu0 0.0
  %124 = vmatpush1.msra.mxu0 0.0
  %125 = vmatprep.subr.mxu0 0.0
  %126 = vmatpush1.msra.mxu0 0.0
  %127 = vmatprep.subr.mxu0 0.0
  %128 = vmatpush1.msra.mxu0 0.0
  %129 = vmatprep.subr.mxu0 0.0
  %130 = vmatpush1.msra.mxu0 0.0
  %131 = vmatprep.subr.mxu0 0.0
  %132 = vmatpush1.msra.mxu0 0.0
  %133 = vmatprep.subr.mxu0 0.0
  %134 = vmatpush1.msra.mxu0 0.0
  %135 = vmatprep.subr.mxu0 0.0
  %136 = vmatpush1.msra.mxu0 0.0
  %137 = vmatprep.subr.mxu0 0.0
  %138 = vmatpush1.msra.mxu0 0.0
  %139 = vmatprep.subr.mxu0 0.0
  %140 = vmatpush1.msra.mxu0 0.0
  %141 = vmatprep.subr.mxu0 0.0
  %142 = vmatpush1.msra.mxu0 0.0
  %143 = vmatprep.subr.mxu0 0.0
  %144 = vmatpush1.msra.mxu0 0.0
  %145 = vmatprep.subr.mxu0 0.0
  %146 = vmatpush1.msra.mxu0 0.0
  %147 = vmatprep.subr.mxu0 0.0
  %148 = vmatpush1.msra.mxu0 0.0
  %149 = vmatprep.subr.mxu0 0.0
  %150 = vmatpush1.msra.mxu0 0.0
  %151 = vmatprep.subr.mxu0 0.0
  %152 = vmatpush1.msra.mxu0 0.0
  %153 = vmatprep.subr.mxu0 0.0
  %154 = vmatpush1.msra.mxu0 0.0
  %155 = vmatprep.subr.mxu0 0.0
  %156 = vmatpush1.msra.mxu0 0.0
  %157 = vmatprep.subr.mxu0 0.0
  %158 = vmatpush1.msra.mxu0 0.0
  %159 = vmatprep.mubr.f32.mxu0 0.0
  %160 = vmatmul.mubr.f32.gmra.mrb[0].mxu0 %v93
  %v161 = vpop.f32.mrb[0].mxu0
  %v162 = vadd.f32 0.0, %v161
  %v163 = vpop.f32.mrb[0].mxu0
  %164 = vdwg.mxu0
  %v165 = vadd.f32 %v90, %v162
  %v166 = vxor.u32 %v165, 2147483648
  %v167 = vmul.f32 %v166, 1.442695
  %v168 = vpow.pop %v167
  %v169 = vadd.f32 %v168, 1.0
  %v170 = vrcp.pop %v169
  %v171 = vmul.f32 1.0, %v170
  %172 = vrot.lane.b32.xlu0 %v81, 64
  %v173 = vpop.permute.xlu0 %172
  %v175 = vadd.f32 %v162, %v173
  %177 = vrot.lane.b32.xlu0 %v175, 64
  %v178 = vpop.permute.xlu0 %177
  %v180 = vmul.f32 %v171, %v178
  %182 = vrot.lane.b32.xlu0 %v180, 64
  %v183 = vpop.permute.xlu0 %182
  %v185 = vadd.f32 %v90, %v183
  %v186 = vtanh.pop %v185
  %v187 = vsub.f32 1.0, %v171
  %189 = vrot.lane.b32.xlu0 %v186, 96
  %v190 = vpop.permute.xlu0 %189
  %v192 = vmul.f32 %v187, %v190
  %193 = vrot.lane.b32.xlu0 %v88, 32
  %v194 = vpop.permute.xlu0 %193
  %v196 = vmul.f32 %v171, %v194
  %v197 = vadd.f32 %v192, %v196
  %199 = vrot.lane.b32.xlu0 %v197, 96
  %v200 = vpop.permute.xlu0 %199
  %vm202 = vcmask 254976
  %203 = vst.msk [vmem:[%s6] sm:$0x3] %vm202, %v200
  %s204 = scalar_lea.vmem %s50, 14
  %v205 = vld [vmem:[%s204] sm:$0x3]
  %v207 = vsel %vm91, %v89, 0
  %209 = vmatprep.subr.mxu0 0.0
  %210 = vmatpush1.msra.mxu0 %v72
  %211 = vmatprep.subr.mxu0 0.0
  %212 = vmatpush1.msra.mxu0 %v73
  %213 = vmatprep.subr.mxu0 0.0
  %214 = vmatpush1.msra.mxu0 %v74
  %215 = vmatprep.subr.mxu0 0.0
  %216 = vmatpush1.msra.mxu0 %v75
  %217 = vmatprep.subr.mxu0 0.0
  %218 = vmatpush1.msra.mxu0 0.0
  %219 = vmatprep.subr.mxu0 0.0
  %220 = vmatpush1.msra.mxu0 0.0
  %221 = vmatprep.subr.mxu0 0.0
  %222 = vmatpush1.msra.mxu0 0.0
  %223 = vmatprep.subr.mxu0 0.0
  %224 = vmatpush1.msra.mxu0 0.0
  %225 = vmatprep.subr.mxu0 0.0
  %226 = vmatpush1.msra.mxu0 0.0
  %227 = vmatprep.subr.mxu0 0.0
  %228 = vmatpush1.msra.mxu0 0.0
  %229 = vmatprep.subr.mxu0 0.0
  %230 = vmatpush1.msra.mxu0 0.0
  %231 = vmatprep.subr.mxu0 0.0
  %232 = vmatpush1.msra.mxu0 0.0
  %233 = vmatprep.subr.mxu0 0.0
  %234 = vmatpush1.msra.mxu0 0.0
  %235 = vmatprep.subr.mxu0 0.0
  %236 = vmatpush1.msra.mxu0 0.0
  %237 = vmatprep.subr.mxu0 0.0
  %238 = vmatpush1.msra.mxu0 0.0
  %239 = vmatprep.subr.mxu0 0.0
  %240 = vmatpush1.msra.mxu0 0.0
  %241 = vmatprep.subr.mxu0 0.0
  %242 = vmatpush1.msra.mxu0 0.0
  %243 = vmatprep.subr.mxu0 0.0
  %244 = vmatpush1.msra.mxu0 0.0
  %245 = vmatprep.subr.mxu0 0.0
  %246 = vmatpush1.msra.mxu0 0.0
  %247 = vmatprep.subr.mxu0 0.0
  %248 = vmatpush1.msra.mxu0 0.0
  %249 = vmatprep.subr.mxu0 0.0
  %250 = vmatpush1.msra.mxu0 0.0
  %251 = vmatprep.subr.mxu0 0.0
  %252 = vmatpush1.msra.mxu0 0.0
  %253 = vmatprep.subr.mxu0 0.0
  %254 = vmatpush1.msra.mxu0 0.0
  %255 = vmatprep.subr.mxu0 0.0
  %256 = vmatpush1.msra.mxu0 0.0
  %257 = vmatprep.subr.mxu0 0.0
  %258 = vmatpush1.msra.mxu0 0.0
  %259 = vmatprep.subr.mxu0 0.0
  %260 = vmatpush1.msra.mxu0 0.0
  %261 = vmatprep.subr.mxu0 0.0
  %262 = vmatpush1.msra.mxu0 0.0
  %263 = vmatprep.subr.mxu0 0.0
  %264 = vmatpush1.msra.mxu0 0.0
  %265 = vmatprep.subr.mxu0 0.0
  %266 = vmatpush1.msra.mxu0 0.0
  %267 = vmatprep.subr.mxu0 0.0
  %268 = vmatpush1.msra.mxu0 0.0
  %269 = vmatprep.subr.mxu0 0.0
  %270 = vmatpush1.msra.mxu0 0.0
  %271 = vmatprep.subr.mxu0 0.0
  %272 = vmatpush1.msra.mxu0 0.0
  %273 = vmatprep.mubr.f32.mxu0 0.0
  %274 = vmatmul.mubr.f32.gmra.mrb[0].mxu0 %v207
  %v275 = vpop.f32.mrb[0].mxu0
  %v276 = vadd.f32 0.0, %v275
  %v277 = vpop.f32.mrb[0].mxu0
  %278 = vdwg.mxu0
  %v279 = vadd.f32 %v205, %v276
  %v280 = vxor.u32 %v279, 2147483648
  %v281 = vmul.f32 %v280, 1.442695
  %v282 = vpow.pop %v281
  %v283 = vadd.f32 %v282, 1.0
  %v284 = vrcp.pop %v283
  %v285 = vmul.f32 1.0, %v284
  %286 = vrot.lane.b32.xlu0 %v87, 64
  %v287 = vpop.permute.xlu0 %286
  %v289 = vadd.f32 %v276, %v287
  %291 = vrot.lane.b32.xlu0 %v289, 64
  %v292 = vpop.permute.xlu0 %291
  %v294 = vmul.f32 %v285, %v292
  %296 = vrot.lane.b32.xlu0 %v294, 64
  %v297 = vpop.permute.xlu0 %296
  %v299 = vadd.f32 %v205, %v297
  %v300 = vtanh.pop %v299
  %v301 = vsub.f32 1.0, %v285
  %303 = vrot.lane.b32.xlu0 %v300, 96
  %v304 = vpop.permute.xlu0 %303
  %v306 = vmul.f32 %v301, %v304
  %307 = vrot.lane.b32.xlu0 %v89, 32
  %v308 = vpop.permute.xlu0 %307
  %v310 = vmul.f32 %v285, %v308
  %v311 = vadd.f32 %v306, %v310
  %313 = vrot.lane.b32.xlu0 %v311, 96
  %v314 = vpop.permute.xlu0 %313
  %s316 = scalar_lea.vmem %s58, 14
  %317 = vst.msk [vmem:[%s316] sm:$0x3] %vm202, %v314
  %s318 = scalar_lea.vmem %s0, 2
  %v319 = vld [vmem:[%s318] sm:$0x3]
  %v320 = vsel %vm91, %v200, 0
  %322 = vmatprep.subr.mxu0 0.0
  %323 = vmatpush1.msra.mxu0 %v68
  %324 = vmatprep.subr.mxu0 0.0
  %325 = vmatpush1.msra.mxu0 %v69
  %326 = vmatprep.subr.mxu0 0.0
  %327 = vmatpush1.msra.mxu0 %v70
  %328 = vmatprep.subr.mxu0 0.0
  %329 = vmatpush1.msra.mxu0 %v71
  %330 = vmatprep.subr.mxu0 0.0
  %331 = vmatpush1.msra.mxu0 0.0
  %332 = vmatprep.subr.mxu0 0.0
  %333 = vmatpush1.msra.mxu0 0.0
  %334 = vmatprep.subr.mxu0 0.0
  %335 = vmatpush1.msra.mxu0 0.0
  %336 = vmatprep.subr.mxu0 0.0
  %337 = vmatpush1.msra.mxu0 0.0
  %338 = vmatprep.subr.mxu0 0.0
  %339 = vmatpush1.msra.mxu0 0.0
  %340 = vmatprep.subr.mxu0 0.0
  %341 = vmatpush1.msra.mxu0 0.0
  %342 = vmatprep.subr.mxu0 0.0
  %343 = vmatpush1.msra.mxu0 0.0
  %344 = vmatprep.subr.mxu0 0.0
  %345 = vmatpush1.msra.mxu0 0.0
  %346 = vmatprep.subr.mxu0 0.0
  %347 = vmatpush1.msra.mxu0 0.0
  %348 = vmatprep.subr.mxu0 0.0
  %349 = vmatpush1.msra.mxu0 0.0
  %350 = vmatprep.subr.mxu0 0.0
  %351 = vmatpush1.msra.mxu0 0.0
  %352 = vmatprep.subr.mxu0 0.0
  %353 = vmatpush1.msra.mxu0 0.0
  %354 = vmatprep.subr.mxu0 0.0
  %355 = vmatpush1.msra.mxu0 0.0
  %356 = vmatprep.subr.mxu0 0.0
  %357 = vmatpush1.msra.mxu0 0.0
  %358 = vmatprep.subr.mxu0 0.0
  %359 = vmatpush1.msra.mxu0 0.0
  %360 = vmatprep.subr.mxu0 0.0
  %361 = vmatpush1.msra.mxu0 0.0
  %362 = vmatprep.subr.mxu0 0.0
  %363 = vmatpush1.msra.mxu0 0.0
  %364 = vmatprep.subr.mxu0 0.0
  %365 = vmatpush1.msra.mxu0 0.0
  %366 = vmatprep.subr.mxu0 0.0
  %367 = vmatpush1.msra.mxu0 0.0
  %368 = vmatprep.subr.mxu0 0.0
  %369 = vmatpush1.msra.mxu0 0.0
  %370 = vmatprep.subr.mxu0 0.0
  %371 = vmatpush1.msra.mxu0 0.0
  %372 = vmatprep.subr.mxu0 0.0
  %373 = vmatpush1.msra.mxu0 0.0
  %374 = vmatprep.subr.mxu0 0.0
  %375 = vmatpush1.msra.mxu0 0.0
  %376 = vmatprep.subr.mxu0 0.0
  %377 = vmatpush1.msra.mxu0 0.0
  %378 = vmatprep.subr.mxu0 0.0
  %379 = vmatpush1.msra.mxu0 0.0
  %380 = vmatprep.subr.mxu0 0.0
  %381 = vmatpush1.msra.mxu0 0.0
  %382 = vmatprep.subr.mxu0 0.0
  %383 = vmatpush1.msra.mxu0 0.0
  %384 = vmatprep.subr.mxu0 0.0
  %385 = vmatpush1.msra.mxu0 0.0
  %386 = vmatprep.mubr.f32.mxu0 0.0
  %387 = vmatmul.mubr.f32.gmra.mrb[0].mxu0 %v320
  %v388 = vpop.f32.mrb[0].mxu0
  %v389 = vadd.f32 0.0, %v388
  %v390 = vpop.f32.mrb[0].mxu0
  %391 = vdwg.mxu0
  %v392 = vadd.f32 %v319, %v389
  %v393 = vxor.u32 %v392, 2147483648
  %v394 = vmul.f32 %v393, 1.442695
  %v395 = vpow.pop %v394
  %v396 = vadd.f32 %v395, 1.0
  %v397 = vrcp.pop %v396
  %v398 = vmul.f32 1.0, %v397
  %v399 = vadd.f32 %v389, %v173
  %401 = vrot.lane.b32.xlu0 %v399, 64
  %v402 = vpop.permute.xlu0 %401
  %v404 = vmul.f32 %v398, %v402
  %406 = vrot.lane.b32.xlu0 %v404, 64
  %v407 = vpop.permute.xlu0 %406
  %v409 = vadd.f32 %v319, %v407
  %v410 = vtanh.pop %v409
  %v411 = vsub.f32 1.0, %v398
  %413 = vrot.lane.b32.xlu0 %v410, 96
  %v414 = vpop.permute.xlu0 %413
  %v416 = vmul.f32 %v411, %v414
  %v417 = vmul.f32 %v398, %v197
  %v418 = vadd.f32 %v416, %v417
  %420 = vrot.lane.b32.xlu0 %v418, 96
  %v421 = vpop.permute.xlu0 %420
  %s423 = scalar_lea.vmem %s6, 2
  %424 = vst.msk [vmem:[%s423] sm:$0x3] %vm202, %v421
  %s425 = scalar_lea.vmem %s50, 12
  %v426 = vld [vmem:[%s425] sm:$0x3]
  %v427 = vsel %vm91, %v314, 0
  %429 = vmatprep.subr.mxu0 0.0
  %430 = vmatpush1.msra.mxu0 %v72
  %431 = vmatprep.subr.mxu0 0.0
  %432 = vmatpush1.msra.mxu0 %v73
  %433 = vmatprep.subr.mxu0 0.0
  %434 = vmatpush1.msra.mxu0 %v74
  %435 = vmatprep.subr.mxu0 0.0
  %436 = vmatpush1.msra.mxu0 %v75
  %437 = vmatprep.subr.mxu0 0.0
  %438 = vmatpush1.msra.mxu0 0.0
  %439 = vmatprep.subr.mxu0 0.0
  %440 = vmatpush1.msra.mxu0 0.0
  %441 = vmatprep.subr.mxu0 0.0
  %442 = vmatpush1.msra.mxu0 0.0
  %443 = vmatprep.subr.mxu0 0.0
  %444 = vmatpush1.msra.mxu0 0.0
  %445 = vmatprep.subr.mxu0 0.0
  %446 = vmatpush1.msra.mxu0 0.0
  %447 = vmatprep.subr.mxu0 0.0
  %448 = vmatpush1.msra.mxu0 0.0
  %449 = vmatprep.subr.mxu0 0.0
  %450 = vmatpush1.msra.mxu0 0.0
  %451 = vmatprep.subr.mxu0 0.0
  %452 = vmatpush1.msra.mxu0 0.0
  %453 = vmatprep.subr.mxu0 0.0
  %454 = vmatpush1.msra.mxu0 0.0
  %455 = vmatprep.subr.mxu0 0.0
  %456 = vmatpush1.msra.mxu0 0.0
  %457 = vmatprep.subr.mxu0 0.0
  %458 = vmatpush1.msra.mxu0 0.0
  %459 = vmatprep.subr.mxu0 0.0
  %460 = vmatpush1.msra.mxu0 0.0
  %461 = vmatprep.subr.mxu0 0.0
  %462 = vmatpush1.msra.mxu0 0.0
  %463 = vmatprep.subr.mxu0 0.0
  %464 = vmatpush1.msra.mxu0 0.0
  %465 = vmatprep.subr.mxu0 0.0
  %466 = vmatpush1.msra.mxu0 0.0
  %467 = vmatprep.subr.mxu0 0.0
  %468 = vmatpush1.msra.mxu0 0.0
  %469 = vmatprep.subr.mxu0 0.0
  %470 = vmatpush1.msra.mxu0 0.0
  %471 = vmatprep.subr.mxu0 0.0
  %472 = vmatpush1.msra.mxu0 0.0
  %473 = vmatprep.subr.mxu0 0.0
  %474 = vmatpush1.msra.mxu0 0.0
  %475 = vmatprep.subr.mxu0 0.0
  %476 = vmatpush1.msra.mxu0 0.0
  %477 = vmatprep.subr.mxu0 0.0
  %478 = vmatpush1.msra.mxu0 0.0
  %479 = vmatprep.subr.mxu0 0.0
  %480 = vmatpush1.msra.mxu0 0.0
  %481 = vmatprep.subr.mxu0 0.0
  %482 = vmatpush1.msra.mxu0 0.0
  %483 = vmatprep.subr.mxu0 0.0
  %484 = vmatpush1.msra.mxu0 0.0
  %485 = vmatprep.subr.mxu0 0.0
  %486 = vmatpush1.msra.mxu0 0.0
  %487 = vmatprep.subr.mxu0 0.0
  %488 = vmatpush1.msra.mxu0 0.0
  %489 = vmatprep.subr.mxu0 0.0
  %490 = vmatpush1.msra.mxu0 0.0
  %491 = vmatprep.subr.mxu0 0.0
  %492 = vmatpush1.msra.mxu0 0.0
  %493 = vmatprep.mubr.f32.mxu0 0.0
  %494 = vmatmul.mubr.f32.gmra.mrb[0].mxu0 %v427
  %v495 = vpop.f32.mrb[0].mxu0
  %v496 = vadd.f32 0.0, %v495
  %v497 = vpop.f32.mrb[0].mxu0
  %498 = vdwg.mxu0
  %v499 = vadd.f32 %v426, %v496
  %v500 = vxor.u32 %v499, 2147483648
  %v501 = vmul.f32 %v500, 1.442695
  %v502 = vpow.pop %v501
  %v503 = vadd.f32 %v502, 1.0
  %v504 = vrcp.pop %v503
  %v505 = vmul.f32 1.0, %v504
  %v506 = vadd.f32 %v496, %v287
  %508 = vrot.lane.b32.xlu0 %v506, 64
  %v509 = vpop.permute.xlu0 %508
  %v511 = vmul.f32 %v505, %v509
  %513 = vrot.lane.b32.xlu0 %v511, 64
  %v514 = vpop.permute.xlu0 %513
  %v516 = vadd.f32 %v426, %v514
  %v517 = vtanh.pop %v516
  %v518 = vsub.f32 1.0, %v505
  %520 = vrot.lane.b32.xlu0 %v517, 96
  %v521 = vpop.permute.xlu0 %520
  %v523 = vmul.f32 %v518, %v521
  %v524 = vmul.f32 %v505, %v311
  %v525 = vadd.f32 %v523, %v524
  %527 = vrot.lane.b32.xlu0 %v525, 96
  %v528 = vpop.permute.xlu0 %527
  %s530 = scalar_lea.vmem %s58, 12
  %531 = vst.msk [vmem:[%s530] sm:$0x3] %vm202, %v528
  %s532 = scalar_lea.vmem %s0, 4
  %v533 = vld [vmem:[%s532] sm:$0x3]
  %v534 = vsel %vm91, %v421, 0
  %536 = vmatprep.subr.mxu0 0.0
  %537 = vmatpush1.msra.mxu0 %v68
  %538 = vmatprep.subr.mxu0 0.0
  %539 = vmatpush1.msra.mxu0 %v69
  %540 = vmatprep.subr.mxu0 0.0
  %541 = vmatpush1.msra.mxu0 %v70
  %542 = vmatprep.subr.mxu0 0.0
  %543 = vmatpush1.msra.mxu0 %v71
  %544 = vmatprep.subr.mxu0 0.0
  %545 = vmatpush1.msra.mxu0 0.0
  %546 = vmatprep.subr.mxu0 0.0
  %547 = vmatpush1.msra.mxu0 0.0
  %548 = vmatprep.subr.mxu0 0.0
  %549 = vmatpush1.msra.mxu0 0.0
  %550 = vmatprep.subr.mxu0 0.0
  %551 = vmatpush1.msra.mxu0 0.0
  %552 = vmatprep.subr.mxu0 0.0
  %553 = vmatpush1.msra.mxu0 0.0
  %554 = vmatprep.subr.mxu0 0.0
  %555 = vmatpush1.msra.mxu0 0.0
  %556 = vmatprep.subr.mxu0 0.0
  %557 = vmatpush1.msra.mxu0 0.0
  %558 = vmatprep.subr.mxu0 0.0
  %559 = vmatpush1.msra.mxu0 0.0
  %560 = vmatprep.subr.mxu0 0.0
  %561 = vmatpush1.msra.mxu0 0.0
  %562 = vmatprep.subr.mxu0 0.0
  %563 = vmatpush1.msra.mxu0 0.0
  %564 = vmatprep.subr.mxu0 0.0
  %565 = vmatpush1.msra.mxu0 0.0
  %566 = vmatprep.subr.mxu0 0.0
  %567 = vmatpush1.msra.mxu0 0.0
  %568 = vmatprep.subr.mxu0 0.0
  %569 = vmatpush1.msra.mxu0 0.0
  %570 = vmatprep.subr.mxu0 0.0
  %571 = vmatpush1.msra.mxu0 0.0
  %572 = vmatprep.subr.mxu0 0.0
  %573 = vmatpush1.msra.mxu0 0.0
  %574 = vmatprep.subr.mxu0 0.0
  %575 = vmatpush1.msra.mxu0 0.0
  %576 = vmatprep.subr.mxu0 0.0
  %577 = vmatpush1.msra.mxu0 0.0
  %578 = vmatprep.subr.mxu0 0.0
  %579 = vmatpush1.msra.mxu0 0.0
  %580 = vmatprep.subr.mxu0 0.0
  %581 = vmatpush1.msra.mxu0 0.0
  %582 = vmatprep.subr.mxu0 0.0
  %583 = vmatpush1.msra.mxu0 0.0
  %584 = vmatprep.subr.mxu0 0.0
  %585 = vmatpush1.msra.mxu0 0.0
  %586 = vmatprep.subr.mxu0 0.0
  %587 = vmatpush1.msra.mxu0 0.0
  %588 = vmatprep.subr.mxu0 0.0
  %589 = vmatpush1.msra.mxu0 0.0
  %590 = vmatprep.subr.mxu0 0.0
  %591 = vmatpush1.msra.mxu0 0.0
  %592 = vmatprep.subr.mxu0 0.0
  %593 = vmatpush1.msra.mxu0 0.0
  %594 = vmatprep.subr.mxu0 0.0
  %595 = vmatpush1.msra.mxu0 0.0
  %596 = vmatprep.subr.mxu0 0.0
  %597 = vmatpush1.msra.mxu0 0.0
  %598 = vmatprep.subr.mxu0 0.0
  %599 = vmatpush1.msra.mxu0 0.0
  %600 = vmatprep.mubr.f32.mxu0 0.0
  %601 = vmatmul.mubr.f32.gmra.mrb[0].mxu0 %v534
  %v602 = vpop.f32.mrb[0].mxu0
  %v603 = vadd.f32 0.0, %v602
  %v604 = vpop.f32.mrb[0].mxu0
  %605 = vdwg.mxu0
  %v606 = vadd.f32 %v533, %v603
  %v607 = vxor.u32 %v606, 2147483648
  %v608 = vmul.f32 %v607, 1.442695
  %v609 = vpow.pop %v608
  %v610 = vadd.f32 %v609, 1.0
  %v611 = vrcp.pop %v610
  %v612 = vmul.f32 1.0, %v611
  %v613 = vadd.f32 %v603, %v173
  %615 = vrot.lane.b32.xlu0 %v613, 64
  %v616 = vpop.permute.xlu0 %615
  %v618 = vmul.f32 %v612, %v616
  %620 = vrot.lane.b32.xlu0 %v618, 64
  %v621 = vpop.permute.xlu0 %620
  %v623 = vadd.f32 %v533, %v621
  %v624 = vtanh.pop %v623
  %v625 = vsub.f32 1.0, %v612
  %627 = vrot.lane.b32.xlu0 %v624, 96
  %v628 = vpop.permute.xlu0 %627
  %v630 = vmul.f32 %v625, %v628
  %v631 = vmul.f32 %v612, %v418
  %v632 = vadd.f32 %v630, %v631
  %634 = vrot.lane.b32.xlu0 %v632, 96
  %v635 = vpop.permute.xlu0 %634
  %s637 = scalar_lea.vmem %s6, 4
  %638 = vst.msk [vmem:[%s637] sm:$0x3] %vm202, %v635
  %s639 = scalar_lea.vmem %s50, 10
  %v640 = vld [vmem:[%s639] sm:$0x3]
  %v641 = vsel %vm91, %v528, 0
  %643 = vmatprep.subr.mxu0 0.0
  %644 = vmatpush1.msra.mxu0 %v72
  %645 = vmatprep.subr.mxu0 0.0
  %646 = vmatpush1.msra.mxu0 %v73
  %647 = vmatprep.subr.mxu0 0.0
  %648 = vmatpush1.msra.mxu0 %v74
  %649 = vmatprep.subr.mxu0 0.0
  %650 = vmatpush1.msra.mxu0 %v75
  %651 = vmatprep.subr.mxu0 0.0
  %652 = vmatpush1.msra.mxu0 0.0
  %653 = vmatprep.subr.mxu0 0.0
  %654 = vmatpush1.msra.mxu0 0.0
  %655 = vmatprep.subr.mxu0 0.0
  %656 = vmatpush1.msra.mxu0 0.0
  %657 = vmatprep.subr.mxu0 0.0
  %658 = vmatpush1.msra.mxu0 0.0
  %659 = vmatprep.subr.mxu0 0.0
  %660 = vmatpush1.msra.mxu0 0.0
  %661 = vmatprep.subr.mxu0 0.0
  %662 = vmatpush1.msra.mxu0 0.0
  %663 = vmatprep.subr.mxu0 0.0
  %664 = vmatpush1.msra.mxu0 0.0
  %665 = vmatprep.subr.mxu0 0.0
  %666 = vmatpush1.msra.mxu0 0.0
  %667 = vmatprep.subr.mxu0 0.0
  %668 = vmatpush1.msra.mxu0 0.0
  %669 = vmatprep.subr.mxu0 0.0
  %670 = vmatpush1.msra.mxu0 0.0
  %671 = vmatprep.subr.mxu0 0.0
  %672 = vmatpush1.msra.mxu0 0.0
  %673 = vmatprep.subr.mxu0 0.0
  %674 = vmatpush1.msra.mxu0 0.0
  %675 = vmatprep.subr.mxu0 0.0
  %676 = vmatpush1.msra.mxu0 0.0
  %677 = vmatprep.subr.mxu0 0.0
  %678 = vmatpush1.msra.mxu0 0.0
  %679 = vmatprep.subr.mxu0 0.0
  %680 = vmatpush1.msra.mxu0 0.0
  %681 = vmatprep.subr.mxu0 0.0
  %682 = vmatpush1.msra.mxu0 0.0
  %683 = vmatprep.subr.mxu0 0.0
  %684 = vmatpush1.msra.mxu0 0.0
  %685 = vmatprep.subr.mxu0 0.0
  %686 = vmatpush1.msra.mxu0 0.0
  %687 = vmatprep.subr.mxu0 0.0
  %688 = vmatpush1.msra.mxu0 0.0
  %689 = vmatprep.subr.mxu0 0.0
  %690 = vmatpush1.msra.mxu0 0.0
  %691 = vmatprep.subr.mxu0 0.0
  %692 = vmatpush1.msra.mxu0 0.0
  %693 = vmatprep.subr.mxu0 0.0
  %694 = vmatpush1.msra.mxu0 0.0
  %695 = vmatprep.subr.mxu0 0.0
  %696 = vmatpush1.msra.mxu0 0.0
  %697 = vmatprep.subr.mxu0 0.0
  %698 = vmatpush1.msra.mxu0 0.0
  %699 = vmatprep.subr.mxu0 0.0
  %700 = vmatpush1.msra.mxu0 0.0
  %701 = vmatprep.subr.mxu0 0.0
  %702 = vmatpush1.msra.mxu0 0.0
  %703 = vmatprep.subr.mxu0 0.0
  %704 = vmatpush1.msra.mxu0 0.0
  %705 = vmatprep.subr.mxu0 0.0
  %706 = vmatpush1.msra.mxu0 0.0
  %707 = vmatprep.mubr.f32.mxu0 0.0
  %708 = vmatmul.mubr.f32.gmra.mrb[0].mxu0 %v641
  %v709 = vpop.f32.mrb[0].mxu0
  %v710 = vadd.f32 0.0, %v709
  %v711 = vpop.f32.mrb[0].mxu0
  %712 = vdwg.mxu0
  %v713 = vadd.f32 %v640, %v710
  %v714 = vxor.u32 %v713, 2147483648
  %v715 = vmul.f32 %v714, 1.442695
  %v716 = vpow.pop %v715
  %v717 = vadd.f32 %v716, 1.0
  %v718 = vrcp.pop %v717
  %v719 = vmul.f32 1.0, %v718
  %v720 = vadd.f32 %v710, %v287
  %722 = vrot.lane.b32.xlu0 %v720, 64
  %v723 = vpop.permute.xlu0 %722
  %v725 = vmul.f32 %v719, %v723
  %727 = vrot.lane.b32.xlu0 %v725, 64
  %v728 = vpop.permute.xlu0 %727
  %v730 = vadd.f32 %v640, %v728
  %v731 = vtanh.pop %v730
  %v732 = vsub.f32 1.0, %v719
  %734 = vrot.lane.b32.xlu0 %v731, 96
  %v735 = vpop.permute.xlu0 %734
  %v737 = vmul.f32 %v732, %v735
  %v738 = vmul.f32 %v719, %v525
  %v739 = vadd.f32 %v737, %v738
  %741 = vrot.lane.b32.xlu0 %v739, 96
  %v742 = vpop.permute.xlu0 %741
  %s744 = scalar_lea.vmem %s58, 10
  %745 = vst.msk [vmem:[%s744] sm:$0x3] %vm202, %v742
  %s746 = scalar_lea.vmem %s0, 6
  %v747 = vld [vmem:[%s746] sm:$0x3]
  %v748 = vsel %vm91, %v635, 0
  %750 = vmatprep.subr.mxu0 0.0
  %751 = vmatpush1.msra.mxu0 %v68
  %752 = vmatprep.subr.mxu0 0.0
  %753 = vmatpush1.msra.mxu0 %v69
  %754 = vmatprep.subr.mxu0 0.0
  %755 = vmatpush1.msra.mxu0 %v70
  %756 = vmatprep.subr.mxu0 0.0
  %757 = vmatpush1.msra.mxu0 %v71
  %758 = vmatprep.subr.mxu0 0.0
  %759 = vmatpush1.msra.mxu0 0.0
  %760 = vmatprep.subr.mxu0 0.0
  %761 = vmatpush1.msra.mxu0 0.0
  %762 = vmatprep.subr.mxu0 0.0
  %763 = vmatpush1.msra.mxu0 0.0
  %764 = vmatprep.subr.mxu0 0.0
  %765 = vmatpush1.msra.mxu0 0.0
  %766 = vmatprep.subr.mxu0 0.0
  %767 = vmatpush1.msra.mxu0 0.0
  %768 = vmatprep.subr.mxu0 0.0
  %769 = vmatpush1.msra.mxu0 0.0
  %770 = vmatprep.subr.mxu0 0.0
  %771 = vmatpush1.msra.mxu0 0.0
  %772 = vmatprep.subr.mxu0 0.0
  %773 = vmatpush1.msra.mxu0 0.0
  %774 = vmatprep.subr.mxu0 0.0
  %775 = vmatpush1.msra.mxu0 0.0
  %776 = vmatprep.subr.mxu0 0.0
  %777 = vmatpush1.msra.mxu0 0.0
  %778 = vmatprep.subr.mxu0 0.0
  %779 = vmatpush1.msra.mxu0 0.0
  %780 = vmatprep.subr.mxu0 0.0
  %781 = vmatpush1.msra.mxu0 0.0
  %782 = vmatprep.subr.mxu0 0.0
  %783 = vmatpush1.msra.mxu0 0.0
  %784 = vmatprep.subr.mxu0 0.0
  %785 = vmatpush1.msra.mxu0 0.0
  %786 = vmatprep.subr.mxu0 0.0
  %787 = vmatpush1.msra.mxu0 0.0
  %788 = vmatprep.subr.mxu0 0.0
  %789 = vmatpush1.msra.mxu0 0.0
  %790 = vmatprep.subr.mxu0 0.0
  %791 = vmatpush1.msra.mxu0 0.0
  %792 = vmatprep.subr.mxu0 0.0
  %793 = vmatpush1.msra.mxu0 0.0
  %794 = vmatprep.subr.mxu0 0.0
  %795 = vmatpush1.msra.mxu0 0.0
  %796 = vmatprep.subr.mxu0 0.0
  %797 = vmatpush1.msra.mxu0 0.0
  %798 = vmatprep.subr.mxu0 0.0
  %799 = vmatpush1.msra.mxu0 0.0
  %800 = vmatprep.subr.mxu0 0.0
  %801 = vmatpush1.msra.mxu0 0.0
  %802 = vmatprep.subr.mxu0 0.0
  %803 = vmatpush1.msra.mxu0 0.0
  %804 = vmatprep.subr.mxu0 0.0
  %805 = vmatpush1.msra.mxu0 0.0
  %806 = vmatprep.subr.mxu0 0.0
  %807 = vmatpush1.msra.mxu0 0.0
  %808 = vmatprep.subr.mxu0 0.0
  %809 = vmatpush1.msra.mxu0 0.0
  %810 = vmatprep.subr.mxu0 0.0
  %811 = vmatpush1.msra.mxu0 0.0
  %812 = vmatprep.subr.mxu0 0.0
  %813 = vmatpush1.msra.mxu0 0.0
  %814 = vmatprep.mubr.f32.mxu0 0.0
  %815 = vmatmul.mubr.f32.gmra.mrb[0].mxu0 %v748
  %v816 = vpop.f32.mrb[0].mxu0
  %v817 = vadd.f32 0.0, %v816
  %v818 = vpop.f32.mrb[0].mxu0
  %819 = vdwg.mxu0
  %v820 = vadd.f32 %v747, %v817
  %v821 = vxor.u32 %v820, 2147483648
  %v822 = vmul.f32 %v821, 1.442695
  %v823 = vpow.pop %v822
  %v824 = vadd.f32 %v823, 1.0
  %v825 = vrcp.pop %v824
  %v826 = vmul.f32 1.0, %v825
  %v827 = vadd.f32 %v817, %v173
  %829 = vrot.lane.b32.xlu0 %v827, 64
  %v830 = vpop.permute.xlu0 %829
  %v832 = vmul.f32 %v826, %v830
  %834 = vrot.lane.b32.xlu0 %v832, 64
  %v835 = vpop.permute.xlu0 %834
  %v837 = vadd.f32 %v747, %v835
  %v838 = vtanh.pop %v837
  %v839 = vsub.f32 1.0, %v826
  %841 = vrot.lane.b32.xlu0 %v838, 96
  %v842 = vpop.permute.xlu0 %841
  %v844 = vmul.f32 %v839, %v842
  %v845 = vmul.f32 %v826, %v632
  %v846 = vadd.f32 %v844, %v845
  %848 = vrot.lane.b32.xlu0 %v846, 96
  %v849 = vpop.permute.xlu0 %848
  %s851 = scalar_lea.vmem %s6, 6
  %852 = vst.msk [vmem:[%s851] sm:$0x3] %vm202, %v849
  %s853 = scalar_lea.vmem %s50, 8
  %v854 = vld [vmem:[%s853] sm:$0x3]
  %v855 = vsel %vm91, %v742, 0
  %857 = vmatprep.subr.mxu0 0.0
  %858 = vmatpush1.msra.mxu0 %v72
  %859 = vmatprep.subr.mxu0 0.0
  %860 = vmatpush1.msra.mxu0 %v73
  %861 = vmatprep.subr.mxu0 0.0
  %862 = vmatpush1.msra.mxu0 %v74
  %863 = vmatprep.subr.mxu0 0.0
  %864 = vmatpush1.msra.mxu0 %v75
  %865 = vmatprep.subr.mxu0 0.0
  %866 = vmatpush1.msra.mxu0 0.0
  %867 = vmatprep.subr.mxu0 0.0
  %868 = vmatpush1.msra.mxu0 0.0
  %869 = vmatprep.subr.mxu0 0.0
  %870 = vmatpush1.msra.mxu0 0.0
  %871 = vmatprep.subr.mxu0 0.0
  %872 = vmatpush1.msra.mxu0 0.0
  %873 = vmatprep.subr.mxu0 0.0
  %874 = vmatpush1.msra.mxu0 0.0
  %875 = vmatprep.subr.mxu0 0.0
  %876 = vmatpush1.msra.mxu0 0.0
  %877 = vmatprep.subr.mxu0 0.0
  %878 = vmatpush1.msra.mxu0 0.0
  %879 = vmatprep.subr.mxu0 0.0
  %880 = vmatpush1.msra.mxu0 0.0
  %881 = vmatprep.subr.mxu0 0.0
  %882 = vmatpush1.msra.mxu0 0.0
  %883 = vmatprep.subr.mxu0 0.0
  %884 = vmatpush1.msra.mxu0 0.0
  %885 = vmatprep.subr.mxu0 0.0
  %886 = vmatpush1.msra.mxu0 0.0
  %887 = vmatprep.subr.mxu0 0.0
  %888 = vmatpush1.msra.mxu0 0.0
  %889 = vmatprep.subr.mxu0 0.0
  %890 = vmatpush1.msra.mxu0 0.0
  %891 = vmatprep.subr.mxu0 0.0
  %892 = vmatpush1.msra.mxu0 0.0
  %893 = vmatprep.subr.mxu0 0.0
  %894 = vmatpush1.msra.mxu0 0.0
  %895 = vmatprep.subr.mxu0 0.0
  %896 = vmatpush1.msra.mxu0 0.0
  %897 = vmatprep.subr.mxu0 0.0
  %898 = vmatpush1.msra.mxu0 0.0
  %899 = vmatprep.subr.mxu0 0.0
  %900 = vmatpush1.msra.mxu0 0.0
  %901 = vmatprep.subr.mxu0 0.0
  %902 = vmatpush1.msra.mxu0 0.0
  %903 = vmatprep.subr.mxu0 0.0
  %904 = vmatpush1.msra.mxu0 0.0
  %905 = vmatprep.subr.mxu0 0.0
  %906 = vmatpush1.msra.mxu0 0.0
  %907 = vmatprep.subr.mxu0 0.0
  %908 = vmatpush1.msra.mxu0 0.0
  %909 = vmatprep.subr.mxu0 0.0
  %910 = vmatpush1.msra.mxu0 0.0
  %911 = vmatprep.subr.mxu0 0.0
  %912 = vmatpush1.msra.mxu0 0.0
  %913 = vmatprep.subr.mxu0 0.0
  %914 = vmatpush1.msra.mxu0 0.0
  %915 = vmatprep.subr.mxu0 0.0
  %916 = vmatpush1.msra.mxu0 0.0
  %917 = vmatprep.subr.mxu0 0.0
  %918 = vmatpush1.msra.mxu0 0.0
  %919 = vmatprep.subr.mxu0 0.0
  %920 = vmatpush1.msra.mxu0 0.0
  %921 = vmatprep.mubr.f32.mxu0 0.0
  %922 = vmatmul.mubr.f32.gmra.mrb[0].mxu0 %v855
  %v923 = vpop.f32.mrb[0].mxu0
  %v924 = vadd.f32 0.0, %v923
  %v925 = vpop.f32.mrb[0].mxu0
  %926 = vdwg.mxu0
  %v927 = vadd.f32 %v854, %v924
  %v928 = vxor.u32 %v927, 2147483648
  %v929 = vmul.f32 %v928, 1.442695
  %v930 = vpow.pop %v929
  %v931 = vadd.f32 %v930, 1.0
  %v932 = vrcp.pop %v931
  %v933 = vmul.f32 1.0, %v932
  %v934 = vadd.f32 %v924, %v287
  %936 = vrot.lane.b32.xlu0 %v934, 64
  %v937 = vpop.permute.xlu0 %936
  %v939 = vmul.f32 %v933, %v937
  %941 = vrot.lane.b32.xlu0 %v939, 64
  %v942 = vpop.permute.xlu0 %941
  %v944 = vadd.f32 %v854, %v942
  %v945 = vtanh.pop %v944
  %v946 = vsub.f32 1.0, %v933
  %948 = vrot.lane.b32.xlu0 %v945, 96
  %v949 = vpop.permute.xlu0 %948
  %v951 = vmul.f32 %v946, %v949
  %v952 = vmul.f32 %v933, %v739
  %v953 = vadd.f32 %v951, %v952
  %955 = vrot.lane.b32.xlu0 %v953, 96
  %v956 = vpop.permute.xlu0 %955
  %s958 = scalar_lea.vmem %s58, 8
  %959 = vst.msk [vmem:[%s958] sm:$0x3] %vm202, %v956
  %s960 = scalar_lea.vmem %s0, 8
  %v961 = vld [vmem:[%s960] sm:$0x3]
  %v962 = vsel %vm91, %v849, 0
  %964 = vmatprep.subr.mxu0 0.0
  %965 = vmatpush1.msra.mxu0 %v68
  %966 = vmatprep.subr.mxu0 0.0
  %967 = vmatpush1.msra.mxu0 %v69
  %968 = vmatprep.subr.mxu0 0.0
  %969 = vmatpush1.msra.mxu0 %v70
  %970 = vmatprep.subr.mxu0 0.0
  %971 = vmatpush1.msra.mxu0 %v71
  %972 = vmatprep.subr.mxu0 0.0
  %973 = vmatpush1.msra.mxu0 0.0
  %974 = vmatprep.subr.mxu0 0.0
  %975 = vmatpush1.msra.mxu0 0.0
  %976 = vmatprep.subr.mxu0 0.0
  %977 = vmatpush1.msra.mxu0 0.0
  %978 = vmatprep.subr.mxu0 0.0
  %979 = vmatpush1.msra.mxu0 0.0
  %980 = vmatprep.subr.mxu0 0.0
  %981 = vmatpush1.msra.mxu0 0.0
  %982 = vmatprep.subr.mxu0 0.0
  %983 = vmatpush1.msra.mxu0 0.0
  %984 = vmatprep.subr.mxu0 0.0
  %985 = vmatpush1.msra.mxu0 0.0
  %986 = vmatprep.subr.mxu0 0.0
  %987 = vmatpush1.msra.mxu0 0.0
  %988 = vmatprep.subr.mxu0 0.0
  %989 = vmatpush1.msra.mxu0 0.0
  %990 = vmatprep.subr.mxu0 0.0
  %991 = vmatpush1.msra.mxu0 0.0
  %992 = vmatprep.subr.mxu0 0.0
  %993 = vmatpush1.msra.mxu0 0.0
  %994 = vmatprep.subr.mxu0 0.0
  %995 = vmatpush1.msra.mxu0 0.0
  %996 = vmatprep.subr.mxu0 0.0
  %997 = vmatpush1.msra.mxu0 0.0
  %998 = vmatprep.subr.mxu0 0.0
  %999 = vmatpush1.msra.mxu0 0.0
  %1000 = vmatprep.subr.mxu0 0.0
  %1001 = vmatpush1.msra.mxu0 0.0
  %1002 = vmatprep.subr.mxu0 0.0
  %1003 = vmatpush1.msra.mxu0 0.0
  %1004 = vmatprep.subr.mxu0 0.0
  %1005 = vmatpush1.msra.mxu0 0.0
  %1006 = vmatprep.subr.mxu0 0.0
  %1007 = vmatpush1.msra.mxu0 0.0
  %1008 = vmatprep.subr.mxu0 0.0
  %1009 = vmatpush1.msra.mxu0 0.0
  %1010 = vmatprep.subr.mxu0 0.0
  %1011 = vmatpush1.msra.mxu0 0.0
  %1012 = vmatprep.subr.mxu0 0.0
  %1013 = vmatpush1.msra.mxu0 0.0
  %1014 = vmatprep.subr.mxu0 0.0
  %1015 = vmatpush1.msra.mxu0 0.0
  %1016 = vmatprep.subr.mxu0 0.0
  %1017 = vmatpush1.msra.mxu0 0.0
  %1018 = vmatprep.subr.mxu0 0.0
  %1019 = vmatpush1.msra.mxu0 0.0
  %1020 = vmatprep.subr.mxu0 0.0
  %1021 = vmatpush1.msra.mxu0 0.0
  %1022 = vmatprep.subr.mxu0 0.0
  %1023 = vmatpush1.msra.mxu0 0.0
  %1024 = vmatprep.subr.mxu0 0.0
  %1025 = vmatpush1.msra.mxu0 0.0
  %1026 = vmatprep.subr.mxu0 0.0
  %1027 = vmatpush1.msra.mxu0 0.0
  %1028 = vmatprep.mubr.f32.mxu0 0.0
  %1029 = vmatmul.mubr.f32.gmra.mrb[0].mxu0 %v962
  %v1030 = vpop.f32.mrb[0].mxu0
  %v1031 = vadd.f32 0.0, %v1030
  %v1032 = vpop.f32.mrb[0].mxu0
  %1033 = vdwg.mxu0
  %v1034 = vadd.f32 %v961, %v1031
  %v1035 = vxor.u32 %v1034, 2147483648
  %v1036 = vmul.f32 %v1035, 1.442695
  %v1037 = vpow.pop %v1036
  %v1038 = vadd.f32 %v1037, 1.0
  %v1039 = vrcp.pop %v1038
  %v1040 = vmul.f32 1.0, %v1039
  %v1041 = vadd.f32 %v1031, %v173
  %1043 = vrot.lane.b32.xlu0 %v1041, 64
  %v1044 = vpop.permute.xlu0 %1043
  %v1046 = vmul.f32 %v1040, %v1044
  %1048 = vrot.lane.b32.xlu0 %v1046, 64
  %v1049 = vpop.permute.xlu0 %1048
  %v1051 = vadd.f32 %v961, %v1049
  %v1052 = vtanh.pop %v1051
  %v1053 = vsub.f32 1.0, %v1040
  %1055 = vrot.lane.b32.xlu0 %v1052, 96
  %v1056 = vpop.permute.xlu0 %1055
  %v1058 = vmul.f32 %v1053, %v1056
  %v1059 = vmul.f32 %v1040, %v846
  %v1060 = vadd.f32 %v1058, %v1059
  %1062 = vrot.lane.b32.xlu0 %v1060, 96
  %v1063 = vpop.permute.xlu0 %1062
  %s1065 = scalar_lea.vmem %s6, 8
  %1066 = vst.msk [vmem:[%s1065] sm:$0x3] %vm202, %v1063
  %s1067 = scalar_lea.vmem %s50, 6
  %v1068 = vld [vmem:[%s1067] sm:$0x3]
  %v1069 = vsel %vm91, %v956, 0
  %1071 = vmatprep.subr.mxu0 0.0
  %1072 = vmatpush1.msra.mxu0 %v72
  %1073 = vmatprep.subr.mxu0 0.0
  %1074 = vmatpush1.msra.mxu0 %v73
  %1075 = vmatprep.subr.mxu0 0.0
  %1076 = vmatpush1.msra.mxu0 %v74
  %1077 = vmatprep.subr.mxu0 0.0
  %1078 = vmatpush1.msra.mxu0 %v75
  %1079 = vmatprep.subr.mxu0 0.0
  %1080 = vmatpush1.msra.mxu0 0.0
  %1081 = vmatprep.subr.mxu0 0.0
  %1082 = vmatpush1.msra.mxu0 0.0
  %1083 = vmatprep.subr.mxu0 0.0
  %1084 = vmatpush1.msra.mxu0 0.0
  %1085 = vmatprep.subr.mxu0 0.0
  %1086 = vmatpush1.msra.mxu0 0.0
  %1087 = vmatprep.subr.mxu0 0.0
  %1088 = vmatpush1.msra.mxu0 0.0
  %1089 = vmatprep.subr.mxu0 0.0
  %1090 = vmatpush1.msra.mxu0 0.0
  %1091 = vmatprep.subr.mxu0 0.0
  %1092 = vmatpush1.msra.mxu0 0.0
  %1093 = vmatprep.subr.mxu0 0.0
  %1094 = vmatpush1.msra.mxu0 0.0
  %1095 = vmatprep.subr.mxu0 0.0
  %1096 = vmatpush1.msra.mxu0 0.0
  %1097 = vmatprep.subr.mxu0 0.0
  %1098 = vmatpush1.msra.mxu0 0.0
  %1099 = vmatprep.subr.mxu0 0.0
  %1100 = vmatpush1.msra.mxu0 0.0
  %1101 = vmatprep.subr.mxu0 0.0
  %1102 = vmatpush1.msra.mxu0 0.0
  %1103 = vmatprep.subr.mxu0 0.0
  %1104 = vmatpush1.msra.mxu0 0.0
  %1105 = vmatprep.subr.mxu0 0.0
  %1106 = vmatpush1.msra.mxu0 0.0
  %1107 = vmatprep.subr.mxu0 0.0
  %1108 = vmatpush1.msra.mxu0 0.0
  %1109 = vmatprep.subr.mxu0 0.0
  %1110 = vmatpush1.msra.mxu0 0.0
  %1111 = vmatprep.subr.mxu0 0.0
  %1112 = vmatpush1.msra.mxu0 0.0
  %1113 = vmatprep.subr.mxu0 0.0
  %1114 = vmatpush1.msra.mxu0 0.0
  %1115 = vmatprep.subr.mxu0 0.0
  %1116 = vmatpush1.msra.mxu0 0.0
  %1117 = vmatprep.subr.mxu0 0.0
  %1118 = vmatpush1.msra.mxu0 0.0
  %1119 = vmatprep.subr.mxu0 0.0
  %1120 = vmatpush1.msra.mxu0 0.0
  %1121 = vmatprep.subr.mxu0 0.0
  %1122 = vmatpush1.msra.mxu0 0.0
  %1123 = vmatprep.subr.mxu0 0.0
  %1124 = vmatpush1.msra.mxu0 0.0
  %1125 = vmatprep.subr.mxu0 0.0
  %1126 = vmatpush1.msra.mxu0 0.0
  %1127 = vmatprep.subr.mxu0 0.0
  %1128 = vmatpush1.msra.mxu0 0.0
  %1129 = vmatprep.subr.mxu0 0.0
  %1130 = vmatpush1.msra.mxu0 0.0
  %1131 = vmatprep.subr.mxu0 0.0
  %1132 = vmatpush1.msra.mxu0 0.0
  %1133 = vmatprep.subr.mxu0 0.0
  %1134 = vmatpush1.msra.mxu0 0.0
  %1135 = vmatprep.mubr.f32.mxu0 0.0
  %1136 = vmatmul.mubr.f32.gmra.mrb[0].mxu0 %v1069
  %v1137 = vpop.f32.mrb[0].mxu0
  %v1138 = vadd.f32 0.0, %v1137
  %v1139 = vpop.f32.mrb[0].mxu0
  %1140 = vdwg.mxu0
  %v1141 = vadd.f32 %v1068, %v1138
  %v1142 = vxor.u32 %v1141, 2147483648
  %v1143 = vmul.f32 %v1142, 1.442695
  %v1144 = vpow.pop %v1143
  %v1145 = vadd.f32 %v1144, 1.0
  %v1146 = vrcp.pop %v1145
  %v1147 = vmul.f32 1.0, %v1146
  %v1148 = vadd.f32 %v1138, %v287
  %1150 = vrot.lane.b32.xlu0 %v1148, 64
  %v1151 = vpop.permute.xlu0 %1150
  %v1153 = vmul.f32 %v1147, %v1151
  %1155 = vrot.lane.b32.xlu0 %v1153, 64
  %v1156 = vpop.permute.xlu0 %1155
  %v1158 = vadd.f32 %v1068, %v1156
  %v1159 = vtanh.pop %v1158
  %v1160 = vsub.f32 1.0, %v1147
  %1162 = vrot.lane.b32.xlu0 %v1159, 96
  %v1163 = vpop.permute.xlu0 %1162
  %v1165 = vmul.f32 %v1160, %v1163
  %v1166 = vmul.f32 %v1147, %v953
  %v1167 = vadd.f32 %v1165, %v1166
  %1169 = vrot.lane.b32.xlu0 %v1167, 96
  %v1170 = vpop.permute.xlu0 %1169
  %s1172 = scalar_lea.vmem %s58, 6
  %1173 = vst.msk [vmem:[%s1172] sm:$0x3] %vm202, %v1170
  %s1174 = scalar_lea.vmem %s0, 10
  %v1175 = vld [vmem:[%s1174] sm:$0x3]
  %v1176 = vsel %vm91, %v1063, 0
  %1178 = vmatprep.subr.mxu0 0.0
  %1179 = vmatpush1.msra.mxu0 %v68
  %1180 = vmatprep.subr.mxu0 0.0
  %1181 = vmatpush1.msra.mxu0 %v69
  %1182 = vmatprep.subr.mxu0 0.0
  %1183 = vmatpush1.msra.mxu0 %v70
  %1184 = vmatprep.subr.mxu0 0.0
  %1185 = vmatpush1.msra.mxu0 %v71
  %1186 = vmatprep.subr.mxu0 0.0
  %1187 = vmatpush1.msra.mxu0 0.0
  %1188 = vmatprep.subr.mxu0 0.0
  %1189 = vmatpush1.msra.mxu0 0.0
  %1190 = vmatprep.subr.mxu0 0.0
  %1191 = vmatpush1.msra.mxu0 0.0
  %1192 = vmatprep.subr.mxu0 0.0
  %1193 = vmatpush1.msra.mxu0 0.0
  %1194 = vmatprep.subr.mxu0 0.0
  %1195 = vmatpush1.msra.mxu0 0.0
  %1196 = vmatprep.subr.mxu0 0.0
  %1197 = vmatpush1.msra.mxu0 0.0
  %1198 = vmatprep.subr.mxu0 0.0
  %1199 = vmatpush1.msra.mxu0 0.0
  %1200 = vmatprep.subr.mxu0 0.0
  %1201 = vmatpush1.msra.mxu0 0.0
  %1202 = vmatprep.subr.mxu0 0.0
  %1203 = vmatpush1.msra.mxu0 0.0
  %1204 = vmatprep.subr.mxu0 0.0
  %1205 = vmatpush1.msra.mxu0 0.0
  %1206 = vmatprep.subr.mxu0 0.0
  %1207 = vmatpush1.msra.mxu0 0.0
  %1208 = vmatprep.subr.mxu0 0.0
  %1209 = vmatpush1.msra.mxu0 0.0
  %1210 = vmatprep.subr.mxu0 0.0
  %1211 = vmatpush1.msra.mxu0 0.0
  %1212 = vmatprep.subr.mxu0 0.0
  %1213 = vmatpush1.msra.mxu0 0.0
  %1214 = vmatprep.subr.mxu0 0.0
  %1215 = vmatpush1.msra.mxu0 0.0
  %1216 = vmatprep.subr.mxu0 0.0
  %1217 = vmatpush1.msra.mxu0 0.0
  %1218 = vmatprep.subr.mxu0 0.0
  %1219 = vmatpush1.msra.mxu0 0.0
  %1220 = vmatprep.subr.mxu0 0.0
  %1221 = vmatpush1.msra.mxu0 0.0
  %1222 = vmatprep.subr.mxu0 0.0
  %1223 = vmatpush1.msra.mxu0 0.0
  %1224 = vmatprep.subr.mxu0 0.0
  %1225 = vmatpush1.msra.mxu0 0.0
  %1226 = vmatprep.subr.mxu0 0.0
  %1227 = vmatpush1.msra.mxu0 0.0
  %1228 = vmatprep.subr.mxu0 0.0
  %1229 = vmatpush1.msra.mxu0 0.0
  %1230 = vmatprep.subr.mxu0 0.0
  %1231 = vmatpush1.msra.mxu0 0.0
  %1232 = vmatprep.subr.mxu0 0.0
  %1233 = vmatpush1.msra.mxu0 0.0
  %1234 = vmatprep.subr.mxu0 0.0
  %1235 = vmatpush1.msra.mxu0 0.0
  %1236 = vmatprep.subr.mxu0 0.0
  %1237 = vmatpush1.msra.mxu0 0.0
  %1238 = vmatprep.subr.mxu0 0.0
  %1239 = vmatpush1.msra.mxu0 0.0
  %1240 = vmatprep.subr.mxu0 0.0
  %1241 = vmatpush1.msra.mxu0 0.0
  %1242 = vmatprep.mubr.f32.mxu0 0.0
  %1243 = vmatmul.mubr.f32.gmra.mrb[0].mxu0 %v1176
  %v1244 = vpop.f32.mrb[0].mxu0
  %v1245 = vadd.f32 0.0, %v1244
  %v1246 = vpop.f32.mrb[0].mxu0
  %1247 = vdwg.mxu0
  %v1248 = vadd.f32 %v1175, %v1245
  %v1249 = vxor.u32 %v1248, 2147483648
  %v1250 = vmul.f32 %v1249, 1.442695
  %v1251 = vpow.pop %v1250
  %v1252 = vadd.f32 %v1251, 1.0
  %v1253 = vrcp.pop %v1252
  %v1254 = vmul.f32 1.0, %v1253
  %v1255 = vadd.f32 %v1245, %v173
  %1257 = vrot.lane.b32.xlu0 %v1255, 64
  %v1258 = vpop.permute.xlu0 %1257
  %v1260 = vmul.f32 %v1254, %v1258
  %1262 = vrot.lane.b32.xlu0 %v1260, 64
  %v1263 = vpop.permute.xlu0 %1262
  %v1265 = vadd.f32 %v1175, %v1263
  %v1266 = vtanh.pop %v1265
  %v1267 = vsub.f32 1.0, %v1254
  %1269 = vrot.lane.b32.xlu0 %v1266, 96
  %v1270 = vpop.permute.xlu0 %1269
  %v1272 = vmul.f32 %v1267, %v1270
  %v1273 = vmul.f32 %v1254, %v1060
  %v1274 = vadd.f32 %v1272, %v1273
  %1276 = vrot.lane.b32.xlu0 %v1274, 96
  %v1277 = vpop.permute.xlu0 %1276
  %s1279 = scalar_lea.vmem %s6, 10
  %1280 = vst.msk [vmem:[%s1279] sm:$0x3] %vm202, %v1277
  %s1281 = scalar_lea.vmem %s50, 4
  %v1282 = vld [vmem:[%s1281] sm:$0x3]
  %v1283 = vsel %vm91, %v1170, 0
  %1285 = vmatprep.subr.mxu0 0.0
  %1286 = vmatpush1.msra.mxu0 %v72
  %1287 = vmatprep.subr.mxu0 0.0
  %1288 = vmatpush1.msra.mxu0 %v73
  %1289 = vmatprep.subr.mxu0 0.0
  %1290 = vmatpush1.msra.mxu0 %v74
  %1291 = vmatprep.subr.mxu0 0.0
  %1292 = vmatpush1.msra.mxu0 %v75
  %1293 = vmatprep.subr.mxu0 0.0
  %1294 = vmatpush1.msra.mxu0 0.0
  %1295 = vmatprep.subr.mxu0 0.0
  %1296 = vmatpush1.msra.mxu0 0.0
  %1297 = vmatprep.subr.mxu0 0.0
  %1298 = vmatpush1.msra.mxu0 0.0
  %1299 = vmatprep.subr.mxu0 0.0
  %1300 = vmatpush1.msra.mxu0 0.0
  %1301 = vmatprep.subr.mxu0 0.0
  %1302 = vmatpush1.msra.mxu0 0.0
  %1303 = vmatprep.subr.mxu0 0.0
  %1304 = vmatpush1.msra.mxu0 0.0
  %1305 = vmatprep.subr.mxu0 0.0
  %1306 = vmatpush1.msra.mxu0 0.0
  %1307 = vmatprep.subr.mxu0 0.0
  %1308 = vmatpush1.msra.mxu0 0.0
  %1309 = vmatprep.subr.mxu0 0.0
  %1310 = vmatpush1.msra.mxu0 0.0
  %1311 = vmatprep.subr.mxu0 0.0
  %1312 = vmatpush1.msra.mxu0 0.0
  %1313 = vmatprep.subr.mxu0 0.0
  %1314 = vmatpush1.msra.mxu0 0.0
  %1315 = vmatprep.subr.mxu0 0.0
  %1316 = vmatpush1.msra.mxu0 0.0
  %1317 = vmatprep.subr.mxu0 0.0
  %1318 = vmatpush1.msra.mxu0 0.0
  %1319 = vmatprep.subr.mxu0 0.0
  %1320 = vmatpush1.msra.mxu0 0.0
  %1321 = vmatprep.subr.mxu0 0.0
  %1322 = vmatpush1.msra.mxu0 0.0
  %1323 = vmatprep.subr.mxu0 0.0
  %1324 = vmatpush1.msra.mxu0 0.0
  %1325 = vmatprep.subr.mxu0 0.0
  %1326 = vmatpush1.msra.mxu0 0.0
  %1327 = vmatprep.subr.mxu0 0.0
  %1328 = vmatpush1.msra.mxu0 0.0
  %1329 = vmatprep.subr.mxu0 0.0
  %1330 = vmatpush1.msra.mxu0 0.0
  %1331 = vmatprep.subr.mxu0 0.0
  %1332 = vmatpush1.msra.mxu0 0.0
  %1333 = vmatprep.subr.mxu0 0.0
  %1334 = vmatpush1.msra.mxu0 0.0
  %1335 = vmatprep.subr.mxu0 0.0
  %1336 = vmatpush1.msra.mxu0 0.0
  %1337 = vmatprep.subr.mxu0 0.0
  %1338 = vmatpush1.msra.mxu0 0.0
  %1339 = vmatprep.subr.mxu0 0.0
  %1340 = vmatpush1.msra.mxu0 0.0
  %1341 = vmatprep.subr.mxu0 0.0
  %1342 = vmatpush1.msra.mxu0 0.0
  %1343 = vmatprep.subr.mxu0 0.0
  %1344 = vmatpush1.msra.mxu0 0.0
  %1345 = vmatprep.subr.mxu0 0.0
  %1346 = vmatpush1.msra.mxu0 0.0
  %1347 = vmatprep.subr.mxu0 0.0
  %1348 = vmatpush1.msra.mxu0 0.0
  %1349 = vmatprep.mubr.f32.mxu0 0.0
  %1350 = vmatmul.mubr.f32.gmra.mrb[0].mxu0 %v1283
  %v1351 = vpop.f32.mrb[0].mxu0
  %v1352 = vadd.f32 0.0, %v1351
  %v1353 = vpop.f32.mrb[0].mxu0
  %1354 = vdwg.mxu0
  %v1355 = vadd.f32 %v1282, %v1352
  %v1356 = vxor.u32 %v1355, 2147483648
  %v1357 = vmul.f32 %v1356, 1.442695
  %v1358 = vpow.pop %v1357
  %v1359 = vadd.f32 %v1358, 1.0
  %v1360 = vrcp.pop %v1359
  %v1361 = vmul.f32 1.0, %v1360
  %v1362 = vadd.f32 %v1352, %v287
  %1364 = vrot.lane.b32.xlu0 %v1362, 64
  %v1365 = vpop.permute.xlu0 %1364
  %v1367 = vmul.f32 %v1361, %v1365
  %1369 = vrot.lane.b32.xlu0 %v1367, 64
  %v1370 = vpop.permute.xlu0 %1369
  %v1372 = vadd.f32 %v1282, %v1370
  %v1373 = vtanh.pop %v1372
  %v1374 = vsub.f32 1.0, %v1361
  %1376 = vrot.lane.b32.xlu0 %v1373, 96
  %v1377 = vpop.permute.xlu0 %1376
  %v1379 = vmul.f32 %v1374, %v1377
  %v1380 = vmul.f32 %v1361, %v1167
  %v1381 = vadd.f32 %v1379, %v1380
  %1383 = vrot.lane.b32.xlu0 %v1381, 96
  %v1384 = vpop.permute.xlu0 %1383
  %s1386 = scalar_lea.vmem %s58, 4
  %1387 = vst.msk [vmem:[%s1386] sm:$0x3] %vm202, %v1384
  %s1388 = scalar_lea.vmem %s0, 12
  %v1389 = vld [vmem:[%s1388] sm:$0x3]
  %v1390 = vsel %vm91, %v1277, 0
  %1392 = vmatprep.subr.mxu0 0.0
  %1393 = vmatpush1.msra.mxu0 %v68
  %1394 = vmatprep.subr.mxu0 0.0
  %1395 = vmatpush1.msra.mxu0 %v69
  %1396 = vmatprep.subr.mxu0 0.0
  %1397 = vmatpush1.msra.mxu0 %v70
  %1398 = vmatprep.subr.mxu0 0.0
  %1399 = vmatpush1.msra.mxu0 %v71
  %1400 = vmatprep.subr.mxu0 0.0
  %1401 = vmatpush1.msra.mxu0 0.0
  %1402 = vmatprep.subr.mxu0 0.0
  %1403 = vmatpush1.msra.mxu0 0.0
  %1404 = vmatprep.subr.mxu0 0.0
  %1405 = vmatpush1.msra.mxu0 0.0
  %1406 = vmatprep.subr.mxu0 0.0
  %1407 = vmatpush1.msra.mxu0 0.0
  %1408 = vmatprep.subr.mxu0 0.0
  %1409 = vmatpush1.msra.mxu0 0.0
  %1410 = vmatprep.subr.mxu0 0.0
  %1411 = vmatpush1.msra.mxu0 0.0
  %1412 = vmatprep.subr.mxu0 0.0
  %1413 = vmatpush1.msra.mxu0 0.0
  %1414 = vmatprep.subr.mxu0 0.0
  %1415 = vmatpush1.msra.mxu0 0.0
  %1416 = vmatprep.subr.mxu0 0.0
  %1417 = vmatpush1.msra.mxu0 0.0
  %1418 = vmatprep.subr.mxu0 0.0
  %1419 = vmatpush1.msra.mxu0 0.0
  %1420 = vmatprep.subr.mxu0 0.0
  %1421 = vmatpush1.msra.mxu0 0.0
  %1422 = vmatprep.subr.mxu0 0.0
  %1423 = vmatpush1.msra.mxu0 0.0
  %1424 = vmatprep.subr.mxu0 0.0
  %1425 = vmatpush1.msra.mxu0 0.0
  %1426 = vmatprep.subr.mxu0 0.0
  %1427 = vmatpush1.msra.mxu0 0.0
  %1428 = vmatprep.subr.mxu0 0.0
  %1429 = vmatpush1.msra.mxu0 0.0
  %1430 = vmatprep.subr.mxu0 0.0
  %1431 = vmatpush1.msra.mxu0 0.0
  %1432 = vmatprep.subr.mxu0 0.0
  %1433 = vmatpush1.msra.mxu0 0.0
  %1434 = vmatprep.subr.mxu0 0.0
  %1435 = vmatpush1.msra.mxu0 0.0
  %1436 = vmatprep.subr.mxu0 0.0
  %1437 = vmatpush1.msra.mxu0 0.0
  %1438 = vmatprep.subr.mxu0 0.0
  %1439 = vmatpush1.msra.mxu0 0.0
  %1440 = vmatprep.subr.mxu0 0.0
  %1441 = vmatpush1.msra.mxu0 0.0
  %1442 = vmatprep.subr.mxu0 0.0
  %1443 = vmatpush1.msra.mxu0 0.0
  %1444 = vmatprep.subr.mxu0 0.0
  %1445 = vmatpush1.msra.mxu0 0.0
  %1446 = vmatprep.subr.mxu0 0.0
  %1447 = vmatpush1.msra.mxu0 0.0
  %1448 = vmatprep.subr.mxu0 0.0
  %1449 = vmatpush1.msra.mxu0 0.0
  %1450 = vmatprep.subr.mxu0 0.0
  %1451 = vmatpush1.msra.mxu0 0.0
  %1452 = vmatprep.subr.mxu0 0.0
  %1453 = vmatpush1.msra.mxu0 0.0
  %1454 = vmatprep.subr.mxu0 0.0
  %1455 = vmatpush1.msra.mxu0 0.0
  %1456 = vmatprep.mubr.f32.mxu0 0.0
  %1457 = vmatmul.mubr.f32.gmra.mrb[0].mxu0 %v1390
  %v1458 = vpop.f32.mrb[0].mxu0
  %v1459 = vadd.f32 0.0, %v1458
  %v1460 = vpop.f32.mrb[0].mxu0
  %1461 = vdwg.mxu0
  %v1462 = vadd.f32 %v1389, %v1459
  %v1463 = vxor.u32 %v1462, 2147483648
  %v1464 = vmul.f32 %v1463, 1.442695
  %v1465 = vpow.pop %v1464
  %v1466 = vadd.f32 %v1465, 1.0
  %v1467 = vrcp.pop %v1466
  %v1468 = vmul.f32 1.0, %v1467
  %v1469 = vadd.f32 %v1459, %v173
  %1471 = vrot.lane.b32.xlu0 %v1469, 64
  %v1472 = vpop.permute.xlu0 %1471
  %v1474 = vmul.f32 %v1468, %v1472
  %1476 = vrot.lane.b32.xlu0 %v1474, 64
  %v1477 = vpop.permute.xlu0 %1476
  %v1479 = vadd.f32 %v1389, %v1477
  %v1480 = vtanh.pop %v1479
  %v1481 = vsub.f32 1.0, %v1468
  %1483 = vrot.lane.b32.xlu0 %v1480, 96
  %v1484 = vpop.permute.xlu0 %1483
  %v1486 = vmul.f32 %v1481, %v1484
  %v1487 = vmul.f32 %v1468, %v1274
  %v1488 = vadd.f32 %v1486, %v1487
  %1490 = vrot.lane.b32.xlu0 %v1488, 96
  %v1491 = vpop.permute.xlu0 %1490
  %s1493 = scalar_lea.vmem %s6, 12
  %1494 = vst.msk [vmem:[%s1493] sm:$0x3] %vm202, %v1491
  %s1495 = scalar_lea.vmem %s50, 2
  %v1496 = vld [vmem:[%s1495] sm:$0x3]
  %v1497 = vsel %vm91, %v1384, 0
  %1499 = vmatprep.subr.mxu0 0.0
  %1500 = vmatpush1.msra.mxu0 %v72
  %1501 = vmatprep.subr.mxu0 0.0
  %1502 = vmatpush1.msra.mxu0 %v73
  %1503 = vmatprep.subr.mxu0 0.0
  %1504 = vmatpush1.msra.mxu0 %v74
  %1505 = vmatprep.subr.mxu0 0.0
  %1506 = vmatpush1.msra.mxu0 %v75
  %1507 = vmatprep.subr.mxu0 0.0
  %1508 = vmatpush1.msra.mxu0 0.0
  %1509 = vmatprep.subr.mxu0 0.0
  %1510 = vmatpush1.msra.mxu0 0.0
  %1511 = vmatprep.subr.mxu0 0.0
  %1512 = vmatpush1.msra.mxu0 0.0
  %1513 = vmatprep.subr.mxu0 0.0
  %1514 = vmatpush1.msra.mxu0 0.0
  %1515 = vmatprep.subr.mxu0 0.0
  %1516 = vmatpush1.msra.mxu0 0.0
  %1517 = vmatprep.subr.mxu0 0.0
  %1518 = vmatpush1.msra.mxu0 0.0
  %1519 = vmatprep.subr.mxu0 0.0
  %1520 = vmatpush1.msra.mxu0 0.0
  %1521 = vmatprep.subr.mxu0 0.0
  %1522 = vmatpush1.msra.mxu0 0.0
  %1523 = vmatprep.subr.mxu0 0.0
  %1524 = vmatpush1.msra.mxu0 0.0
  %1525 = vmatprep.subr.mxu0 0.0
  %1526 = vmatpush1.msra.mxu0 0.0
  %1527 = vmatprep.subr.mxu0 0.0
  %1528 = vmatpush1.msra.mxu0 0.0
  %1529 = vmatprep.subr.mxu0 0.0
  %1530 = vmatpush1.msra.mxu0 0.0
  %1531 = vmatprep.subr.mxu0 0.0
  %1532 = vmatpush1.msra.mxu0 0.0
  %1533 = vmatprep.subr.mxu0 0.0
  %1534 = vmatpush1.msra.mxu0 0.0
  %1535 = vmatprep.subr.mxu0 0.0
  %1536 = vmatpush1.msra.mxu0 0.0
  %1537 = vmatprep.subr.mxu0 0.0
  %1538 = vmatpush1.msra.mxu0 0.0
  %1539 = vmatprep.subr.mxu0 0.0
  %1540 = vmatpush1.msra.mxu0 0.0
  %1541 = vmatprep.subr.mxu0 0.0
  %1542 = vmatpush1.msra.mxu0 0.0
  %1543 = vmatprep.subr.mxu0 0.0
  %1544 = vmatpush1.msra.mxu0 0.0
  %1545 = vmatprep.subr.mxu0 0.0
  %1546 = vmatpush1.msra.mxu0 0.0
  %1547 = vmatprep.subr.mxu0 0.0
  %1548 = vmatpush1.msra.mxu0 0.0
  %1549 = vmatprep.subr.mxu0 0.0
  %1550 = vmatpush1.msra.mxu0 0.0
  %1551 = vmatprep.subr.mxu0 0.0
  %1552 = vmatpush1.msra.mxu0 0.0
  %1553 = vmatprep.subr.mxu0 0.0
  %1554 = vmatpush1.msra.mxu0 0.0
  %1555 = vmatprep.subr.mxu0 0.0
  %1556 = vmatpush1.msra.mxu0 0.0
  %1557 = vmatprep.subr.mxu0 0.0
  %1558 = vmatpush1.msra.mxu0 0.0
  %1559 = vmatprep.subr.mxu0 0.0
  %1560 = vmatpush1.msra.mxu0 0.0
  %1561 = vmatprep.subr.mxu0 0.0
  %1562 = vmatpush1.msra.mxu0 0.0
  %1563 = vmatprep.mubr.f32.mxu0 0.0
  %1564 = vmatmul.mubr.f32.gmra.mrb[0].mxu0 %v1497
  %v1565 = vpop.f32.mrb[0].mxu0
  %v1566 = vadd.f32 0.0, %v1565
  %v1567 = vpop.f32.mrb[0].mxu0
  %1568 = vdwg.mxu0
  %v1569 = vadd.f32 %v1496, %v1566
  %v1570 = vxor.u32 %v1569, 2147483648
  %v1571 = vmul.f32 %v1570, 1.442695
  %v1572 = vpow.pop %v1571
  %v1573 = vadd.f32 %v1572, 1.0
  %v1574 = vrcp.pop %v1573
  %v1575 = vmul.f32 1.0, %v1574
  %v1576 = vadd.f32 %v1566, %v287
  %1578 = vrot.lane.b32.xlu0 %v1576, 64
  %v1579 = vpop.permute.xlu0 %1578
  %v1581 = vmul.f32 %v1575, %v1579
  %1583 = vrot.lane.b32.xlu0 %v1581, 64
  %v1584 = vpop.permute.xlu0 %1583
  %v1586 = vadd.f32 %v1496, %v1584
  %v1587 = vtanh.pop %v1586
  %v1588 = vsub.f32 1.0, %v1575
  %1590 = vrot.lane.b32.xlu0 %v1587, 96
  %v1591 = vpop.permute.xlu0 %1590
  %v1593 = vmul.f32 %v1588, %v1591
  %v1594 = vmul.f32 %v1575, %v1381
  %v1595 = vadd.f32 %v1593, %v1594
  %1597 = vrot.lane.b32.xlu0 %v1595, 96
  %v1598 = vpop.permute.xlu0 %1597
  %s1600 = scalar_lea.vmem %s58, 2
  %1601 = vst.msk [vmem:[%s1600] sm:$0x3] %vm202, %v1598
  %s1602 = scalar_lea.vmem %s0, 14
  %v1603 = vld [vmem:[%s1602] sm:$0x3]
  %v1604 = vsel %vm91, %v1491, 0
  %1606 = vmatprep.subr.mxu0 0.0
  %1607 = vmatpush1.msra.mxu0 %v68
  %1608 = vmatprep.subr.mxu0 0.0
  %1609 = vmatpush1.msra.mxu0 %v69
  %1610 = vmatprep.subr.mxu0 0.0
  %1611 = vmatpush1.msra.mxu0 %v70
  %1612 = vmatprep.subr.mxu0 0.0
  %1613 = vmatpush1.msra.mxu0 %v71
  %1614 = vmatprep.subr.mxu0 0.0
  %1615 = vmatpush1.msra.mxu0 0.0
  %1616 = vmatprep.subr.mxu0 0.0
  %1617 = vmatpush1.msra.mxu0 0.0
  %1618 = vmatprep.subr.mxu0 0.0
  %1619 = vmatpush1.msra.mxu0 0.0
  %1620 = vmatprep.subr.mxu0 0.0
  %1621 = vmatpush1.msra.mxu0 0.0
  %1622 = vmatprep.subr.mxu0 0.0
  %1623 = vmatpush1.msra.mxu0 0.0
  %1624 = vmatprep.subr.mxu0 0.0
  %1625 = vmatpush1.msra.mxu0 0.0
  %1626 = vmatprep.subr.mxu0 0.0
  %1627 = vmatpush1.msra.mxu0 0.0
  %1628 = vmatprep.subr.mxu0 0.0
  %1629 = vmatpush1.msra.mxu0 0.0
  %1630 = vmatprep.subr.mxu0 0.0
  %1631 = vmatpush1.msra.mxu0 0.0
  %1632 = vmatprep.subr.mxu0 0.0
  %1633 = vmatpush1.msra.mxu0 0.0
  %1634 = vmatprep.subr.mxu0 0.0
  %1635 = vmatpush1.msra.mxu0 0.0
  %1636 = vmatprep.subr.mxu0 0.0
  %1637 = vmatpush1.msra.mxu0 0.0
  %1638 = vmatprep.subr.mxu0 0.0
  %1639 = vmatpush1.msra.mxu0 0.0
  %1640 = vmatprep.subr.mxu0 0.0
  %1641 = vmatpush1.msra.mxu0 0.0
  %1642 = vmatprep.subr.mxu0 0.0
  %1643 = vmatpush1.msra.mxu0 0.0
  %1644 = vmatprep.subr.mxu0 0.0
  %1645 = vmatpush1.msra.mxu0 0.0
  %1646 = vmatprep.subr.mxu0 0.0
  %1647 = vmatpush1.msra.mxu0 0.0
  %1648 = vmatprep.subr.mxu0 0.0
  %1649 = vmatpush1.msra.mxu0 0.0
  %1650 = vmatprep.subr.mxu0 0.0
  %1651 = vmatpush1.msra.mxu0 0.0
  %1652 = vmatprep.subr.mxu0 0.0
  %1653 = vmatpush1.msra.mxu0 0.0
  %1654 = vmatprep.subr.mxu0 0.0
  %1655 = vmatpush1.msra.mxu0 0.0
  %1656 = vmatprep.subr.mxu0 0.0
  %1657 = vmatpush1.msra.mxu0 0.0
  %1658 = vmatprep.subr.mxu0 0.0
  %1659 = vmatpush1.msra.mxu0 0.0
  %1660 = vmatprep.subr.mxu0 0.0
  %1661 = vmatpush1.msra.mxu0 0.0
  %1662 = vmatprep.subr.mxu0 0.0
  %1663 = vmatpush1.msra.mxu0 0.0
  %1664 = vmatprep.subr.mxu0 0.0
  %1665 = vmatpush1.msra.mxu0 0.0
  %1666 = vmatprep.subr.mxu0 0.0
  %1667 = vmatpush1.msra.mxu0 0.0
  %1668 = vmatprep.subr.mxu0 0.0
  %1669 = vmatpush1.msra.mxu0 0.0
  %1670 = vmatprep.mubr.f32.mxu0 0.0
  %1671 = vmatmul.mubr.f32.gmra.mrb[0].mxu0 %v1604
  %v1672 = vpop.f32.mrb[0].mxu0
  %v1673 = vadd.f32 0.0, %v1672
  %v1674 = vpop.f32.mrb[0].mxu0
  %1675 = vdwg.mxu0
  %v1676 = vadd.f32 %v1603, %v1673
  %v1677 = vxor.u32 %v1676, 2147483648
  %v1678 = vmul.f32 %v1677, 1.442695
  %v1679 = vpow.pop %v1678
  %v1680 = vadd.f32 %v1679, 1.0
  %v1681 = vrcp.pop %v1680
  %v1682 = vmul.f32 1.0, %v1681
  %v1683 = vadd.f32 %v1673, %v173
  %1685 = vrot.lane.b32.xlu0 %v1683, 64
  %v1686 = vpop.permute.xlu0 %1685
  %v1688 = vmul.f32 %v1682, %v1686
  %1690 = vrot.lane.b32.xlu0 %v1688, 64
  %v1691 = vpop.permute.xlu0 %1690
  %v1693 = vadd.f32 %v1603, %v1691
  %v1694 = vtanh.pop %v1693
  %v1695 = vsub.f32 1.0, %v1682
  %1697 = vrot.lane.b32.xlu0 %v1694, 96
  %v1698 = vpop.permute.xlu0 %1697
  %v1700 = vmul.f32 %v1695, %v1698
  %v1701 = vmul.f32 %v1682, %v1488
  %v1702 = vadd.f32 %v1700, %v1701
  %1704 = vrot.lane.b32.xlu0 %v1702, 96
  %v1705 = vpop.permute.xlu0 %1704
  %s1707 = scalar_lea.vmem %s6, 14
  %1708 = vst.msk [vmem:[%s1707] sm:$0x3] %vm202, %v1705
  %v1709 = vld [vmem:[%s50] sm:$0x3]
  %v1710 = vsel %vm91, %v1598, 0
  %1712 = vmatprep.subr.mxu0 0.0
  %1713 = vmatpush1.msra.mxu0 %v72
  %1714 = vmatprep.subr.mxu0 0.0
  %1715 = vmatpush1.msra.mxu0 %v73
  %1716 = vmatprep.subr.mxu0 0.0
  %1717 = vmatpush1.msra.mxu0 %v74
  %1718 = vmatprep.subr.mxu0 0.0
  %1719 = vmatpush1.msra.mxu0 %v75
  %1720 = vmatprep.subr.mxu0 0.0
  %1721 = vmatpush1.msra.mxu0 0.0
  %1722 = vmatprep.subr.mxu0 0.0
  %1723 = vmatpush1.msra.mxu0 0.0
  %1724 = vmatprep.subr.mxu0 0.0
  %1725 = vmatpush1.msra.mxu0 0.0
  %1726 = vmatprep.subr.mxu0 0.0
  %1727 = vmatpush1.msra.mxu0 0.0
  %1728 = vmatprep.subr.mxu0 0.0
  %1729 = vmatpush1.msra.mxu0 0.0
  %1730 = vmatprep.subr.mxu0 0.0
  %1731 = vmatpush1.msra.mxu0 0.0
  %1732 = vmatprep.subr.mxu0 0.0
  %1733 = vmatpush1.msra.mxu0 0.0
  %1734 = vmatprep.subr.mxu0 0.0
  %1735 = vmatpush1.msra.mxu0 0.0
  %1736 = vmatprep.subr.mxu0 0.0
  %1737 = vmatpush1.msra.mxu0 0.0
  %1738 = vmatprep.subr.mxu0 0.0
  %1739 = vmatpush1.msra.mxu0 0.0
  %1740 = vmatprep.subr.mxu0 0.0
  %1741 = vmatpush1.msra.mxu0 0.0
  %1742 = vmatprep.subr.mxu0 0.0
  %1743 = vmatpush1.msra.mxu0 0.0
  %1744 = vmatprep.subr.mxu0 0.0
  %1745 = vmatpush1.msra.mxu0 0.0
  %1746 = vmatprep.subr.mxu0 0.0
  %1747 = vmatpush1.msra.mxu0 0.0
  %1748 = vmatprep.subr.mxu0 0.0
  %1749 = vmatpush1.msra.mxu0 0.0
  %1750 = vmatprep.subr.mxu0 0.0
  %1751 = vmatpush1.msra.mxu0 0.0
  %1752 = vmatprep.subr.mxu0 0.0
  %1753 = vmatpush1.msra.mxu0 0.0
  %1754 = vmatprep.subr.mxu0 0.0
  %1755 = vmatpush1.msra.mxu0 0.0
  %1756 = vmatprep.subr.mxu0 0.0
  %1757 = vmatpush1.msra.mxu0 0.0
  %1758 = vmatprep.subr.mxu0 0.0
  %1759 = vmatpush1.msra.mxu0 0.0
  %1760 = vmatprep.subr.mxu0 0.0
  %1761 = vmatpush1.msra.mxu0 0.0
  %1762 = vmatprep.subr.mxu0 0.0
  %1763 = vmatpush1.msra.mxu0 0.0
  %1764 = vmatprep.subr.mxu0 0.0
  %1765 = vmatpush1.msra.mxu0 0.0
  %1766 = vmatprep.subr.mxu0 0.0
  %1767 = vmatpush1.msra.mxu0 0.0
  %1768 = vmatprep.subr.mxu0 0.0
  %1769 = vmatpush1.msra.mxu0 0.0
  %1770 = vmatprep.subr.mxu0 0.0
  %1771 = vmatpush1.msra.mxu0 0.0
  %1772 = vmatprep.subr.mxu0 0.0
  %1773 = vmatpush1.msra.mxu0 0.0
  %1774 = vmatprep.subr.mxu0 0.0
  %1775 = vmatpush1.msra.mxu0 0.0
  %1776 = vmatprep.mubr.f32.mxu0 0.0
  %1777 = vmatmul.mubr.f32.gmra.mrb[0].mxu0 %v1710
  %v1778 = vpop.f32.mrb[0].mxu0
  %v1779 = vadd.f32 0.0, %v1778
  %v1780 = vpop.f32.mrb[0].mxu0
  %1781 = vdwg.mxu0
  %v1782 = vadd.f32 %v1709, %v1779
  %v1783 = vxor.u32 %v1782, 2147483648
  %v1784 = vmul.f32 %v1783, 1.442695
  %v1785 = vpow.pop %v1784
  %v1786 = vadd.f32 %v1785, 1.0
  %v1787 = vrcp.pop %v1786
  %v1788 = vmul.f32 1.0, %v1787
  %v1789 = vadd.f32 %v1779, %v287
  %1791 = vrot.lane.b32.xlu0 %v1789, 64
  %v1792 = vpop.permute.xlu0 %1791
  %v1794 = vmul.f32 %v1788, %v1792
  %1796 = vrot.lane.b32.xlu0 %v1794, 64
  %v1797 = vpop.permute.xlu0 %1796
  %v1799 = vadd.f32 %v1709, %v1797
  %v1800 = vtanh.pop %v1799
  %v1801 = vsub.f32 1.0, %v1788
  %1803 = vrot.lane.b32.xlu0 %v1800, 96
  %v1804 = vpop.permute.xlu0 %1803
  %v1806 = vmul.f32 %v1801, %v1804
  %v1807 = vmul.f32 %v1788, %v1595
  %v1808 = vadd.f32 %v1806, %v1807
  %1810 = vrot.lane.b32.xlu0 %v1808, 96
  %v1811 = vpop.permute.xlu0 %1810
  %1813 = vst.msk [vmem:[%s58] sm:$0x3] %vm202, %v1811
  %1814 = vst.msk [vmem:[#allocation2] sm:$0x3] %vm202, %v1705
  %1815 = vst.msk [vmem:[#allocation3] sm:$0x3] %vm202, %v1811
  %s1816 = ssub.s32 0, 0
  %s1817 = smul.u32 8, %s1816
  %p1818 = scmp.lt.s32.totalorder %s1817, 7
  %s1819 = scalar_select %p1818, %s1817, 7
  %s1820 = smul.addr %s1819, 2
  %s1821 = scalar_lea.vmem %s7, %s1820
  // Predicated region
  $region30: #{gru_compressor_forward.2} parent=0 // pred_check
    _
  $region31: #{gru_compressor_forward.2} parent=0 // pred_check_branch
    %1823 = sbr.rel (0) target = $region33
  $region32: #{gru_compressor_forward.2} parent=0 // pred_region
    _
  $region33: #{gru_compressor_forward.2} parent=0 // pred_fallthru
    _
  // Predicated region
  $region34: #{gru_compressor_forward.2} parent=0 // pred_check
    _
  $region35: #{gru_compressor_forward.2} parent=0 // pred_check_branch
    %1825 = sbr.rel (0) target = $region37
  $region36: #{gru_compressor_forward.2} parent=0 // pred_region
    %s1826 = ssub.s32 0, 0
    %s1827 = smul.u32 8, %s1826
  $region37: #{gru_compressor_forward.2} parent=0 // pred_fallthru
    _
  // Predicated region
  $region38: #{gru_compressor_forward.2} parent=0 // pred_check
    _
  $region39: #{gru_compressor_forward.2} parent=0 // pred_check_branch
    %1829 = sbr.rel (0) target = $region41
  $region40: #{gru_compressor_forward.2} parent=0 // pred_region
    _
  $region41: #{gru_compressor_forward.2} parent=0 // pred_fallthru
    _
  // Predicated region
  $region42: #{gru_compressor_forward.2} parent=0 // pred_check
    _
  $region43: #{gru_compressor_forward.2} parent=0 // pred_check_branch
    %1831 = sbr.rel (0) target = $region45
  $region44: #{gru_compressor_forward.2} parent=0 // pred_region
    %s1832 = ssub.s32 0, 0
    %s1833 = smul.u32 8, %s1832
    %p1834 = scmp.lt.s32.totalorder %s1833, 7
    %s1835 = scalar_select %p1834, %s1833, 7
    %s1836 = smul.addr %s1835, 2
    %s1837 = scalar_lea.vmem %s7, %s1836
  $region45: #{gru_compressor_forward.2} parent=0 // pred_fallthru
    _

</llo_original>
